<compile_context>
chip_gen: v5e
topology: v5e:2x2
jax: 0.10.0
libtpu: 0.0.40
codegen_flags: <defaults>
</compile_context>

<pallas_src>
import functools

import jax
import jax.numpy as jnp
from jax import lax
from jax.experimental import pallas as pl
from jax.experimental.pallas import tpu as pltpu

EPS = 1e-5


# --------------------------------------------------------------------------
# Generation-aware VMEM budgets.
# --------------------------------------------------------------------------
def _vmem_budgets():
    try:
        phys = int(pltpu.get_tpu_info().vmem_capacity_bytes)
    except Exception:
        phys = 64 * 1024 * 1024  # conservative (v7x-sized) fallback
    vmem_limit = (phys * 3) // 4                          # 48 MiB v7x, 96 MiB v5e/v6e
    tile_budget = min(vmem_limit - (20 << 20), 44 << 20)  # ~28 MiB v7x, ~44 MiB v5e/v6e
    tile_budget = max(tile_budget, 8 << 20)
    return tile_budget, vmem_limit


def _pick_tiles(N, S, cin, cout, tile_budget):
    """Pick (nb batch elements per block, TS spatial lanes per block).

    Biggest block that fits the (double-buffered, sublane-padded) budget wins:
    the grid is sequential, so larger blocks only amortize per-step overhead.
    """
    if S % 128 != 0:
        # TODO(synk): pad/mask tail spatial tiles for S not a multiple of 128.
        raise ValueError("D*H*W must be a multiple of 128")

    def pad8(c):
        return ((c + 7) // 8) * 8

    # x block + out block bytes per lane per batch element, using PADDED
    # sublane counts (a (1, Cin, TS) block with Cin<8 still occupies 8 sublanes).
    bytes_per_lane_per_batch = (pad8(cin) + pad8(cout)) * 4

    def fits(nb, ts):
        # factor 2: Pallas double-buffers the x and out blocks; weight /
        # gamma / beta / scalar scratch are negligible.
        return 2 * nb * bytes_per_lane_per_batch * ts <= tile_budget

    ts = 128
    for cand in range(S, 127, -128):          # largest multiple-of-128 divisor of S first
        if S % cand == 0 and fits(1, cand):
            ts = cand
            break

    nb = 1
    for d in range(1, min(N, 8) + 1):          # cap the static unroll at 8 batch elems
        if N % d == 0 and fits(d, ts):
            nb = d
    return nb, ts


# --------------------------------------------------------------------------
# Fused kernel: phase 0 = batch statistics, phase 1 = conv + folded BN + ReLU.
# --------------------------------------------------------------------------
def _fused_kernel(x_ref, w_ref, gamma_ref, beta_ref, o_ref,
                  ysum_ref, ysq_ref, w2_ref, shift_ref, *, nb, inv_m):
    phase = pl.program_id(0)
    n_i = pl.program_id(1)
    s_i = pl.program_id(2)
    last_n = pl.num_programs(1) - 1
    last_s = pl.num_programs(2) - 1
    is_p0 = phase == 0

    # ---- init accumulators at the very first grid step.
    @pl.when(is_p0 & (n_i == 0) & (s_i == 0))
    def _():
        ysum_ref[...] = jnp.zeros_like(ysum_ref)
        ysq_ref[...] = jnp.zeros_like(ysq_ref)

    # ---- phase 0: accumulate per-channel sum / sum-of-squares of conv(x).
    # Conv bias cancels exactly under batch-mean BN and is never applied.
    @pl.when(is_p0)
    def _():
        w = w_ref[...]                                            # (Cout, Cin)
        for b in range(nb):                                       # small static unroll
            y = jnp.dot(w, x_ref[b], preferred_element_type=jnp.float32)   # (Cout, TS)
            ysum_ref[...] += jnp.sum(y, axis=-1, keepdims=True)
            ysq_ref[...] += jnp.sum(y * y, axis=-1, keepdims=True)

    # ---- finalize BN on-chip at the last phase-0 step: fold scale into the
    # weight so phase 1 needs no per-element scale multiply.
    @pl.when(is_p0 & (n_i == last_n) & (s_i == last_s))
    def _():
        w = w_ref[...]
        mean = ysum_ref[...] * inv_m                              # (Cout, 1)
        # E[y^2]-E[y]^2 in f32; clamp fp cancellation.  (Centered two-pass
        # variance would need a third pass over x - not worth it here.)
        var = jnp.maximum(ysq_ref[...] * inv_m - mean * mean, 0.0)
        scale = gamma_ref[...] * lax.rsqrt(var + EPS)             # (Cout, 1)
        shift_ref[...] = beta_ref[...] - mean * scale
        w2_ref[...] = w * scale                                   # (Cout, Cin)

    # ---- phase 1: conv with pre-scaled weight, + shift, ReLU, lane-dense store.
    @pl.when(phase == 1)
    def _():
        w2 = w2_ref[...]
        shift = shift_ref[...]
        for b in range(nb):
            y = jnp.dot(w2, x_ref[b], preferred_element_type=jnp.float32)   # (Cout, TS)
            o_ref[b] = jnp.maximum(y + shift, jnp.float32(0.0))


def conv_1x1x1_forward(x, weight, bias, gamma, beta):
    """x: (N, Cin, D, H, W) f32.  weight: (Cout, Cin) (PyTorch Conv3d weight with the
    1x1x1 kernel dims squeezed).  Returns ReLU(BatchNorm3d(Conv3d(x))), shape
    (N, Cout, D, H, W), using training-mode batch statistics."""
    del bias  # cancels exactly under batch-mean BatchNorm
    N, Cin, D, H, W = x.shape
    Cout = weight.shape[0]
    S = D * H * W
    M = N * S

    # Free reshape: NCDHW is channel-major / spatial-minor -> spatial on lanes.
    x3 = x.reshape(N, Cin, S)

    tile_budget, vmem_limit = _vmem_budgets()
    nb, ts = _pick_tiles(N, S, Cin, Cout, tile_budget)
    grid = (2, N // nb, S // ts)   # (phase, batch blocks, spatial tiles)

    kernel = functools.partial(_fused_kernel, nb=nb, inv_m=1.0 / M)

    out3 = pl.pallas_call(
        kernel,
        out_shape=jax.ShapeDtypeStruct((N, Cout, S), jnp.float32),
        grid_spec=pltpu.PrefetchScalarGridSpec(
            num_scalar_prefetch=0,
            grid=grid,
            in_specs=[
                pl.BlockSpec((nb, Cin, ts), lambda p, n, s: (n, 0, s)),
                pl.BlockSpec((Cout, Cin), lambda p, n, s: (0, 0)),
                pl.BlockSpec((Cout, 1), lambda p, n, s: (0, 0)),
                pl.BlockSpec((Cout, 1), lambda p, n, s: (0, 0)),
            ],
            # Pin the output block to (0,0,0) during phase 0 (p=0) so the
            # untouched VMEM buffer is never written back; phase 1 (p=1)
            # visits and fully writes every real block exactly once.
            out_specs=pl.BlockSpec((nb, Cout, ts),
                                   lambda p, n, s: (n * p, 0, s * p)),
            scratch_shapes=[
                pltpu.VMEM((Cout, 1), jnp.float32),     # sum(y)
                pltpu.VMEM((Cout, 1), jnp.float32),     # sum(y^2)
                pltpu.VMEM((Cout, Cin), jnp.float32),   # scale-folded weight
                pltpu.VMEM((Cout, 1), jnp.float32),     # shift
            ],
        ),
        compiler_params=pltpu.CompilerParams(
            # Stats scratch is carried across batch & spatial -> all sequential.
            dimension_semantics=("arbitrary", "arbitrary", "arbitrary"),
            vmem_limit_bytes=vmem_limit,
        ),
    )(x3, weight, gamma.reshape(Cout, 1), beta.reshape(Cout, 1))

    return out3.reshape(N, Cout, D, H, W)


# --------------------------------------------------------------------------
# Pure-JAX reference (full PyTorch semantics, bias included).
# --------------------------------------------------------------------------
def _reference(x, weight, bias, gamma, beta):
    y = jnp.einsum("ncdhw,oc->nodhw", x, weight) + bias[None, :, None, None, None]
    mean = jnp.mean(y, axis=(0, 2, 3, 4), keepdims=True)
    var = jnp.mean((y - mean) ** 2, axis=(0, 2, 3, 4), keepdims=True)
    yn = (y - mean) / jnp.sqrt(var + EPS)
    yn = yn * gamma[None, :, None, None, None] + beta[None, :, None, None, None]
    return jnp.maximum(yn, 0.0)


if __name__ == "__main__":
    key = jax.random.PRNGKey(0)
    k_x, k_w, k_b = jax.random.split(key, 3)

    # S = D*H*W = 4096 -> one 4096-lane spatial tile; both batch elements
    # blocked per grid step (grid = (2, 1, 1)).
    N, Cin, Cout, D, H, W = 2, 4, 8, 4, 32, 32
    x = jax.random.normal(k_x, (N, Cin, D, H, W), dtype=jnp.float32)
    # PyTorch Conv3d weight is (Cout, Cin, 1, 1, 1); kept squeezed as (Cout, Cin).
    weight = jax.random.normal(k_w, (Cout, Cin), dtype=jnp.float32) * 0.1
    bias = jax.random.normal(k_b, (Cout,), dtype=jnp.float32) * 0.1
    gamma = jnp.ones((Cout,), dtype=jnp.float32)   # BatchNorm default affine init
    beta = jnp.zeros((Cout,), dtype=jnp.float32)

    out = conv_1x1x1_forward(x, weight, bias, gamma, beta)
    out = jax.block_until_ready(out)

    ref = _reference(x, weight, bias, gamma, beta)
    assert out.shape == (N, Cout, D, H, W)
    assert jnp.allclose(out, ref, atol=1e-4, rtol=1e-4), "mismatch vs JAX reference"

    print("KERNEL_OK")
</pallas_src>

<mosaic_0001>
module attributes {stable_mosaic.version = 11 : i64} {
  func.func @_fused_kernel(%arg0: i32, %arg1: i32, %arg2: i32, %arg3: memref<2x4x4096xf32, #tpu.memory_space<vmem>>, %arg4: memref<8x4xf32, #tpu.memory_space<vmem>>, %arg5: memref<8x1xf32, #tpu.memory_space<vmem>>, %arg6: memref<8x1xf32, #tpu.memory_space<vmem>>, %arg7: memref<2x8x4096xf32, #tpu.memory_space<vmem>>, %arg8: memref<8x1xf32, #tpu.memory_space<vmem>>, %arg9: memref<8x1xf32, #tpu.memory_space<vmem>>, %arg10: memref<8x4xf32, #tpu.memory_space<vmem>>, %arg11: memref<8x1xf32, #tpu.memory_space<vmem>>) attributes {dimension_semantics = [#tpu.dimension_semantics<arbitrary>, #tpu.dimension_semantics<arbitrary>, #tpu.dimension_semantics<arbitrary>], iteration_bounds = array<i64: 2, 1, 1>, scalar_prefetch = 0 : i64, scratch_operands = 4 : i64, tpu.core_type = #tpu.core_type<tc>, window_params = [{transform_indices = @transform_0, window_bounds = array<i64: 2, 4, 4096>}, {pipeline_mode = #tpu.pipeline_mode<synchronous>, transform_indices = @transform_1, window_bounds = array<i64: 8, 4>}, {pipeline_mode = #tpu.pipeline_mode<synchronous>, transform_indices = @transform_2, window_bounds = array<i64: 8, 1>}, {pipeline_mode = #tpu.pipeline_mode<synchronous>, transform_indices = @transform_3, window_bounds = array<i64: 8, 1>}, {transform_indices = @transform_4, window_bounds = array<i64: 2, 8, 4096>}]} {
    %c0_i32 = arith.constant 0 : i32
    %0 = arith.cmpi eq, %arg0, %c0_i32 : i32
    %c0_i32_0 = arith.constant 0 : i32
    %1 = arith.cmpi eq, %arg1, %c0_i32_0 : i32
    %2 = arith.andi %0, %1 : i1
    %c0_i32_1 = arith.constant 0 : i32
    %3 = arith.cmpi eq, %arg2, %c0_i32_1 : i32
    %4 = arith.andi %2, %3 : i1
    %5 = arith.extui %4 : i1 to i32
    %c0_i32_2 = arith.constant 0 : i32
    %6 = arith.cmpi ne, %5, %c0_i32_2 : i32
    scf.if %6 {
      %cst = arith.constant 0.000000e+00 : f32
      %18 = vector.broadcast %cst : f32 to vector<8x1xf32>
      %c0 = arith.constant 0 : index
      %c0_8 = arith.constant 0 : index
      %19 = vector.load %arg8[%c0, %c0_8] : memref<8x1xf32, #tpu.memory_space<vmem>>, vector<8x1xf32>
      tpu.vector_store %arg8[%c0, %c0_8], %18 {strides = array<i32>} : memref<8x1xf32, #tpu.memory_space<vmem>>, vector<8x1xf32>,
      %cst_9 = arith.constant 0.000000e+00 : f32
      %20 = vector.broadcast %cst_9 : f32 to vector<8x1xf32>
      %c0_10 = arith.constant 0 : index
      %c0_11 = arith.constant 0 : index
      %21 = vector.load %arg9[%c0_10, %c0_11] : memref<8x1xf32, #tpu.memory_space<vmem>>, vector<8x1xf32>
      tpu.vector_store %arg9[%c0_10, %c0_11], %20 {strides = array<i32>} : memref<8x1xf32, #tpu.memory_space<vmem>>, vector<8x1xf32>,
    } else {
    }
    %7 = arith.extui %0 : i1 to i32
    %c0_i32_3 = arith.constant 0 : i32
    %8 = arith.cmpi ne, %7, %c0_i32_3 : i32
    scf.if %8 {
      %c0 = arith.constant 0 : index
      %c0_8 = arith.constant 0 : index
      %18 = vector.load %arg4[%c0, %c0_8] : memref<8x4xf32, #tpu.memory_space<vmem>>, vector<8x4xf32>
      %c0_9 = arith.constant 0 : index
      %c0_10 = arith.constant 0 : index
      %c0_11 = arith.constant 0 : index
      %19 = vector.load %arg3[%c0_9, %c0_10, %c0_11] : memref<2x4x4096xf32, #tpu.memory_space<vmem>>, vector<1x4x4096xf32>
      %20 = vector.shape_cast %19 : vector<1x4x4096xf32> to vector<4x4096xf32>
      %cst = arith.constant dense<0.000000e+00> : vector<8x4096xf32>
      %21 = tpu.matmul %18, %20, %cst {dimension_numbers = #tpu.dot_dimension_numbers<[1], [0], [0], [1], [0, 0, 1, 1], [], []>} : vector<8x4xf32>, vector<4x4096xf32>, vector<8x4096xf32> -> vector<8x4096xf32>
      %c0_12 = arith.constant 0 : index
      %c0_13 = arith.constant 0 : index
      %22 = vector.load %arg8[%c0_12, %c0_13] : memref<8x1xf32, #tpu.memory_space<vmem>>, vector<8x1xf32>
      %cst_14 = arith.constant dense<0.000000e+00> : vector<8xf32>
      %23 = vector.multi_reduction <add>, %21, %cst_14 [1] : vector<8x4096xf32> to vector<8xf32>
      %24 = vector.shape_cast %23 : vector<8xf32> to vector<8x1xf32>
      %25 = arith.addf %22, %24 : vector<8x1xf32>
      %c0_15 = arith.constant 0 : index
      %c0_16 = arith.constant 0 : index
      %26 = vector.load %arg8[%c0_15, %c0_16] : memref<8x1xf32, #tpu.memory_space<vmem>>, vector<8x1xf32>
      tpu.vector_store %arg8[%c0_15, %c0_16], %25 {strides = array<i32>} : memref<8x1xf32, #tpu.memory_space<vmem>>, vector<8x1xf32>,
      %c0_17 = arith.constant 0 : index
      %c0_18 = arith.constant 0 : index
      %27 = vector.load %arg9[%c0_17, %c0_18] : memref<8x1xf32, #tpu.memory_space<vmem>>, vector<8x1xf32>
      %28 = arith.mulf %21, %21 : vector<8x4096xf32>
      %cst_19 = arith.constant dense<0.000000e+00> : vector<8xf32>
      %29 = vector.multi_reduction <add>, %28, %cst_19 [1] : vector<8x4096xf32> to vector<8xf32>
      %30 = vector.shape_cast %29 : vector<8xf32> to vector<8x1xf32>
      %31 = arith.addf %27, %30 : vector<8x1xf32>
      %c0_20 = arith.constant 0 : index
      %c0_21 = arith.constant 0 : index
      %32 = vector.load %arg9[%c0_20, %c0_21] : memref<8x1xf32, #tpu.memory_space<vmem>>, vector<8x1xf32>
      tpu.vector_store %arg9[%c0_20, %c0_21], %31 {strides = array<i32>} : memref<8x1xf32, #tpu.memory_space<vmem>>, vector<8x1xf32>,
      %c1 = arith.constant 1 : index
      %c0_22 = arith.constant 0 : index
      %c0_23 = arith.constant 0 : index
      %33 = vector.load %arg3[%c1, %c0_22, %c0_23] : memref<2x4x4096xf32, #tpu.memory_space<vmem>>, vector<1x4x4096xf32>
      %34 = vector.shape_cast %33 : vector<1x4x4096xf32> to vector<4x4096xf32>
      %cst_24 = arith.constant dense<0.000000e+00> : vector<8x4096xf32>
      %35 = tpu.matmul %18, %34, %cst_24 {dimension_numbers = #tpu.dot_dimension_numbers<[1], [0], [0], [1], [0, 0, 1, 1], [], []>} : vector<8x4xf32>, vector<4x4096xf32>, vector<8x4096xf32> -> vector<8x4096xf32>
      %c0_25 = arith.constant 0 : index
      %c0_26 = arith.constant 0 : index
      %36 = vector.load %arg8[%c0_25, %c0_26] : memref<8x1xf32, #tpu.memory_space<vmem>>, vector<8x1xf32>
      %cst_27 = arith.constant dense<0.000000e+00> : vector<8xf32>
      %37 = vector.multi_reduction <add>, %35, %cst_27 [1] : vector<8x4096xf32> to vector<8xf32>
      %38 = vector.shape_cast %37 : vector<8xf32> to vector<8x1xf32>
      %39 = arith.addf %36, %38 : vector<8x1xf32>
      %c0_28 = arith.constant 0 : index
      %c0_29 = arith.constant 0 : index
      %40 = vector.load %arg8[%c0_28, %c0_29] : memref<8x1xf32, #tpu.memory_space<vmem>>, vector<8x1xf32>
      tpu.vector_store %arg8[%c0_28, %c0_29], %39 {strides = array<i32>} : memref<8x1xf32, #tpu.memory_space<vmem>>, vector<8x1xf32>,
      %c0_30 = arith.constant 0 : index
      %c0_31 = arith.constant 0 : index
      %41 = vector.load %arg9[%c0_30, %c0_31] : memref<8x1xf32, #tpu.memory_space<vmem>>, vector<8x1xf32>
      %42 = arith.mulf %35, %35 : vector<8x4096xf32>
      %cst_32 = arith.constant dense<0.000000e+00> : vector<8xf32>
      %43 = vector.multi_reduction <add>, %42, %cst_32 [1] : vector<8x4096xf32> to vector<8xf32>
      %44 = vector.shape_cast %43 : vector<8xf32> to vector<8x1xf32>
      %45 = arith.addf %41, %44 : vector<8x1xf32>
      %c0_33 = arith.constant 0 : index
      %c0_34 = arith.constant 0 : index
      %46 = vector.load %arg9[%c0_33, %c0_34] : memref<8x1xf32, #tpu.memory_space<vmem>>, vector<8x1xf32>
      tpu.vector_store %arg9[%c0_33, %c0_34], %45 {strides = array<i32>} : memref<8x1xf32, #tpu.memory_space<vmem>>, vector<8x1xf32>,
    } else {
    }
    %c0_i32_4 = arith.constant 0 : i32
    %9 = arith.cmpi eq, %arg1, %c0_i32_4 : i32
    %10 = arith.andi %0, %9 : i1
    %c0_i32_5 = arith.constant 0 : i32
    %11 = arith.cmpi eq, %arg2, %c0_i32_5 : i32
    %12 = arith.andi %10, %11 : i1
    %13 = arith.extui %12 : i1 to i32
    %c0_i32_6 = arith.constant 0 : i32
    %14 = arith.cmpi ne, %13, %c0_i32_6 : i32
    scf.if %14 {
      %c0 = arith.constant 0 : index
      %c0_8 = arith.constant 0 : index
      %18 = vector.load %arg4[%c0, %c0_8] : memref<8x4xf32, #tpu.memory_space<vmem>>, vector<8x4xf32>
      %c0_9 = arith.constant 0 : index
      %c0_10 = arith.constant 0 : index
      %19 = vector.load %arg8[%c0_9, %c0_10] : memref<8x1xf32, #tpu.memory_space<vmem>>, vector<8x1xf32>
      %cst = arith.constant 1.22070313E-4 : f32
      %20 = vector.broadcast %cst : f32 to vector<8x1xf32>
      %21 = arith.mulf %19, %20 : vector<8x1xf32>
      %c0_11 = arith.constant 0 : index
      %c0_12 = arith.constant 0 : index
      %22 = vector.load %arg9[%c0_11, %c0_12] : memref<8x1xf32, #tpu.memory_space<vmem>>, vector<8x1xf32>
      %cst_13 = arith.constant 1.22070313E-4 : f32
      %23 = vector.broadcast %cst_13 : f32 to vector<8x1xf32>
      %24 = arith.mulf %22, %23 : vector<8x1xf32>
      %25 = arith.mulf %21, %21 : vector<8x1xf32>
      %26 = arith.subf %24, %25 : vector<8x1xf32>
      %cst_14 = arith.constant 0.000000e+00 : f32
      %27 = vector.broadcast %cst_14 : f32 to vector<8x1xf32>
      %28 = arith.maximumf %26, %27 : vector<8x1xf32>
      %c0_15 = arith.constant 0 : index
      %c0_16 = arith.constant 0 : index
      %29 = vector.load %arg5[%c0_15, %c0_16] : memref<8x1xf32, #tpu.memory_space<vmem>>, vector<8x1xf32>
      %cst_17 = arith.constant 9.99999974E-6 : f32
      %30 = vector.broadcast %cst_17 : f32 to vector<8x1xf32>
      %31 = arith.addf %28, %30 : vector<8x1xf32>
      %32 = math.rsqrt %31 : vector<8x1xf32>
      %33 = arith.mulf %29, %32 : vector<8x1xf32>
      %c0_18 = arith.constant 0 : index
      %c0_19 = arith.constant 0 : index
      %34 = vector.load %arg6[%c0_18, %c0_19] : memref<8x1xf32, #tpu.memory_space<vmem>>, vector<8x1xf32>
      %35 = arith.mulf %21, %33 : vector<8x1xf32>
      %36 = arith.subf %34, %35 : vector<8x1xf32>
      %c0_20 = arith.constant 0 : index
      %c0_21 = arith.constant 0 : index
      %37 = vector.load %arg11[%c0_20, %c0_21] : memref<8x1xf32, #tpu.memory_space<vmem>>, vector<8x1xf32>
      tpu.vector_store %arg11[%c0_20, %c0_21], %36 {strides = array<i32>} : memref<8x1xf32, #tpu.memory_space<vmem>>, vector<8x1xf32>,
      %38 = vector.broadcast %33 : vector<8x1xf32> to vector<8x4xf32>
      %39 = arith.mulf %18, %38 : vector<8x4xf32>
      %c0_22 = arith.constant 0 : index
      %c0_23 = arith.constant 0 : index
      %40 = vector.load %arg10[%c0_22, %c0_23] : memref<8x4xf32, #tpu.memory_space<vmem>>, vector<8x4xf32>
      tpu.vector_store %arg10[%c0_22, %c0_23], %39 {strides = array<i32>} : memref<8x4xf32, #tpu.memory_space<vmem>>, vector<8x4xf32>,
    } else {
    }
    %c1_i32 = arith.constant 1 : i32
    %15 = arith.cmpi eq, %arg0, %c1_i32 : i32
    %16 = arith.extui %15 : i1 to i32
    %c0_i32_7 = arith.constant 0 : i32
    %17 = arith.cmpi ne, %16, %c0_i32_7 : i32
    scf.if %17 {
      %c0 = arith.constant 0 : index
      %c0_8 = arith.constant 0 : index
      %18 = vector.load %arg10[%c0, %c0_8] : memref<8x4xf32, #tpu.memory_space<vmem>>, vector<8x4xf32>
      %c0_9 = arith.constant 0 : index
      %c0_10 = arith.constant 0 : index
      %19 = vector.load %arg11[%c0_9, %c0_10] : memref<8x1xf32, #tpu.memory_space<vmem>>, vector<8x1xf32>
      %c0_11 = arith.constant 0 : index
      %c0_12 = arith.constant 0 : index
      %c0_13 = arith.constant 0 : index
      %20 = vector.load %arg3[%c0_11, %c0_12, %c0_13] : memref<2x4x4096xf32, #tpu.memory_space<vmem>>, vector<1x4x4096xf32>
      %21 = vector.shape_cast %20 : vector<1x4x4096xf32> to vector<4x4096xf32>
      %cst = arith.constant dense<0.000000e+00> : vector<8x4096xf32>
      %22 = tpu.matmul %18, %21, %cst {dimension_numbers = #tpu.dot_dimension_numbers<[1], [0], [0], [1], [0, 0, 1, 1], [], []>} : vector<8x4xf32>, vector<4x4096xf32>, vector<8x4096xf32> -> vector<8x4096xf32>
      %23 = vector.broadcast %19 : vector<8x1xf32> to vector<8x4096xf32>
      %24 = arith.addf %22, %23 : vector<8x4096xf32>
      %cst_14 = arith.constant 0.000000e+00 : f32
      %25 = vector.broadcast %cst_14 : f32 to vector<8x4096xf32>
      %26 = arith.maximumf %24, %25 : vector<8x4096xf32>
      %c0_15 = arith.constant 0 : index
      %c0_16 = arith.constant 0 : index
      %c0_17 = arith.constant 0 : index
      %27 = vector.load %arg7[%c0_15, %c0_16, %c0_17] : memref<2x8x4096xf32, #tpu.memory_space<vmem>>, vector<1x8x4096xf32>
      %28 = vector.shape_cast %27 : vector<1x8x4096xf32> to vector<8x4096xf32>
      %29 = vector.shape_cast %26 : vector<8x4096xf32> to vector<1x8x4096xf32>
      tpu.vector_store %arg7[%c0_15, %c0_16, %c0_17], %29 {strides = array<i32>} : memref<2x8x4096xf32, #tpu.memory_space<vmem>>, vector<1x8x4096xf32>,
      %c1 = arith.constant 1 : index
      %c0_18 = arith.constant 0 : index
      %c0_19 = arith.constant 0 : index
      %30 = vector.load %arg3[%c1, %c0_18, %c0_19] : memref<2x4x4096xf32, #tpu.memory_space<vmem>>, vector<1x4x4096xf32>
      %31 = vector.shape_cast %30 : vector<1x4x4096xf32> to vector<4x4096xf32>
      %cst_20 = arith.constant dense<0.000000e+00> : vector<8x4096xf32>
      %32 = tpu.matmul %18, %31, %cst_20 {dimension_numbers = #tpu.dot_dimension_numbers<[1], [0], [0], [1], [0, 0, 1, 1], [], []>} : vector<8x4xf32>, vector<4x4096xf32>, vector<8x4096xf32> -> vector<8x4096xf32>
      %33 = vector.broadcast %19 : vector<8x1xf32> to vector<8x4096xf32>
      %34 = arith.addf %32, %33 : vector<8x4096xf32>
      %cst_21 = arith.constant 0.000000e+00 : f32
      %35 = vector.broadcast %cst_21 : f32 to vector<8x4096xf32>
      %36 = arith.maximumf %34, %35 : vector<8x4096xf32>
      %c1_22 = arith.constant 1 : index
      %c0_23 = arith.constant 0 : index
      %c0_24 = arith.constant 0 : index
      %37 = vector.load %arg7[%c1_22, %c0_23, %c0_24] : memref<2x8x4096xf32, #tpu.memory_space<vmem>>, vector<1x8x4096xf32>
      %38 = vector.shape_cast %37 : vector<1x8x4096xf32> to vector<8x4096xf32>
      %39 = vector.shape_cast %36 : vector<8x4096xf32> to vector<1x8x4096xf32>
      tpu.vector_store %arg7[%c1_22, %c0_23, %c0_24], %39 {strides = array<i32>} : memref<2x8x4096xf32, #tpu.memory_space<vmem>>, vector<1x8x4096xf32>,
    } else {
    }
    return
  }
  func.func @transform_0(%arg0: i32, %arg1: i32, %arg2: i32) -> (i32, i32, i32) {
    %c0_i32 = arith.constant 0 : i32
    %c0_i32_0 = arith.constant 0 : i32
    return %arg1, %c0_i32, %arg2 : i32, i32, i32
  }
  func.func @transform_1(%arg0: i32, %arg1: i32, %arg2: i32) -> (i32, i32) {
    %c0_i32 = arith.constant 0 : i32
    %c0_i32_0 = arith.constant 0 : i32
    %c0_i32_1 = arith.constant 0 : i32
    return %c0_i32, %c0_i32_0 : i32, i32
  }
  func.func @transform_2(%arg0: i32, %arg1: i32, %arg2: i32) -> (i32, i32) {
    %c0_i32 = arith.constant 0 : i32
    %c0_i32_0 = arith.constant 0 : i32
    %c0_i32_1 = arith.constant 0 : i32
    return %c0_i32, %c0_i32_0 : i32, i32
  }
  func.func @transform_3(%arg0: i32, %arg1: i32, %arg2: i32) -> (i32, i32) {
    %c0_i32 = arith.constant 0 : i32
    %c0_i32_0 = arith.constant 0 : i32
    %c0_i32_1 = arith.constant 0 : i32
    return %c0_i32, %c0_i32_0 : i32, i32
  }
  func.func @transform_4(%arg0: i32, %arg1: i32, %arg2: i32) -> (i32, i32, i32) {
    %0 = arith.muli %arg1, %arg0 : i32
    %1 = arith.muli %arg2, %arg0 : i32
    %c0_i32 = arith.constant 0 : i32
    %c0_i32_0 = arith.constant 0 : i32
    return %0, %c0_i32, %1 : i32, i32, i32
  }
}

</mosaic_0001>

<llo_original>
// kernel: tpu_custom_call.1
$region0: #{tpu_custom_call.1}
  #allocation0 [shape = 'u32[]', space=smem, size = 0x4, offset = 0x4, fixed_abs, tag = 'smem constant byte address 0x4 - core index']
  #allocation1 [shape = 'u32[72,128]{1,0:T(1,128)}', space=vmem, size = 0x9000, scoped, tag = 'internal scratch']
  #allocation2 [shape = 'f32[8,1]{1,0:T(8,128)}', space=vmem, size = 0x1000, scoped, tag = 'scratch operand']
  #allocation3 [shape = 'f32[8,1]{1,0:T(8,128)}', space=vmem, size = 0x1000, scoped, tag = 'scratch operand']
  #allocation4 [shape = 'f32[8,4]{1,0:T(8,128)}', space=vmem, size = 0x1000, scoped, tag = 'scratch operand']
  #allocation5 [shape = 'f32[8,1]{1,0:T(8,128)}', space=vmem, size = 0x1000, scoped, tag = 'scratch operand']
  %s0 = inlined_call_operand.hbm [shape: f32[2,4,4096], index: 0, kind: input, shape index: {}]
  %s1 = inlined_call_operand.vmem [shape: f32[8,4], index: 1, kind: input, shape index: {}]
  %s2 = inlined_call_operand.vmem [shape: f32[8,1], index: 2, kind: input, shape index: {}]
  %s3 = inlined_call_operand.vmem [shape: f32[8,1], index: 3, kind: input, shape index: {}]
  %s4 = inlined_call_operand.hbm [shape: f32[2,8,4096], index: 4, kind: output, shape index: {}]
  %s5 = sld [smem:[#allocation0]]
  $region69: #{tpu_custom_call.1} parent=0
    _
  %s7 = ssub.s32 1, %s5
  %s8 = scalar_select 0, %s7, %s5
  $region1: #{tpu_custom_call.1} parent=0
    #allocation6 [shape = 'u8[131072]{0}', space=vmem, size = 0x20000, scoped, tag = 'input window, operand 0, single buffered']
    #allocation7 [shape = 's32[2]{0}', space=sflag, size = 0x8, scoped, tag = 'scoped memory for tpu_custom_call.1']
    #allocation8 [shape = 's32[2]{0}', space=sflag, size = 0x8, scoped, tag = 'scoped memory for tpu_custom_call.1']
    #allocation9 [shape = 'u8[524288]{0}', space=vmem, size = 0x80000, scoped, tag = 'output window, operand 0']
    %9 = vsyncpa [#allocation7], 0
    %10 = vsyncpa [#allocation8], 0
    %s11 = scalar_lea.sflag [#allocation8], 1
    %12 = vsyncpa %s11, 0
    loop: start=0, step=1, limit=4
    $region2: #{tpu_custom_call.1} parent=1 // loop_pre_header
      _
    $region3: #{tpu_custom_call.1} parent=1 // loop_header
      %s14 = sphi 0, %s18
      %p15 = scmp.ge.s32.totalorder %s14, 4
      %s21 = sphi 0, %s40
      %s22 = sphi 0, %s36
      %s23 = sphi 0, %s32
      %s24 = sphi 0, %s21
      %s25 = sphi 0, %s22
      %s26 = sphi 0, %s23
      %s27 = sphi 0, %s24
      %s28 = sphi 0, %s25
      %s29 = sphi 0, %s26
      %s45 = sphi 0, %s47
      %s48 = sphi 0, %s45
      %s49 = sphi 0, %s48
      %s65 = sphi 0, %s49
      %s69 = sphi 0, %s69
      %s71 = sphi 0, %s69
      %s72 = sphi 0, %s71
      %s86 = sphi 0, %s72
      %s90 = sphi 0, %s90
      %s92 = sphi 0, %s90
      %s93 = sphi 0, %s92
      %s107 = sphi 0, %s93
      %s111 = sphi 0, %s111
      %s113 = sphi 0, %s111
      %s114 = sphi 0, %s113
      %s128 = sphi 0, %s114
      %s140 = sphi 0, %s142
      %s143 = sphi 0, %s140
      %s144 = sphi 0, %s143
      %s160 = sphi 0, %s144
    $region4: #{tpu_custom_call.1} parent=1 // loop_header_branch
      %17 = sbr.rel (%p15) target = $region8
    $region5: #{tpu_custom_call.1} parent=1 // loop_body
      %s19 = ssub.s32 %s14, 1
      %s20 = ssub.s32 %s14, 2
      %s30 = sadd.s32 1, %s23
      %p31 = scmp.ge.s32.totalorder %s30, 1
      %s32 = scalar_select %p31, 0, %s30
      %s33 = sadd.s32 1, %s22
      %s34 = scalar_select %p31, %s33, %s22
      %p35 = scmp.ge.s32.totalorder %s34, 1
      %s36 = scalar_select %p35, 0, %s34
      %s37 = sadd.s32 1, %s21
      %s38 = scalar_select %p35, %s37, %s21
      %p39 = scmp.ge.s32.totalorder %s38, 2
      %s40 = scalar_select %p39, 0, %s38
      %s41 = ssub.s32 %s22, %s36
      %s42 = ssub.s32 %s23, %s32
      %s43 = sor.u32 %s41, %s42
      %p44 = scmp.eq.s32.totalorder %s43, 0
      %s46 = sadd.s32 %s45, 1
      %s47 = scalar_select %p44, %s45, %s46
      %p50 = pneg %p44
      %p51 = scmp.eq.s32.totalorder %s14, 1
      %p52 = por %p50, %p51
      %p53 = scmp.ne.s32.totalorder %s45, %s48
      %p54 = scmp.eq.s32.totalorder %s14, 0
      %p55 = por %p53, %p54
      %p56 = scmp.ne.s32.totalorder %s45, %s48
      %p57 = scmp.eq.s32.totalorder %s19, 1
      %p58 = por %p56, %p57
      %p59 = scmp.ne.s32.totalorder %s48, %s49
      %p60 = scmp.eq.s32.totalorder %s19, 0
      %p61 = por %p59, %p60
      %p62 = scmp.ne.s32.totalorder %s48, %s49
      %p63 = scmp.eq.s32.totalorder %s20, 1
      %p64 = por %p62, %p63
      %p66 = scmp.ne.s32.totalorder %s49, %s65
      %p67 = scmp.eq.s32.totalorder %s20, 0
      %p68 = por %p66, %p67
      %s70 = sadd.s32 %s69, 1
      %p73 = scmp.eq.s32.totalorder %s14, 1
      %p74 = scmp.ne.s32.totalorder %s69, %s71
      %p75 = scmp.eq.s32.totalorder %s14, 0
      %p76 = por %p74, %p75
      %p77 = scmp.ne.s32.totalorder %s69, %s71
      %p78 = scmp.eq.s32.totalorder %s19, 1
      %p79 = por %p77, %p78
      %p80 = scmp.ne.s32.totalorder %s71, %s72
      %p81 = scmp.eq.s32.totalorder %s19, 0
      %p82 = por %p80, %p81
      %p83 = scmp.ne.s32.totalorder %s71, %s72
      %p84 = scmp.eq.s32.totalorder %s20, 1
      %p85 = por %p83, %p84
      %p87 = scmp.ne.s32.totalorder %s72, %s86
      %p88 = scmp.eq.s32.totalorder %s20, 0
      %p89 = por %p87, %p88
      %s91 = sadd.s32 %s90, 1
      %p94 = scmp.eq.s32.totalorder %s14, 1
      %p95 = scmp.ne.s32.totalorder %s90, %s92
      %p96 = scmp.eq.s32.totalorder %s14, 0
      %p97 = por %p95, %p96
      %p98 = scmp.ne.s32.totalorder %s90, %s92
      %p99 = scmp.eq.s32.totalorder %s19, 1
      %p100 = por %p98, %p99
      %p101 = scmp.ne.s32.totalorder %s92, %s93
      %p102 = scmp.eq.s32.totalorder %s19, 0
      %p103 = por %p101, %p102
      %p104 = scmp.ne.s32.totalorder %s92, %s93
      %p105 = scmp.eq.s32.totalorder %s20, 1
      %p106 = por %p104, %p105
      %p108 = scmp.ne.s32.totalorder %s93, %s107
      %p109 = scmp.eq.s32.totalorder %s20, 0
      %p110 = por %p108, %p109
      %s112 = sadd.s32 %s111, 1
      %p115 = scmp.eq.s32.totalorder %s14, 1
      %p116 = scmp.ne.s32.totalorder %s111, %s113
      %p117 = scmp.eq.s32.totalorder %s14, 0
      %p118 = por %p116, %p117
      %p119 = scmp.ne.s32.totalorder %s111, %s113
      %p120 = scmp.eq.s32.totalorder %s19, 1
      %p121 = por %p119, %p120
      %p122 = scmp.ne.s32.totalorder %s113, %s114
      %p123 = scmp.eq.s32.totalorder %s19, 0
      %p124 = por %p122, %p123
      %p125 = scmp.ne.s32.totalorder %s113, %s114
      %p126 = scmp.eq.s32.totalorder %s20, 1
      %p127 = por %p125, %p126
      %p129 = scmp.ne.s32.totalorder %s114, %s128
      %p130 = scmp.eq.s32.totalorder %s20, 0
      %p131 = por %p129, %p130
      %s132 = smul.u32 %s22, %s21
      %s133 = smul.u32 %s23, %s21
      %s134 = smul.u32 %s36, %s40
      %s135 = smul.u32 %s32, %s40
      %s136 = ssub.s32 %s132, %s134
      %s137 = ssub.s32 %s133, %s135
      %s138 = sor.u32 %s136, %s137
      %p139 = scmp.eq.s32.totalorder %s138, 0
      %s141 = sadd.s32 %s140, 1
      %s142 = scalar_select %p139, %s140, %s141
      %p145 = pneg %p139
      %p146 = scmp.eq.s32.totalorder %s14, 1
      %p147 = por %p145, %p146
      %p148 = scmp.ne.s32.totalorder %s140, %s143
      %p149 = scmp.eq.s32.totalorder %s14, 0
      %p150 = por %p148, %p149
      %p151 = scmp.ne.s32.totalorder %s140, %s143
      %p152 = scmp.eq.s32.totalorder %s19, 1
      %p153 = por %p151, %p152
      %p154 = scmp.ne.s32.totalorder %s143, %s144
      %p155 = scmp.eq.s32.totalorder %s19, 0
      %p156 = por %p154, %p155
      %p157 = scmp.ne.s32.totalorder %s143, %s144
      %p158 = scmp.eq.s32.totalorder %s20, 1
      %p159 = por %p157, %p158
      %p161 = scmp.ne.s32.totalorder %s144, %s160
      %p162 = scmp.eq.s32.totalorder %s20, 0
      %p163 = por %p161, %p162
      %p164 = scmp.le.s32.totalorder 1, %s14
      %p165 = scmp.lt.s32.totalorder %s14, 3
      %p166 = pnand %p164, %p165
      %p167 = pneg %p166
      // Predicated region
      $region9: #{tpu_custom_call.1} parent=5 // pred_check
        _
      $region10: #{tpu_custom_call.1} parent=5 // pred_check_branch
        %169 = sbr.rel (%p166) target = $region12
      $region11: #{tpu_custom_call.1} parent=5 // pred_region
        %s170 = ssub.s32 %s14, 1
        // Predicated region
        $region13: #{tpu_custom_call.1} parent=11 // pred_check
          %p171 = pneg %p61
        $region14: #{tpu_custom_call.1} parent=11 // pred_check_branch
          %173 = sbr.rel (%p171) target = $region16
        $region15: #{tpu_custom_call.1} parent=11 // pred_region
          %s174 = smul.u32 2, %s25
          %s175 = smul.u32 32, %s26
          %177 = vsyncadd [#allocation7], 0
          %s178 = smul.addr %s174, 32
          %s179 = sadd.s32 %s175, %s178
          %s180 = smul.addr %s179, 4
          %s181 = scalar_lea.hbm %s0, %s180
          %s182 = sshll.u32 %s181, 4
          %s183 = int_to_ptr.hbm [resolvable:$true] %s182
          %s184 = sshll.u32 [#allocation6], 4
          %s185 = int_to_ptr.vmem [resolvable:$true] %s184
          %190 = dma.hbm_to_vmem [thread:$0]  %s183, 4096, %s185, [#allocation7], 2048, 2048, 128
        $region16: #{tpu_custom_call.1} parent=11 // pred_fallthru
          _
        // Predicated region
        $region17: #{tpu_custom_call.1} parent=11 // pred_check
          %p191 = pneg %p82
        $region18: #{tpu_custom_call.1} parent=11 // pred_check_branch
          %193 = sbr.rel (%p191) target = $region20
        $region19: #{tpu_custom_call.1} parent=11 // pred_region
          _
        $region20: #{tpu_custom_call.1} parent=11 // pred_fallthru
          _
        // Predicated region
        $region21: #{tpu_custom_call.1} parent=11 // pred_check
          %p194 = pneg %p103
        $region22: #{tpu_custom_call.1} parent=11 // pred_check_branch
          %196 = sbr.rel (%p194) target = $region24
        $region23: #{tpu_custom_call.1} parent=11 // pred_region
          _
        $region24: #{tpu_custom_call.1} parent=11 // pred_fallthru
          _
        // Predicated region
        $region25: #{tpu_custom_call.1} parent=11 // pred_check
          %p197 = pneg %p124
        $region26: #{tpu_custom_call.1} parent=11 // pred_check_branch
          %199 = sbr.rel (%p197) target = $region28
        $region27: #{tpu_custom_call.1} parent=11 // pred_region
          _
        $region28: #{tpu_custom_call.1} parent=11 // pred_fallthru
          _
      $region12: #{tpu_custom_call.1} parent=5 // pred_fallthru
        _
      %p200 = scmp.lt.s32.totalorder %s14, 2
      // Predicated region
      $region29: #{tpu_custom_call.1} parent=5 // pred_check
        %p201 = pneg %p200
      $region30: #{tpu_custom_call.1} parent=5 // pred_check_branch
        %203 = sbr.rel (%p201) target = $region32
      $region31: #{tpu_custom_call.1} parent=5 // pred_region
        _
      $region32: #{tpu_custom_call.1} parent=5 // pred_fallthru
        _
      %p204 = scmp.le.s32.totalorder 1, %s14
      %p205 = scmp.lt.s32.totalorder %s14, 3
      %p206 = pnand %p204, %p205
      %p207 = pneg %p206
      // Predicated region
      $region33: #{tpu_custom_call.1} parent=5 // pred_check
        _
      $region34: #{tpu_custom_call.1} parent=5 // pred_check_branch
        %209 = sbr.rel (%p206) target = $region36
      $region35: #{tpu_custom_call.1} parent=5 // pred_region
        %s210 = ssub.s32 %s14, 1
        // Predicated region
        $region37: #{tpu_custom_call.1} parent=35 // pred_check
          %p211 = pneg %p61
        $region38: #{tpu_custom_call.1} parent=35 // pred_check_branch
          %213 = sbr.rel (%p211) target = $region40
        $region39: #{tpu_custom_call.1} parent=35 // pred_region
          %215 = dma.done [#allocation7], 4096
        $region40: #{tpu_custom_call.1} parent=35 // pred_fallthru
          _
        %p216 = pneg %p61
        %p217 = pneg %p58
        %p218 = pneg %p82
        %p219 = pneg %p79
        %p220 = pneg %p103
        %p221 = pneg %p100
        %p222 = pneg %p124
        %p223 = pneg %p121
        %p224 = pneg %p156
        %p225 = pneg %p153
        %s226 = sand.u32 %s143, 1
        %s227 = scalar_lea.sflag [#allocation8], %s226
        %s228 = sand.u32 %s143, 1
        %s229 = smul.addr %s228, 512
        %s230 = scalar_lea.vmem [#allocation9], %s229
        %s231 = smul.u32 2, %s25
        %s232 = smul.u32 32, %s26
        %s233 = smul.u32 %s25, %s24
        %s234 = smul.u32 %s26, %s24
        %s235 = smul.u32 2, %s233
        %s236 = smul.u32 32, %s234
        %p237 = scmp.eq.s32.totalorder %s24, 0
        %p238 = scmp.eq.s32.totalorder %s25, 0
        %p239 = pnand %p237, %p238
        %p240 = pneg %p239
        %p241 = scmp.eq.s32.totalorder %s26, 0
        %p242 = pnand %p240, %p241
        %p243 = pneg %p242
        // Predicated region
        $region41: #{tpu_custom_call.1} parent=35 // pred_check
          _
        $region42: #{tpu_custom_call.1} parent=35 // pred_check_branch
          %245 = sbr.rel (%p242) target = $region44
        $region43: #{tpu_custom_call.1} parent=35 // pred_region
          %vm246 = vcmask 7168
          %247 = vst.msk [vmem:[#allocation2] sm:$0xff] %vm246, 0.0
          %248 = vst.msk [vmem:[#allocation3] sm:$0xff] %vm246, 0.0
        $region44: #{tpu_custom_call.1} parent=35 // pred_fallthru
          _
        // Predicated region
        $region45: #{tpu_custom_call.1} parent=35 // pred_check
          %p249 = pneg %p237
        $region46: #{tpu_custom_call.1} parent=35 // pred_check_branch
          %251 = sbr.rel (%p249) target = $region48
        $region47: #{tpu_custom_call.1} parent=35 // pred_region
          %v252 = vld [vmem:[%s1] sm:$0xff]
          %v253 = vld [vmem:[#allocation6] sm:$0xff]
          %v254 = vld [vmem:[#allocation6 + $0x8] sm:$0xff]
          %v255 = vld [vmem:[#allocation6 + $0x10] sm:$0xff]
          %v256 = vld [vmem:[#allocation6 + $0x18] sm:$0xff]
          %v257 = vld [vmem:[#allocation6 + $0x20] sm:$0xff]
          %v258 = vld [vmem:[#allocation6 + $0x28] sm:$0xff]
          %v259 = vld [vmem:[#allocation6 + $0x30] sm:$0xff]
          %v260 = vld [vmem:[#allocation6 + $0x38] sm:$0xff]
          %v261 = vld [vmem:[#allocation6 + $0x40] sm:$0xff]
          %v262 = vld [vmem:[#allocation6 + $0x48] sm:$0xff]
          %v263 = vld [vmem:[#allocation6 + $0x50] sm:$0xff]
          %v264 = vld [vmem:[#allocation6 + $0x58] sm:$0xff]
          %v265 = vld [vmem:[#allocation6 + $0x60] sm:$0xff]
          %v266 = vld [vmem:[#allocation6 + $0x68] sm:$0xff]
          %v267 = vld [vmem:[#allocation6 + $0x70] sm:$0xff]
          %v268 = vld [vmem:[#allocation6 + $0x78] sm:$0xff]
          %285 = vst [vmem:[#allocation1] ss:$2 sm:$0xff] %v253
          %s286 = scalar_lea.vmem [#allocation1], 16
          %287 = vst [vmem:[%s286] ss:$2 sm:$0xff] %v254
          %s288 = scalar_lea.vmem [#allocation1], 32
          %289 = vst [vmem:[%s288] ss:$2 sm:$0xff] %v255
          %s290 = scalar_lea.vmem [#allocation1], 48
          %291 = vst [vmem:[%s290] ss:$2 sm:$0xff] %v256
          %v292 = vld.sshfl [vmem:[#allocation1] sm:$0xff pattern:$0x75316420]
          %v293 = vld.sshfl [vmem:[#allocation1 + $0x8] sm:$0xff pattern:$0x75316420]
          %v294 = vld.sshfl [vmem:[#allocation1 + $0x10] sm:$0xff pattern:$0x75316420]
          %v295 = vld.sshfl [vmem:[#allocation1 + $0x18] sm:$0xff pattern:$0x75316420]
          %v296 = vld.sshfl [vmem:[#allocation1 + $0x20] sm:$0xff pattern:$0x75316420]
          %v297 = vld.sshfl [vmem:[#allocation1 + $0x28] sm:$0xff pattern:$0x75316420]
          %v298 = vld.sshfl [vmem:[#allocation1 + $0x30] sm:$0xff pattern:$0x75316420]
          %v299 = vld.sshfl [vmem:[#allocation1 + $0x38] sm:$0xff pattern:$0x75316420]
          %300 = vst [vmem:[#allocation1] ss:$2 sm:$0xff] %v257
          %301 = vst [vmem:[%s286] ss:$2 sm:$0xff] %v258
          %302 = vst [vmem:[%s288] ss:$2 sm:$0xff] %v259
          %303 = vst [vmem:[%s290] ss:$2 sm:$0xff] %v260
          %v304 = vld.sshfl [vmem:[#allocation1] sm:$0xff pattern:$0x75316420]
          %v305 = vld.sshfl [vmem:[#allocation1 + $0x8] sm:$0xff pattern:$0x75316420]
          %v306 = vld.sshfl [vmem:[#allocation1 + $0x10] sm:$0xff pattern:$0x75316420]
          %v307 = vld.sshfl [vmem:[#allocation1 + $0x18] sm:$0xff pattern:$0x75316420]
          %v308 = vld.sshfl [vmem:[#allocation1 + $0x20] sm:$0xff pattern:$0x75316420]
          %v309 = vld.sshfl [vmem:[#allocation1 + $0x28] sm:$0xff pattern:$0x75316420]
          %v310 = vld.sshfl [vmem:[#allocation1 + $0x30] sm:$0xff pattern:$0x75316420]
          %v311 = vld.sshfl [vmem:[#allocation1 + $0x38] sm:$0xff pattern:$0x75316420]
          %312 = vst [vmem:[#allocation1] ss:$2 sm:$0xff] %v261
          %313 = vst [vmem:[%s286] ss:$2 sm:$0xff] %v262
          %314 = vst [vmem:[%s288] ss:$2 sm:$0xff] %v263
          %315 = vst [vmem:[%s290] ss:$2 sm:$0xff] %v264
          %v316 = vld.sshfl [vmem:[#allocation1] sm:$0xff pattern:$0x75316420]
          %v317 = vld.sshfl [vmem:[#allocation1 + $0x8] sm:$0xff pattern:$0x75316420]
          %v318 = vld.sshfl [vmem:[#allocation1 + $0x10] sm:$0xff pattern:$0x75316420]
          %v319 = vld.sshfl [vmem:[#allocation1 + $0x18] sm:$0xff pattern:$0x75316420]
          %v320 = vld.sshfl [vmem:[#allocation1 + $0x20] sm:$0xff pattern:$0x75316420]
          %v321 = vld.sshfl [vmem:[#allocation1 + $0x28] sm:$0xff pattern:$0x75316420]
          %v322 = vld.sshfl [vmem:[#allocation1 + $0x30] sm:$0xff pattern:$0x75316420]
          %v323 = vld.sshfl [vmem:[#allocation1 + $0x38] sm:$0xff pattern:$0x75316420]
          %324 = vst [vmem:[#allocation1] ss:$2 sm:$0xff] %v265
          %325 = vst [vmem:[%s286] ss:$2 sm:$0xff] %v266
          %326 = vst [vmem:[%s288] ss:$2 sm:$0xff] %v267
          %327 = vst [vmem:[%s290] ss:$2 sm:$0xff] %v268
          %v328 = vld.sshfl [vmem:[#allocation1] sm:$0xff pattern:$0x75316420]
          %v329 = vld.sshfl [vmem:[#allocation1 + $0x8] sm:$0xff pattern:$0x75316420]
          %v330 = vld.sshfl [vmem:[#allocation1 + $0x10] sm:$0xff pattern:$0x75316420]
          %v331 = vld.sshfl [vmem:[#allocation1 + $0x18] sm:$0xff pattern:$0x75316420]
          %v332 = vld.sshfl [vmem:[#allocation1 + $0x20] sm:$0xff pattern:$0x75316420]
          %v333 = vld.sshfl [vmem:[#allocation1 + $0x28] sm:$0xff pattern:$0x75316420]
          %v334 = vld.sshfl [vmem:[#allocation1 + $0x30] sm:$0xff pattern:$0x75316420]
          %v335 = vld.sshfl [vmem:[#allocation1 + $0x38] sm:$0xff pattern:$0x75316420]
          %vm336 = vcmask 31744
          %v338 = vsel %vm336, %v252, 0
          %vm340 = vcmask 1043456
          %v341 = vsel %vm340, %v292, 0
          %v343 = vsel %vm340, %v293, 0
          %v345 = vsel %vm340, %v294, 0
          %v347 = vsel %vm340, %v295, 0
          %v349 = vsel %vm340, %v296, 0
          %v351 = vsel %vm340, %v297, 0
          %v353 = vsel %vm340, %v298, 0
          %v355 = vsel %vm340, %v299, 0
          %v357 = vsel %vm340, %v304, 0
          %v359 = vsel %vm340, %v305, 0
          %v361 = vsel %vm340, %v306, 0
          %v363 = vsel %vm340, %v307, 0
          %v365 = vsel %vm340, %v308, 0
          %v367 = vsel %vm340, %v309, 0
          %v369 = vsel %vm340, %v310, 0
          %v371 = vsel %vm340, %v311, 0
          %v373 = vsel %vm340, %v316, 0
          %v375 = vsel %vm340, %v317, 0
          %v377 = vsel %vm340, %v318, 0
          %v379 = vsel %vm340, %v319, 0
          %v381 = vsel %vm340, %v320, 0
          %v383 = vsel %vm340, %v321, 0
          %v385 = vsel %vm340, %v322, 0
          %v387 = vsel %vm340, %v323, 0
          %v389 = vsel %vm340, %v328, 0
          %v391 = vsel %vm340, %v329, 0
          %v393 = vsel %vm340, %v330, 0
          %v395 = vsel %vm340, %v331, 0
          %v397 = vsel %vm340, %v332, 0
          %v399 = vsel %vm340, %v333, 0
          %v401 = vsel %vm340, %v334, 0
          %v403 = vsel %vm340, %v335, 0
          %405 = vmatpush.msra.mxu0 0.0
          %406 = vmatpush.msra.mxu0 0.0
          %407 = vmatpush.msra.mxu0 0.0
          %408 = vmatpush.msra.mxu0 0.0
          %409 = vmatpush.msra.mxu0 0.0
          %410 = vmatpush.msra.mxu0 0.0
          %411 = vmatpush.msra.mxu0 0.0
          %412 = vmatpush.msra.mxu0 0.0
          %413 = vmatpush.msra.mxu0 0.0
          %414 = vmatpush.msra.mxu0 0.0
          %415 = vmatpush.msra.mxu0 0.0
          %416 = vmatpush.msra.mxu0 0.0
          %417 = vmatpush.msra.mxu0 0.0
          %418 = vmatpush.msra.mxu0 0.0
          %419 = vmatpush.msra.mxu0 0.0
          %420 = vmatpush.msra.mxu0 %v341
          %421 = vmatmul.f32.gmra.mxu0 %v338
          %v422 = vpop.f32.mrf.mxu0
          %v423 = vadd.f32 0.0, %v422
          %424 = vdwg.mxu0
          %425 = vmatpush.msra.mxu0 0.0
          %426 = vmatpush.msra.mxu0 0.0
          %427 = vmatpush.msra.mxu0 0.0
          %428 = vmatpush.msra.mxu0 0.0
          %429 = vmatpush.msra.mxu0 0.0
          %430 = vmatpush.msra.mxu0 0.0
          %431 = vmatpush.msra.mxu0 0.0
          %432 = vmatpush.msra.mxu0 0.0
          %433 = vmatpush.msra.mxu0 0.0
          %434 = vmatpush.msra.mxu0 0.0
          %435 = vmatpush.msra.mxu0 0.0
          %436 = vmatpush.msra.mxu0 0.0
          %437 = vmatpush.msra.mxu0 0.0
          %438 = vmatpush.msra.mxu0 0.0
          %439 = vmatpush.msra.mxu0 0.0
          %440 = vmatpush.msra.mxu0 %v343
          %441 = vmatmul.f32.gmra.mxu0 %v338
          %v442 = vpop.f32.mrf.mxu0
          %v443 = vadd.f32 0.0, %v442
          %444 = vdwg.mxu0
          %445 = vmatpush.msra.mxu0 0.0
          %446 = vmatpush.msra.mxu0 0.0
          %447 = vmatpush.msra.mxu0 0.0
          %448 = vmatpush.msra.mxu0 0.0
          %449 = vmatpush.msra.mxu0 0.0
          %450 = vmatpush.msra.mxu0 0.0
          %451 = vmatpush.msra.mxu0 0.0
          %452 = vmatpush.msra.mxu0 0.0
          %453 = vmatpush.msra.mxu0 0.0
          %454 = vmatpush.msra.mxu0 0.0
          %455 = vmatpush.msra.mxu0 0.0
          %456 = vmatpush.msra.mxu0 0.0
          %457 = vmatpush.msra.mxu0 0.0
          %458 = vmatpush.msra.mxu0 0.0
          %459 = vmatpush.msra.mxu0 0.0
          %460 = vmatpush.msra.mxu0 %v345
          %461 = vmatmul.f32.gmra.mxu0 %v338
          %v462 = vpop.f32.mrf.mxu0
          %v463 = vadd.f32 0.0, %v462
          %464 = vdwg.mxu0
          %465 = vmatpush.msra.mxu0 0.0
          %466 = vmatpush.msra.mxu0 0.0
          %467 = vmatpush.msra.mxu0 0.0
          %468 = vmatpush.msra.mxu0 0.0
          %469 = vmatpush.msra.mxu0 0.0
          %470 = vmatpush.msra.mxu0 0.0
          %471 = vmatpush.msra.mxu0 0.0
          %472 = vmatpush.msra.mxu0 0.0
          %473 = vmatpush.msra.mxu0 0.0
          %474 = vmatpush.msra.mxu0 0.0
          %475 = vmatpush.msra.mxu0 0.0
          %476 = vmatpush.msra.mxu0 0.0
          %477 = vmatpush.msra.mxu0 0.0
          %478 = vmatpush.msra.mxu0 0.0
          %479 = vmatpush.msra.mxu0 0.0
          %480 = vmatpush.msra.mxu0 %v347
          %481 = vmatmul.f32.gmra.mxu0 %v338
          %v482 = vpop.f32.mrf.mxu0
          %v483 = vadd.f32 0.0, %v482
          %484 = vdwg.mxu0
          %485 = vmatpush.msra.mxu0 0.0
          %486 = vmatpush.msra.mxu0 0.0
          %487 = vmatpush.msra.mxu0 0.0
          %488 = vmatpush.msra.mxu0 0.0
          %489 = vmatpush.msra.mxu0 0.0
          %490 = vmatpush.msra.mxu0 0.0
          %491 = vmatpush.msra.mxu0 0.0
          %492 = vmatpush.msra.mxu0 0.0
          %493 = vmatpush.msra.mxu0 0.0
          %494 = vmatpush.msra.mxu0 0.0
          %495 = vmatpush.msra.mxu0 0.0
          %496 = vmatpush.msra.mxu0 0.0
          %497 = vmatpush.msra.mxu0 0.0
          %498 = vmatpush.msra.mxu0 0.0
          %499 = vmatpush.msra.mxu0 0.0
          %500 = vmatpush.msra.mxu0 %v349
          %501 = vmatmul.f32.gmra.mxu0 %v338
          %v502 = vpop.f32.mrf.mxu0
          %v503 = vadd.f32 0.0, %v502
          %504 = vdwg.mxu0
          %505 = vmatpush.msra.mxu0 0.0
          %506 = vmatpush.msra.mxu0 0.0
          %507 = vmatpush.msra.mxu0 0.0
          %508 = vmatpush.msra.mxu0 0.0
          %509 = vmatpush.msra.mxu0 0.0
          %510 = vmatpush.msra.mxu0 0.0
          %511 = vmatpush.msra.mxu0 0.0
          %512 = vmatpush.msra.mxu0 0.0
          %513 = vmatpush.msra.mxu0 0.0
          %514 = vmatpush.msra.mxu0 0.0
          %515 = vmatpush.msra.mxu0 0.0
          %516 = vmatpush.msra.mxu0 0.0
          %517 = vmatpush.msra.mxu0 0.0
          %518 = vmatpush.msra.mxu0 0.0
          %519 = vmatpush.msra.mxu0 0.0
          %520 = vmatpush.msra.mxu0 %v351
          %521 = vmatmul.f32.gmra.mxu0 %v338
          %v522 = vpop.f32.mrf.mxu0
          %v523 = vadd.f32 0.0, %v522
          %524 = vdwg.mxu0
          %525 = vmatpush.msra.mxu0 0.0
          %526 = vmatpush.msra.mxu0 0.0
          %527 = vmatpush.msra.mxu0 0.0
          %528 = vmatpush.msra.mxu0 0.0
          %529 = vmatpush.msra.mxu0 0.0
          %530 = vmatpush.msra.mxu0 0.0
          %531 = vmatpush.msra.mxu0 0.0
          %532 = vmatpush.msra.mxu0 0.0
          %533 = vmatpush.msra.mxu0 0.0
          %534 = vmatpush.msra.mxu0 0.0
          %535 = vmatpush.msra.mxu0 0.0
          %536 = vmatpush.msra.mxu0 0.0
          %537 = vmatpush.msra.mxu0 0.0
          %538 = vmatpush.msra.mxu0 0.0
          %539 = vmatpush.msra.mxu0 0.0
          %540 = vmatpush.msra.mxu0 %v353
          %541 = vmatmul.f32.gmra.mxu0 %v338
          %v542 = vpop.f32.mrf.mxu0
          %v543 = vadd.f32 0.0, %v542
          %544 = vdwg.mxu0
          %545 = vmatpush.msra.mxu0 0.0
          %546 = vmatpush.msra.mxu0 0.0
          %547 = vmatpush.msra.mxu0 0.0
          %548 = vmatpush.msra.mxu0 0.0
          %549 = vmatpush.msra.mxu0 0.0
          %550 = vmatpush.msra.mxu0 0.0
          %551 = vmatpush.msra.mxu0 0.0
          %552 = vmatpush.msra.mxu0 0.0
          %553 = vmatpush.msra.mxu0 0.0
          %554 = vmatpush.msra.mxu0 0.0
          %555 = vmatpush.msra.mxu0 0.0
          %556 = vmatpush.msra.mxu0 0.0
          %557 = vmatpush.msra.mxu0 0.0
          %558 = vmatpush.msra.mxu0 0.0
          %559 = vmatpush.msra.mxu0 0.0
          %560 = vmatpush.msra.mxu0 %v355
          %561 = vmatmul.f32.gmra.mxu0 %v338
          %v562 = vpop.f32.mrf.mxu0
          %v563 = vadd.f32 0.0, %v562
          %564 = vdwg.mxu0
          %565 = vmatpush.msra.mxu0 0.0
          %566 = vmatpush.msra.mxu0 0.0
          %567 = vmatpush.msra.mxu0 0.0
          %568 = vmatpush.msra.mxu0 0.0
          %569 = vmatpush.msra.mxu0 0.0
          %570 = vmatpush.msra.mxu0 0.0
          %571 = vmatpush.msra.mxu0 0.0
          %572 = vmatpush.msra.mxu0 0.0
          %573 = vmatpush.msra.mxu0 0.0
          %574 = vmatpush.msra.mxu0 0.0
          %575 = vmatpush.msra.mxu0 0.0
          %576 = vmatpush.msra.mxu0 0.0
          %577 = vmatpush.msra.mxu0 0.0
          %578 = vmatpush.msra.mxu0 0.0
          %579 = vmatpush.msra.mxu0 0.0
          %580 = vmatpush.msra.mxu0 %v357
          %581 = vmatmul.f32.gmra.mxu0 %v338
          %v582 = vpop.f32.mrf.mxu0
          %v583 = vadd.f32 0.0, %v582
          %584 = vdwg.mxu0
          %585 = vmatpush.msra.mxu0 0.0
          %586 = vmatpush.msra.mxu0 0.0
          %587 = vmatpush.msra.mxu0 0.0
          %588 = vmatpush.msra.mxu0 0.0
          %589 = vmatpush.msra.mxu0 0.0
          %590 = vmatpush.msra.mxu0 0.0
          %591 = vmatpush.msra.mxu0 0.0
          %592 = vmatpush.msra.mxu0 0.0
          %593 = vmatpush.msra.mxu0 0.0
          %594 = vmatpush.msra.mxu0 0.0
          %595 = vmatpush.msra.mxu0 0.0
          %596 = vmatpush.msra.mxu0 0.0
          %597 = vmatpush.msra.mxu0 0.0
          %598 = vmatpush.msra.mxu0 0.0
          %599 = vmatpush.msra.mxu0 0.0
          %600 = vmatpush.msra.mxu0 %v359
          %601 = vmatmul.f32.gmra.mxu0 %v338
          %v602 = vpop.f32.mrf.mxu0
          %v603 = vadd.f32 0.0, %v602
          %604 = vdwg.mxu0
          %605 = vmatpush.msra.mxu0 0.0
          %606 = vmatpush.msra.mxu0 0.0
          %607 = vmatpush.msra.mxu0 0.0
          %608 = vmatpush.msra.mxu0 0.0
          %609 = vmatpush.msra.mxu0 0.0
          %610 = vmatpush.msra.mxu0 0.0
          %611 = vmatpush.msra.mxu0 0.0
          %612 = vmatpush.msra.mxu0 0.0
          %613 = vmatpush.msra.mxu0 0.0
          %614 = vmatpush.msra.mxu0 0.0
          %615 = vmatpush.msra.mxu0 0.0
          %616 = vmatpush.msra.mxu0 0.0
          %617 = vmatpush.msra.mxu0 0.0
          %618 = vmatpush.msra.mxu0 0.0
          %619 = vmatpush.msra.mxu0 0.0
          %620 = vmatpush.msra.mxu0 %v361
          %621 = vmatmul.f32.gmra.mxu0 %v338
          %v622 = vpop.f32.mrf.mxu0
          %v623 = vadd.f32 0.0, %v622
          %624 = vdwg.mxu0
          %625 = vmatpush.msra.mxu0 0.0
          %626 = vmatpush.msra.mxu0 0.0
          %627 = vmatpush.msra.mxu0 0.0
          %628 = vmatpush.msra.mxu0 0.0
          %629 = vmatpush.msra.mxu0 0.0
          %630 = vmatpush.msra.mxu0 0.0
          %631 = vmatpush.msra.mxu0 0.0
          %632 = vmatpush.msra.mxu0 0.0
          %633 = vmatpush.msra.mxu0 0.0
          %634 = vmatpush.msra.mxu0 0.0
          %635 = vmatpush.msra.mxu0 0.0
          %636 = vmatpush.msra.mxu0 0.0
          %637 = vmatpush.msra.mxu0 0.0
          %638 = vmatpush.msra.mxu0 0.0
          %639 = vmatpush.msra.mxu0 0.0
          %640 = vmatpush.msra.mxu0 %v363
          %641 = vmatmul.f32.gmra.mxu0 %v338
          %v642 = vpop.f32.mrf.mxu0
          %v643 = vadd.f32 0.0, %v642
          %644 = vdwg.mxu0
          %645 = vmatpush.msra.mxu0 0.0
          %646 = vmatpush.msra.mxu0 0.0
          %647 = vmatpush.msra.mxu0 0.0
          %648 = vmatpush.msra.mxu0 0.0
          %649 = vmatpush.msra.mxu0 0.0
          %650 = vmatpush.msra.mxu0 0.0
          %651 = vmatpush.msra.mxu0 0.0
          %652 = vmatpush.msra.mxu0 0.0
          %653 = vmatpush.msra.mxu0 0.0
          %654 = vmatpush.msra.mxu0 0.0
          %655 = vmatpush.msra.mxu0 0.0
          %656 = vmatpush.msra.mxu0 0.0
          %657 = vmatpush.msra.mxu0 0.0
          %658 = vmatpush.msra.mxu0 0.0
          %659 = vmatpush.msra.mxu0 0.0
          %660 = vmatpush.msra.mxu0 %v365
          %661 = vmatmul.f32.gmra.mxu0 %v338
          %v662 = vpop.f32.mrf.mxu0
          %v663 = vadd.f32 0.0, %v662
          %664 = vdwg.mxu0
          %665 = vmatpush.msra.mxu0 0.0
          %666 = vmatpush.msra.mxu0 0.0
          %667 = vmatpush.msra.mxu0 0.0
          %668 = vmatpush.msra.mxu0 0.0
          %669 = vmatpush.msra.mxu0 0.0
          %670 = vmatpush.msra.mxu0 0.0
          %671 = vmatpush.msra.mxu0 0.0
          %672 = vmatpush.msra.mxu0 0.0
          %673 = vmatpush.msra.mxu0 0.0
          %674 = vmatpush.msra.mxu0 0.0
          %675 = vmatpush.msra.mxu0 0.0
          %676 = vmatpush.msra.mxu0 0.0
          %677 = vmatpush.msra.mxu0 0.0
          %678 = vmatpush.msra.mxu0 0.0
          %679 = vmatpush.msra.mxu0 0.0
          %680 = vmatpush.msra.mxu0 %v367
          %681 = vmatmul.f32.gmra.mxu0 %v338
          %v682 = vpop.f32.mrf.mxu0
          %v683 = vadd.f32 0.0, %v682
          %684 = vdwg.mxu0
          %685 = vmatpush.msra.mxu0 0.0
          %686 = vmatpush.msra.mxu0 0.0
          %687 = vmatpush.msra.mxu0 0.0
          %688 = vmatpush.msra.mxu0 0.0
          %689 = vmatpush.msra.mxu0 0.0
          %690 = vmatpush.msra.mxu0 0.0
          %691 = vmatpush.msra.mxu0 0.0
          %692 = vmatpush.msra.mxu0 0.0
          %693 = vmatpush.msra.mxu0 0.0
          %694 = vmatpush.msra.mxu0 0.0
          %695 = vmatpush.msra.mxu0 0.0
          %696 = vmatpush.msra.mxu0 0.0
          %697 = vmatpush.msra.mxu0 0.0
          %698 = vmatpush.msra.mxu0 0.0
          %699 = vmatpush.msra.mxu0 0.0
          %700 = vmatpush.msra.mxu0 %v369
          %701 = vmatmul.f32.gmra.mxu0 %v338
          %v702 = vpop.f32.mrf.mxu0
          %v703 = vadd.f32 0.0, %v702
          %704 = vdwg.mxu0
          %705 = vmatpush.msra.mxu0 0.0
          %706 = vmatpush.msra.mxu0 0.0
          %707 = vmatpush.msra.mxu0 0.0
          %708 = vmatpush.msra.mxu0 0.0
          %709 = vmatpush.msra.mxu0 0.0
          %710 = vmatpush.msra.mxu0 0.0
          %711 = vmatpush.msra.mxu0 0.0
          %712 = vmatpush.msra.mxu0 0.0
          %713 = vmatpush.msra.mxu0 0.0
          %714 = vmatpush.msra.mxu0 0.0
          %715 = vmatpush.msra.mxu0 0.0
          %716 = vmatpush.msra.mxu0 0.0
          %717 = vmatpush.msra.mxu0 0.0
          %718 = vmatpush.msra.mxu0 0.0
          %719 = vmatpush.msra.mxu0 0.0
          %720 = vmatpush.msra.mxu0 %v371
          %721 = vmatmul.f32.gmra.mxu0 %v338
          %v722 = vpop.f32.mrf.mxu0
          %v723 = vadd.f32 0.0, %v722
          %724 = vdwg.mxu0
          %725 = vmatpush.msra.mxu0 0.0
          %726 = vmatpush.msra.mxu0 0.0
          %727 = vmatpush.msra.mxu0 0.0
          %728 = vmatpush.msra.mxu0 0.0
          %729 = vmatpush.msra.mxu0 0.0
          %730 = vmatpush.msra.mxu0 0.0
          %731 = vmatpush.msra.mxu0 0.0
          %732 = vmatpush.msra.mxu0 0.0
          %733 = vmatpush.msra.mxu0 0.0
          %734 = vmatpush.msra.mxu0 0.0
          %735 = vmatpush.msra.mxu0 0.0
          %736 = vmatpush.msra.mxu0 0.0
          %737 = vmatpush.msra.mxu0 0.0
          %738 = vmatpush.msra.mxu0 0.0
          %739 = vmatpush.msra.mxu0 0.0
          %740 = vmatpush.msra.mxu0 %v373
          %741 = vmatmul.f32.gmra.mxu0 %v338
          %v742 = vpop.f32.mrf.mxu0
          %v743 = vadd.f32 0.0, %v742
          %744 = vdwg.mxu0
          %745 = vmatpush.msra.mxu0 0.0
          %746 = vmatpush.msra.mxu0 0.0
          %747 = vmatpush.msra.mxu0 0.0
          %748 = vmatpush.msra.mxu0 0.0
          %749 = vmatpush.msra.mxu0 0.0
          %750 = vmatpush.msra.mxu0 0.0
          %751 = vmatpush.msra.mxu0 0.0
          %752 = vmatpush.msra.mxu0 0.0
          %753 = vmatpush.msra.mxu0 0.0
          %754 = vmatpush.msra.mxu0 0.0
          %755 = vmatpush.msra.mxu0 0.0
          %756 = vmatpush.msra.mxu0 0.0
          %757 = vmatpush.msra.mxu0 0.0
          %758 = vmatpush.msra.mxu0 0.0
          %759 = vmatpush.msra.mxu0 0.0
          %760 = vmatpush.msra.mxu0 %v375
          %761 = vmatmul.f32.gmra.mxu0 %v338
          %v762 = vpop.f32.mrf.mxu0
          %v763 = vadd.f32 0.0, %v762
          %764 = vdwg.mxu0
          %765 = vmatpush.msra.mxu0 0.0
          %766 = vmatpush.msra.mxu0 0.0
          %767 = vmatpush.msra.mxu0 0.0
          %768 = vmatpush.msra.mxu0 0.0
          %769 = vmatpush.msra.mxu0 0.0
          %770 = vmatpush.msra.mxu0 0.0
          %771 = vmatpush.msra.mxu0 0.0
          %772 = vmatpush.msra.mxu0 0.0
          %773 = vmatpush.msra.mxu0 0.0
          %774 = vmatpush.msra.mxu0 0.0
          %775 = vmatpush.msra.mxu0 0.0
          %776 = vmatpush.msra.mxu0 0.0
          %777 = vmatpush.msra.mxu0 0.0
          %778 = vmatpush.msra.mxu0 0.0
          %779 = vmatpush.msra.mxu0 0.0
          %780 = vmatpush.msra.mxu0 %v377
          %781 = vmatmul.f32.gmra.mxu0 %v338
          %v782 = vpop.f32.mrf.mxu0
          %v783 = vadd.f32 0.0, %v782
          %784 = vdwg.mxu0
          %785 = vmatpush.msra.mxu0 0.0
          %786 = vmatpush.msra.mxu0 0.0
          %787 = vmatpush.msra.mxu0 0.0
          %788 = vmatpush.msra.mxu0 0.0
          %789 = vmatpush.msra.mxu0 0.0
          %790 = vmatpush.msra.mxu0 0.0
          %791 = vmatpush.msra.mxu0 0.0
          %792 = vmatpush.msra.mxu0 0.0
          %793 = vmatpush.msra.mxu0 0.0
          %794 = vmatpush.msra.mxu0 0.0
          %795 = vmatpush.msra.mxu0 0.0
          %796 = vmatpush.msra.mxu0 0.0
          %797 = vmatpush.msra.mxu0 0.0
          %798 = vmatpush.msra.mxu0 0.0
          %799 = vmatpush.msra.mxu0 0.0
          %800 = vmatpush.msra.mxu0 %v379
          %801 = vmatmul.f32.gmra.mxu0 %v338
          %v802 = vpop.f32.mrf.mxu0
          %v803 = vadd.f32 0.0, %v802
          %804 = vdwg.mxu0
          %805 = vmatpush.msra.mxu0 0.0
          %806 = vmatpush.msra.mxu0 0.0
          %807 = vmatpush.msra.mxu0 0.0
          %808 = vmatpush.msra.mxu0 0.0
          %809 = vmatpush.msra.mxu0 0.0
          %810 = vmatpush.msra.mxu0 0.0
          %811 = vmatpush.msra.mxu0 0.0
          %812 = vmatpush.msra.mxu0 0.0
          %813 = vmatpush.msra.mxu0 0.0
          %814 = vmatpush.msra.mxu0 0.0
          %815 = vmatpush.msra.mxu0 0.0
          %816 = vmatpush.msra.mxu0 0.0
          %817 = vmatpush.msra.mxu0 0.0
          %818 = vmatpush.msra.mxu0 0.0
          %819 = vmatpush.msra.mxu0 0.0
          %820 = vmatpush.msra.mxu0 %v381
          %821 = vmatmul.f32.gmra.mxu0 %v338
          %v822 = vpop.f32.mrf.mxu0
          %v823 = vadd.f32 0.0, %v822
          %824 = vdwg.mxu0
          %825 = vmatpush.msra.mxu0 0.0
          %826 = vmatpush.msra.mxu0 0.0
          %827 = vmatpush.msra.mxu0 0.0
          %828 = vmatpush.msra.mxu0 0.0
          %829 = vmatpush.msra.mxu0 0.0
          %830 = vmatpush.msra.mxu0 0.0
          %831 = vmatpush.msra.mxu0 0.0
          %832 = vmatpush.msra.mxu0 0.0
          %833 = vmatpush.msra.mxu0 0.0
          %834 = vmatpush.msra.mxu0 0.0
          %835 = vmatpush.msra.mxu0 0.0
          %836 = vmatpush.msra.mxu0 0.0
          %837 = vmatpush.msra.mxu0 0.0
          %838 = vmatpush.msra.mxu0 0.0
          %839 = vmatpush.msra.mxu0 0.0
          %840 = vmatpush.msra.mxu0 %v383
          %841 = vmatmul.f32.gmra.mxu0 %v338
          %v842 = vpop.f32.mrf.mxu0
          %v843 = vadd.f32 0.0, %v842
          %844 = vdwg.mxu0
          %845 = vmatpush.msra.mxu0 0.0
          %846 = vmatpush.msra.mxu0 0.0
          %847 = vmatpush.msra.mxu0 0.0
          %848 = vmatpush.msra.mxu0 0.0
          %849 = vmatpush.msra.mxu0 0.0
          %850 = vmatpush.msra.mxu0 0.0
          %851 = vmatpush.msra.mxu0 0.0
          %852 = vmatpush.msra.mxu0 0.0
          %853 = vmatpush.msra.mxu0 0.0
          %854 = vmatpush.msra.mxu0 0.0
          %855 = vmatpush.msra.mxu0 0.0
          %856 = vmatpush.msra.mxu0 0.0
          %857 = vmatpush.msra.mxu0 0.0
          %858 = vmatpush.msra.mxu0 0.0
          %859 = vmatpush.msra.mxu0 0.0
          %860 = vmatpush.msra.mxu0 %v385
          %861 = vmatmul.f32.gmra.mxu0 %v338
          %v862 = vpop.f32.mrf.mxu0
          %v863 = vadd.f32 0.0, %v862
          %864 = vdwg.mxu0
          %865 = vmatpush.msra.mxu0 0.0
          %866 = vmatpush.msra.mxu0 0.0
          %867 = vmatpush.msra.mxu0 0.0
          %868 = vmatpush.msra.mxu0 0.0
          %869 = vmatpush.msra.mxu0 0.0
          %870 = vmatpush.msra.mxu0 0.0
          %871 = vmatpush.msra.mxu0 0.0
          %872 = vmatpush.msra.mxu0 0.0
          %873 = vmatpush.msra.mxu0 0.0
          %874 = vmatpush.msra.mxu0 0.0
          %875 = vmatpush.msra.mxu0 0.0
          %876 = vmatpush.msra.mxu0 0.0
          %877 = vmatpush.msra.mxu0 0.0
          %878 = vmatpush.msra.mxu0 0.0
          %879 = vmatpush.msra.mxu0 0.0
          %880 = vmatpush.msra.mxu0 %v387
          %881 = vmatmul.f32.gmra.mxu0 %v338
          %v882 = vpop.f32.mrf.mxu0
          %v883 = vadd.f32 0.0, %v882
          %884 = vdwg.mxu0
          %885 = vmatpush.msra.mxu0 0.0
          %886 = vmatpush.msra.mxu0 0.0
          %887 = vmatpush.msra.mxu0 0.0
          %888 = vmatpush.msra.mxu0 0.0
          %889 = vmatpush.msra.mxu0 0.0
          %890 = vmatpush.msra.mxu0 0.0
          %891 = vmatpush.msra.mxu0 0.0
          %892 = vmatpush.msra.mxu0 0.0
          %893 = vmatpush.msra.mxu0 0.0
          %894 = vmatpush.msra.mxu0 0.0
          %895 = vmatpush.msra.mxu0 0.0
          %896 = vmatpush.msra.mxu0 0.0
          %897 = vmatpush.msra.mxu0 0.0
          %898 = vmatpush.msra.mxu0 0.0
          %899 = vmatpush.msra.mxu0 0.0
          %900 = vmatpush.msra.mxu0 %v389
          %901 = vmatmul.f32.gmra.mxu0 %v338
          %v902 = vpop.f32.mrf.mxu0
          %v903 = vadd.f32 0.0, %v902
          %904 = vdwg.mxu0
          %905 = vmatpush.msra.mxu0 0.0
          %906 = vmatpush.msra.mxu0 0.0
          %907 = vmatpush.msra.mxu0 0.0
          %908 = vmatpush.msra.mxu0 0.0
          %909 = vmatpush.msra.mxu0 0.0
          %910 = vmatpush.msra.mxu0 0.0
          %911 = vmatpush.msra.mxu0 0.0
          %912 = vmatpush.msra.mxu0 0.0
          %913 = vmatpush.msra.mxu0 0.0
          %914 = vmatpush.msra.mxu0 0.0
          %915 = vmatpush.msra.mxu0 0.0
          %916 = vmatpush.msra.mxu0 0.0
          %917 = vmatpush.msra.mxu0 0.0
          %918 = vmatpush.msra.mxu0 0.0
          %919 = vmatpush.msra.mxu0 0.0
          %920 = vmatpush.msra.mxu0 %v391
          %921 = vmatmul.f32.gmra.mxu0 %v338
          %v922 = vpop.f32.mrf.mxu0
          %v923 = vadd.f32 0.0, %v922
          %924 = vdwg.mxu0
          %925 = vmatpush.msra.mxu0 0.0
          %926 = vmatpush.msra.mxu0 0.0
          %927 = vmatpush.msra.mxu0 0.0
          %928 = vmatpush.msra.mxu0 0.0
          %929 = vmatpush.msra.mxu0 0.0
          %930 = vmatpush.msra.mxu0 0.0
          %931 = vmatpush.msra.mxu0 0.0
          %932 = vmatpush.msra.mxu0 0.0
          %933 = vmatpush.msra.mxu0 0.0
          %934 = vmatpush.msra.mxu0 0.0
          %935 = vmatpush.msra.mxu0 0.0
          %936 = vmatpush.msra.mxu0 0.0
          %937 = vmatpush.msra.mxu0 0.0
          %938 = vmatpush.msra.mxu0 0.0
          %939 = vmatpush.msra.mxu0 0.0
          %940 = vmatpush.msra.mxu0 %v393
          %941 = vmatmul.f32.gmra.mxu0 %v338
          %v942 = vpop.f32.mrf.mxu0
          %v943 = vadd.f32 0.0, %v942
          %944 = vdwg.mxu0
          %945 = vmatpush.msra.mxu0 0.0
          %946 = vmatpush.msra.mxu0 0.0
          %947 = vmatpush.msra.mxu0 0.0
          %948 = vmatpush.msra.mxu0 0.0
          %949 = vmatpush.msra.mxu0 0.0
          %950 = vmatpush.msra.mxu0 0.0
          %951 = vmatpush.msra.mxu0 0.0
          %952 = vmatpush.msra.mxu0 0.0
          %953 = vmatpush.msra.mxu0 0.0
          %954 = vmatpush.msra.mxu0 0.0
          %955 = vmatpush.msra.mxu0 0.0
          %956 = vmatpush.msra.mxu0 0.0
          %957 = vmatpush.msra.mxu0 0.0
          %958 = vmatpush.msra.mxu0 0.0
          %959 = vmatpush.msra.mxu0 0.0
          %960 = vmatpush.msra.mxu0 %v395
          %961 = vmatmul.f32.gmra.mxu0 %v338
          %v962 = vpop.f32.mrf.mxu0
          %v963 = vadd.f32 0.0, %v962
          %964 = vdwg.mxu0
          %965 = vmatpush.msra.mxu0 0.0
          %966 = vmatpush.msra.mxu0 0.0
          %967 = vmatpush.msra.mxu0 0.0
          %968 = vmatpush.msra.mxu0 0.0
          %969 = vmatpush.msra.mxu0 0.0
          %970 = vmatpush.msra.mxu0 0.0
          %971 = vmatpush.msra.mxu0 0.0
          %972 = vmatpush.msra.mxu0 0.0
          %973 = vmatpush.msra.mxu0 0.0
          %974 = vmatpush.msra.mxu0 0.0
          %975 = vmatpush.msra.mxu0 0.0
          %976 = vmatpush.msra.mxu0 0.0
          %977 = vmatpush.msra.mxu0 0.0
          %978 = vmatpush.msra.mxu0 0.0
          %979 = vmatpush.msra.mxu0 0.0
          %980 = vmatpush.msra.mxu0 %v397
          %981 = vmatmul.f32.gmra.mxu0 %v338
          %v982 = vpop.f32.mrf.mxu0
          %v983 = vadd.f32 0.0, %v982
          %984 = vdwg.mxu0
          %985 = vmatpush.msra.mxu0 0.0
          %986 = vmatpush.msra.mxu0 0.0
          %987 = vmatpush.msra.mxu0 0.0
          %988 = vmatpush.msra.mxu0 0.0
          %989 = vmatpush.msra.mxu0 0.0
          %990 = vmatpush.msra.mxu0 0.0
          %991 = vmatpush.msra.mxu0 0.0
          %992 = vmatpush.msra.mxu0 0.0
          %993 = vmatpush.msra.mxu0 0.0
          %994 = vmatpush.msra.mxu0 0.0
          %995 = vmatpush.msra.mxu0 0.0
          %996 = vmatpush.msra.mxu0 0.0
          %997 = vmatpush.msra.mxu0 0.0
          %998 = vmatpush.msra.mxu0 0.0
          %999 = vmatpush.msra.mxu0 0.0
          %1000 = vmatpush.msra.mxu0 %v399
          %1001 = vmatmul.f32.gmra.mxu0 %v338
          %v1002 = vpop.f32.mrf.mxu0
          %v1003 = vadd.f32 0.0, %v1002
          %1004 = vdwg.mxu0
          %1005 = vmatpush.msra.mxu0 0.0
          %1006 = vmatpush.msra.mxu0 0.0
          %1007 = vmatpush.msra.mxu0 0.0
          %1008 = vmatpush.msra.mxu0 0.0
          %1009 = vmatpush.msra.mxu0 0.0
          %1010 = vmatpush.msra.mxu0 0.0
          %1011 = vmatpush.msra.mxu0 0.0
          %1012 = vmatpush.msra.mxu0 0.0
          %1013 = vmatpush.msra.mxu0 0.0
          %1014 = vmatpush.msra.mxu0 0.0
          %1015 = vmatpush.msra.mxu0 0.0
          %1016 = vmatpush.msra.mxu0 0.0
          %1017 = vmatpush.msra.mxu0 0.0
          %1018 = vmatpush.msra.mxu0 0.0
          %1019 = vmatpush.msra.mxu0 0.0
          %1020 = vmatpush.msra.mxu0 %v401
          %1021 = vmatmul.f32.gmra.mxu0 %v338
          %v1022 = vpop.f32.mrf.mxu0
          %v1023 = vadd.f32 0.0, %v1022
          %1024 = vdwg.mxu0
          %1025 = vmatpush.msra.mxu0 0.0
          %1026 = vmatpush.msra.mxu0 0.0
          %1027 = vmatpush.msra.mxu0 0.0
          %1028 = vmatpush.msra.mxu0 0.0
          %1029 = vmatpush.msra.mxu0 0.0
          %1030 = vmatpush.msra.mxu0 0.0
          %1031 = vmatpush.msra.mxu0 0.0
          %1032 = vmatpush.msra.mxu0 0.0
          %1033 = vmatpush.msra.mxu0 0.0
          %1034 = vmatpush.msra.mxu0 0.0
          %1035 = vmatpush.msra.mxu0 0.0
          %1036 = vmatpush.msra.mxu0 0.0
          %1037 = vmatpush.msra.mxu0 0.0
          %1038 = vmatpush.msra.mxu0 0.0
          %1039 = vmatpush.msra.mxu0 0.0
          %1040 = vmatpush.msra.mxu0 %v403
          %1041 = vmatmul.f32.gmra.mxu0 %v338
          %v1042 = vpop.f32.mrf.mxu0
          %v1043 = vadd.f32 0.0, %v1042
          %1044 = vdwg.mxu0
          %v1045 = vld [vmem:[#allocation2] sm:$0xff]
          %v1046 = vadd.f32 %v423, %v443
          %v1047 = vadd.f32 %v1046, %v463
          %v1048 = vadd.f32 %v1047, %v483
          %v1049 = vadd.f32 %v1048, %v503
          %v1050 = vadd.f32 %v1049, %v523
          %v1051 = vadd.f32 %v1050, %v543
          %v1052 = vadd.f32 %v1051, %v563
          %v1053 = vadd.f32 %v1052, %v583
          %v1054 = vadd.f32 %v1053, %v603
          %v1055 = vadd.f32 %v1054, %v623
          %v1056 = vadd.f32 %v1055, %v643
          %v1057 = vadd.f32 %v1056, %v663
          %v1058 = vadd.f32 %v1057, %v683
          %v1059 = vadd.f32 %v1058, %v703
          %v1060 = vadd.f32 %v1059, %v723
          %v1061 = vadd.f32 %v1060, %v743
          %v1062 = vadd.f32 %v1061, %v763
          %v1063 = vadd.f32 %v1062, %v783
          %v1064 = vadd.f32 %v1063, %v803
          %v1065 = vadd.f32 %v1064, %v823
          %v1066 = vadd.f32 %v1065, %v843
          %v1067 = vadd.f32 %v1066, %v863
          %v1068 = vadd.f32 %v1067, %v883
          %v1069 = vadd.f32 %v1068, %v903
          %v1070 = vadd.f32 %v1069, %v923
          %v1071 = vadd.f32 %v1070, %v943
          %v1072 = vadd.f32 %v1071, %v963
          %v1073 = vadd.f32 %v1072, %v983
          %v1074 = vadd.f32 %v1073, %v1003
          %v1075 = vadd.f32 %v1074, %v1023
          %v1076 = vadd.f32 %v1075, %v1043
          %1077 = vadd.xlane.f32.xlu0 %v1076
          %v1078 = vpop.xlane.xlu0 %1077
          %v1079 = vadd.f32 %v1045, %v1078
          %vm1080 = vcmask 7168
          %1081 = vst.msk [vmem:[#allocation2] sm:$0xff] %vm1080, %v1079
          %v1082 = vld [vmem:[#allocation3] sm:$0xff]
          %v1083 = vmul.f32 %v423, %v423
          %v1084 = vmul.f32 %v443, %v443
          %v1085 = vmul.f32 %v463, %v463
          %v1086 = vmul.f32 %v483, %v483
          %v1087 = vmul.f32 %v503, %v503
          %v1088 = vmul.f32 %v523, %v523
          %v1089 = vmul.f32 %v543, %v543
          %v1090 = vmul.f32 %v563, %v563
          %v1091 = vmul.f32 %v583, %v583
          %v1092 = vmul.f32 %v603, %v603
          %v1093 = vmul.f32 %v623, %v623
          %v1094 = vmul.f32 %v643, %v643
          %v1095 = vmul.f32 %v663, %v663
          %v1096 = vmul.f32 %v683, %v683
          %v1097 = vmul.f32 %v703, %v703
          %v1098 = vmul.f32 %v723, %v723
          %v1099 = vmul.f32 %v743, %v743
          %v1100 = vmul.f32 %v763, %v763
          %v1101 = vmul.f32 %v783, %v783
          %v1102 = vmul.f32 %v803, %v803
          %v1103 = vmul.f32 %v823, %v823
          %v1104 = vmul.f32 %v843, %v843
          %v1105 = vmul.f32 %v863, %v863
          %v1106 = vmul.f32 %v883, %v883
          %v1107 = vmul.f32 %v903, %v903
          %v1108 = vmul.f32 %v923, %v923
          %v1109 = vmul.f32 %v943, %v943
          %v1110 = vmul.f32 %v963, %v963
          %v1111 = vmul.f32 %v983, %v983
          %v1112 = vmul.f32 %v1003, %v1003
          %v1113 = vmul.f32 %v1023, %v1023
          %v1114 = vmul.f32 %v1043, %v1043
          %v1115 = vadd.f32 %v1083, %v1084
          %v1116 = vadd.f32 %v1115, %v1085
          %v1117 = vadd.f32 %v1116, %v1086
          %v1118 = vadd.f32 %v1117, %v1087
          %v1119 = vadd.f32 %v1118, %v1088
          %v1120 = vadd.f32 %v1119, %v1089
          %v1121 = vadd.f32 %v1120, %v1090
          %v1122 = vadd.f32 %v1121, %v1091
          %v1123 = vadd.f32 %v1122, %v1092
          %v1124 = vadd.f32 %v1123, %v1093
          %v1125 = vadd.f32 %v1124, %v1094
          %v1126 = vadd.f32 %v1125, %v1095
          %v1127 = vadd.f32 %v1126, %v1096
          %v1128 = vadd.f32 %v1127, %v1097
          %v1129 = vadd.f32 %v1128, %v1098
          %v1130 = vadd.f32 %v1129, %v1099
          %v1131 = vadd.f32 %v1130, %v1100
          %v1132 = vadd.f32 %v1131, %v1101
          %v1133 = vadd.f32 %v1132, %v1102
          %v1134 = vadd.f32 %v1133, %v1103
          %v1135 = vadd.f32 %v1134, %v1104
          %v1136 = vadd.f32 %v1135, %v1105
          %v1137 = vadd.f32 %v1136, %v1106
          %v1138 = vadd.f32 %v1137, %v1107
          %v1139 = vadd.f32 %v1138, %v1108
          %v1140 = vadd.f32 %v1139, %v1109
          %v1141 = vadd.f32 %v1140, %v1110
          %v1142 = vadd.f32 %v1141, %v1111
          %v1143 = vadd.f32 %v1142, %v1112
          %v1144 = vadd.f32 %v1143, %v1113
          %v1145 = vadd.f32 %v1144, %v1114
          %1146 = vadd.xlane.f32.xlu0 %v1145
          %v1147 = vpop.xlane.xlu0 %1146
          %v1148 = vadd.f32 %v1082, %v1147
          %1149 = vst.msk [vmem:[#allocation3] sm:$0xff] %vm1080, %v1148
          %s1150 = scalar_lea.vmem [#allocation6], 128
          %v1151 = vld [vmem:[%s1150] sm:$0xff]
          %v1152 = vld [vmem:[%s1150 + $0x8] sm:$0xff]
          %v1153 = vld [vmem:[%s1150 + $0x10] sm:$0xff]
          %v1154 = vld [vmem:[%s1150 + $0x18] sm:$0xff]
          %v1155 = vld [vmem:[%s1150 + $0x20] sm:$0xff]
          %v1156 = vld [vmem:[%s1150 + $0x28] sm:$0xff]
          %v1157 = vld [vmem:[%s1150 + $0x30] sm:$0xff]
          %v1158 = vld [vmem:[%s1150 + $0x38] sm:$0xff]
          %v1159 = vld [vmem:[%s1150 + $0x40] sm:$0xff]
          %v1160 = vld [vmem:[%s1150 + $0x48] sm:$0xff]
          %v1161 = vld [vmem:[%s1150 + $0x50] sm:$0xff]
          %v1162 = vld [vmem:[%s1150 + $0x58] sm:$0xff]
          %v1163 = vld [vmem:[%s1150 + $0x60] sm:$0xff]
          %v1164 = vld [vmem:[%s1150 + $0x68] sm:$0xff]
          %v1165 = vld [vmem:[%s1150 + $0x70] sm:$0xff]
          %v1166 = vld [vmem:[%s1150 + $0x78] sm:$0xff]
          %1183 = vst [vmem:[#allocation1] ss:$2 sm:$0xff] %v1151
          %s1184 = scalar_lea.vmem [#allocation1], 16
          %1185 = vst [vmem:[%s1184] ss:$2 sm:$0xff] %v1152
          %s1186 = scalar_lea.vmem [#allocation1], 32
          %1187 = vst [vmem:[%s1186] ss:$2 sm:$0xff] %v1153
          %s1188 = scalar_lea.vmem [#allocation1], 48
          %1189 = vst [vmem:[%s1188] ss:$2 sm:$0xff] %v1154
          %v1190 = vld.sshfl [vmem:[#allocation1] sm:$0xff pattern:$0x75316420]
          %v1191 = vld.sshfl [vmem:[#allocation1 + $0x8] sm:$0xff pattern:$0x75316420]
          %v1192 = vld.sshfl [vmem:[#allocation1 + $0x10] sm:$0xff pattern:$0x75316420]
          %v1193 = vld.sshfl [vmem:[#allocation1 + $0x18] sm:$0xff pattern:$0x75316420]
          %v1194 = vld.sshfl [vmem:[#allocation1 + $0x20] sm:$0xff pattern:$0x75316420]
          %v1195 = vld.sshfl [vmem:[#allocation1 + $0x28] sm:$0xff pattern:$0x75316420]
          %v1196 = vld.sshfl [vmem:[#allocation1 + $0x30] sm:$0xff pattern:$0x75316420]
          %v1197 = vld.sshfl [vmem:[#allocation1 + $0x38] sm:$0xff pattern:$0x75316420]
          %1198 = vst [vmem:[#allocation1] ss:$2 sm:$0xff] %v1155
          %1199 = vst [vmem:[%s1184] ss:$2 sm:$0xff] %v1156
          %1200 = vst [vmem:[%s1186] ss:$2 sm:$0xff] %v1157
          %1201 = vst [vmem:[%s1188] ss:$2 sm:$0xff] %v1158
          %v1202 = vld.sshfl [vmem:[#allocation1] sm:$0xff pattern:$0x75316420]
          %v1203 = vld.sshfl [vmem:[#allocation1 + $0x8] sm:$0xff pattern:$0x75316420]
          %v1204 = vld.sshfl [vmem:[#allocation1 + $0x10] sm:$0xff pattern:$0x75316420]
          %v1205 = vld.sshfl [vmem:[#allocation1 + $0x18] sm:$0xff pattern:$0x75316420]
          %v1206 = vld.sshfl [vmem:[#allocation1 + $0x20] sm:$0xff pattern:$0x75316420]
          %v1207 = vld.sshfl [vmem:[#allocation1 + $0x28] sm:$0xff pattern:$0x75316420]
          %v1208 = vld.sshfl [vmem:[#allocation1 + $0x30] sm:$0xff pattern:$0x75316420]
          %v1209 = vld.sshfl [vmem:[#allocation1 + $0x38] sm:$0xff pattern:$0x75316420]
          %1210 = vst [vmem:[#allocation1] ss:$2 sm:$0xff] %v1159
          %1211 = vst [vmem:[%s1184] ss:$2 sm:$0xff] %v1160
          %1212 = vst [vmem:[%s1186] ss:$2 sm:$0xff] %v1161
          %1213 = vst [vmem:[%s1188] ss:$2 sm:$0xff] %v1162
          %v1214 = vld.sshfl [vmem:[#allocation1] sm:$0xff pattern:$0x75316420]
          %v1215 = vld.sshfl [vmem:[#allocation1 + $0x8] sm:$0xff pattern:$0x75316420]
          %v1216 = vld.sshfl [vmem:[#allocation1 + $0x10] sm:$0xff pattern:$0x75316420]
          %v1217 = vld.sshfl [vmem:[#allocation1 + $0x18] sm:$0xff pattern:$0x75316420]
          %v1218 = vld.sshfl [vmem:[#allocation1 + $0x20] sm:$0xff pattern:$0x75316420]
          %v1219 = vld.sshfl [vmem:[#allocation1 + $0x28] sm:$0xff pattern:$0x75316420]
          %v1220 = vld.sshfl [vmem:[#allocation1 + $0x30] sm:$0xff pattern:$0x75316420]
          %v1221 = vld.sshfl [vmem:[#allocation1 + $0x38] sm:$0xff pattern:$0x75316420]
          %1222 = vst [vmem:[#allocation1] ss:$2 sm:$0xff] %v1163
          %1223 = vst [vmem:[%s1184] ss:$2 sm:$0xff] %v1164
          %1224 = vst [vmem:[%s1186] ss:$2 sm:$0xff] %v1165
          %1225 = vst [vmem:[%s1188] ss:$2 sm:$0xff] %v1166
          %v1226 = vld.sshfl [vmem:[#allocation1] sm:$0xff pattern:$0x75316420]
          %v1227 = vld.sshfl [vmem:[#allocation1 + $0x8] sm:$0xff pattern:$0x75316420]
          %v1228 = vld.sshfl [vmem:[#allocation1 + $0x10] sm:$0xff pattern:$0x75316420]
          %v1229 = vld.sshfl [vmem:[#allocation1 + $0x18] sm:$0xff pattern:$0x75316420]
          %v1230 = vld.sshfl [vmem:[#allocation1 + $0x20] sm:$0xff pattern:$0x75316420]
          %v1231 = vld.sshfl [vmem:[#allocation1 + $0x28] sm:$0xff pattern:$0x75316420]
          %v1232 = vld.sshfl [vmem:[#allocation1 + $0x30] sm:$0xff pattern:$0x75316420]
          %v1233 = vld.sshfl [vmem:[#allocation1 + $0x38] sm:$0xff pattern:$0x75316420]
          %v1234 = vsel %vm340, %v1190, 0
          %v1236 = vsel %vm340, %v1191, 0
          %v1238 = vsel %vm340, %v1192, 0
          %v1240 = vsel %vm340, %v1193, 0
          %v1242 = vsel %vm340, %v1194, 0
          %v1244 = vsel %vm340, %v1195, 0
          %v1246 = vsel %vm340, %v1196, 0
          %v1248 = vsel %vm340, %v1197, 0
          %v1250 = vsel %vm340, %v1202, 0
          %v1252 = vsel %vm340, %v1203, 0
          %v1254 = vsel %vm340, %v1204, 0
          %v1256 = vsel %vm340, %v1205, 0
          %v1258 = vsel %vm340, %v1206, 0
          %v1260 = vsel %vm340, %v1207, 0
          %v1262 = vsel %vm340, %v1208, 0
          %v1264 = vsel %vm340, %v1209, 0
          %v1266 = vsel %vm340, %v1214, 0
          %v1268 = vsel %vm340, %v1215, 0
          %v1270 = vsel %vm340, %v1216, 0
          %v1272 = vsel %vm340, %v1217, 0
          %v1274 = vsel %vm340, %v1218, 0
          %v1276 = vsel %vm340, %v1219, 0
          %v1278 = vsel %vm340, %v1220, 0
          %v1280 = vsel %vm340, %v1221, 0
          %v1282 = vsel %vm340, %v1226, 0
          %v1284 = vsel %vm340, %v1227, 0
          %v1286 = vsel %vm340, %v1228, 0
          %v1288 = vsel %vm340, %v1229, 0
          %v1290 = vsel %vm340, %v1230, 0
          %v1292 = vsel %vm340, %v1231, 0
          %v1294 = vsel %vm340, %v1232, 0
          %v1296 = vsel %vm340, %v1233, 0
          %1298 = vmatpush.msra.mxu0 0.0
          %1299 = vmatpush.msra.mxu0 0.0
          %1300 = vmatpush.msra.mxu0 0.0
          %1301 = vmatpush.msra.mxu0 0.0
          %1302 = vmatpush.msra.mxu0 0.0
          %1303 = vmatpush.msra.mxu0 0.0
          %1304 = vmatpush.msra.mxu0 0.0
          %1305 = vmatpush.msra.mxu0 0.0
          %1306 = vmatpush.msra.mxu0 0.0
          %1307 = vmatpush.msra.mxu0 0.0
          %1308 = vmatpush.msra.mxu0 0.0
          %1309 = vmatpush.msra.mxu0 0.0
          %1310 = vmatpush.msra.mxu0 0.0
          %1311 = vmatpush.msra.mxu0 0.0
          %1312 = vmatpush.msra.mxu0 0.0
          %1313 = vmatpush.msra.mxu0 %v1234
          %1314 = vmatmul.f32.gmra.mxu0 %v338
          %v1315 = vpop.f32.mrf.mxu0
          %v1316 = vadd.f32 0.0, %v1315
          %1317 = vdwg.mxu0
          %1318 = vmatpush.msra.mxu0 0.0
          %1319 = vmatpush.msra.mxu0 0.0
          %1320 = vmatpush.msra.mxu0 0.0
          %1321 = vmatpush.msra.mxu0 0.0
          %1322 = vmatpush.msra.mxu0 0.0
          %1323 = vmatpush.msra.mxu0 0.0
          %1324 = vmatpush.msra.mxu0 0.0
          %1325 = vmatpush.msra.mxu0 0.0
          %1326 = vmatpush.msra.mxu0 0.0
          %1327 = vmatpush.msra.mxu0 0.0
          %1328 = vmatpush.msra.mxu0 0.0
          %1329 = vmatpush.msra.mxu0 0.0
          %1330 = vmatpush.msra.mxu0 0.0
          %1331 = vmatpush.msra.mxu0 0.0
          %1332 = vmatpush.msra.mxu0 0.0
          %1333 = vmatpush.msra.mxu0 %v1236
          %1334 = vmatmul.f32.gmra.mxu0 %v338
          %v1335 = vpop.f32.mrf.mxu0
          %v1336 = vadd.f32 0.0, %v1335
          %1337 = vdwg.mxu0
          %1338 = vmatpush.msra.mxu0 0.0
          %1339 = vmatpush.msra.mxu0 0.0
          %1340 = vmatpush.msra.mxu0 0.0
          %1341 = vmatpush.msra.mxu0 0.0
          %1342 = vmatpush.msra.mxu0 0.0
          %1343 = vmatpush.msra.mxu0 0.0
          %1344 = vmatpush.msra.mxu0 0.0
          %1345 = vmatpush.msra.mxu0 0.0
          %1346 = vmatpush.msra.mxu0 0.0
          %1347 = vmatpush.msra.mxu0 0.0
          %1348 = vmatpush.msra.mxu0 0.0
          %1349 = vmatpush.msra.mxu0 0.0
          %1350 = vmatpush.msra.mxu0 0.0
          %1351 = vmatpush.msra.mxu0 0.0
          %1352 = vmatpush.msra.mxu0 0.0
          %1353 = vmatpush.msra.mxu0 %v1238
          %1354 = vmatmul.f32.gmra.mxu0 %v338
          %v1355 = vpop.f32.mrf.mxu0
          %v1356 = vadd.f32 0.0, %v1355
          %1357 = vdwg.mxu0
          %1358 = vmatpush.msra.mxu0 0.0
          %1359 = vmatpush.msra.mxu0 0.0
          %1360 = vmatpush.msra.mxu0 0.0
          %1361 = vmatpush.msra.mxu0 0.0
          %1362 = vmatpush.msra.mxu0 0.0
          %1363 = vmatpush.msra.mxu0 0.0
          %1364 = vmatpush.msra.mxu0 0.0
          %1365 = vmatpush.msra.mxu0 0.0
          %1366 = vmatpush.msra.mxu0 0.0
          %1367 = vmatpush.msra.mxu0 0.0
          %1368 = vmatpush.msra.mxu0 0.0
          %1369 = vmatpush.msra.mxu0 0.0
          %1370 = vmatpush.msra.mxu0 0.0
          %1371 = vmatpush.msra.mxu0 0.0
          %1372 = vmatpush.msra.mxu0 0.0
          %1373 = vmatpush.msra.mxu0 %v1240
          %1374 = vmatmul.f32.gmra.mxu0 %v338
          %v1375 = vpop.f32.mrf.mxu0
          %v1376 = vadd.f32 0.0, %v1375
          %1377 = vdwg.mxu0
          %1378 = vmatpush.msra.mxu0 0.0
          %1379 = vmatpush.msra.mxu0 0.0
          %1380 = vmatpush.msra.mxu0 0.0
          %1381 = vmatpush.msra.mxu0 0.0
          %1382 = vmatpush.msra.mxu0 0.0
          %1383 = vmatpush.msra.mxu0 0.0
          %1384 = vmatpush.msra.mxu0 0.0
          %1385 = vmatpush.msra.mxu0 0.0
          %1386 = vmatpush.msra.mxu0 0.0
          %1387 = vmatpush.msra.mxu0 0.0
          %1388 = vmatpush.msra.mxu0 0.0
          %1389 = vmatpush.msra.mxu0 0.0
          %1390 = vmatpush.msra.mxu0 0.0
          %1391 = vmatpush.msra.mxu0 0.0
          %1392 = vmatpush.msra.mxu0 0.0
          %1393 = vmatpush.msra.mxu0 %v1242
          %1394 = vmatmul.f32.gmra.mxu0 %v338
          %v1395 = vpop.f32.mrf.mxu0
          %v1396 = vadd.f32 0.0, %v1395
          %1397 = vdwg.mxu0
          %1398 = vmatpush.msra.mxu0 0.0
          %1399 = vmatpush.msra.mxu0 0.0
          %1400 = vmatpush.msra.mxu0 0.0
          %1401 = vmatpush.msra.mxu0 0.0
          %1402 = vmatpush.msra.mxu0 0.0
          %1403 = vmatpush.msra.mxu0 0.0
          %1404 = vmatpush.msra.mxu0 0.0
          %1405 = vmatpush.msra.mxu0 0.0
          %1406 = vmatpush.msra.mxu0 0.0
          %1407 = vmatpush.msra.mxu0 0.0
          %1408 = vmatpush.msra.mxu0 0.0
          %1409 = vmatpush.msra.mxu0 0.0
          %1410 = vmatpush.msra.mxu0 0.0
          %1411 = vmatpush.msra.mxu0 0.0
          %1412 = vmatpush.msra.mxu0 0.0
          %1413 = vmatpush.msra.mxu0 %v1244
          %1414 = vmatmul.f32.gmra.mxu0 %v338
          %v1415 = vpop.f32.mrf.mxu0
          %v1416 = vadd.f32 0.0, %v1415
          %1417 = vdwg.mxu0
          %1418 = vmatpush.msra.mxu0 0.0
          %1419 = vmatpush.msra.mxu0 0.0
          %1420 = vmatpush.msra.mxu0 0.0
          %1421 = vmatpush.msra.mxu0 0.0
          %1422 = vmatpush.msra.mxu0 0.0
          %1423 = vmatpush.msra.mxu0 0.0
          %1424 = vmatpush.msra.mxu0 0.0
          %1425 = vmatpush.msra.mxu0 0.0
          %1426 = vmatpush.msra.mxu0 0.0
          %1427 = vmatpush.msra.mxu0 0.0
          %1428 = vmatpush.msra.mxu0 0.0
          %1429 = vmatpush.msra.mxu0 0.0
          %1430 = vmatpush.msra.mxu0 0.0
          %1431 = vmatpush.msra.mxu0 0.0
          %1432 = vmatpush.msra.mxu0 0.0
          %1433 = vmatpush.msra.mxu0 %v1246
          %1434 = vmatmul.f32.gmra.mxu0 %v338
          %v1435 = vpop.f32.mrf.mxu0
          %v1436 = vadd.f32 0.0, %v1435
          %1437 = vdwg.mxu0
          %1438 = vmatpush.msra.mxu0 0.0
          %1439 = vmatpush.msra.mxu0 0.0
          %1440 = vmatpush.msra.mxu0 0.0
          %1441 = vmatpush.msra.mxu0 0.0
          %1442 = vmatpush.msra.mxu0 0.0
          %1443 = vmatpush.msra.mxu0 0.0
          %1444 = vmatpush.msra.mxu0 0.0
          %1445 = vmatpush.msra.mxu0 0.0
          %1446 = vmatpush.msra.mxu0 0.0
          %1447 = vmatpush.msra.mxu0 0.0
          %1448 = vmatpush.msra.mxu0 0.0
          %1449 = vmatpush.msra.mxu0 0.0
          %1450 = vmatpush.msra.mxu0 0.0
          %1451 = vmatpush.msra.mxu0 0.0
          %1452 = vmatpush.msra.mxu0 0.0
          %1453 = vmatpush.msra.mxu0 %v1248
          %1454 = vmatmul.f32.gmra.mxu0 %v338
          %v1455 = vpop.f32.mrf.mxu0
          %v1456 = vadd.f32 0.0, %v1455
          %1457 = vdwg.mxu0
          %1458 = vmatpush.msra.mxu0 0.0
          %1459 = vmatpush.msra.mxu0 0.0
          %1460 = vmatpush.msra.mxu0 0.0
          %1461 = vmatpush.msra.mxu0 0.0
          %1462 = vmatpush.msra.mxu0 0.0
          %1463 = vmatpush.msra.mxu0 0.0
          %1464 = vmatpush.msra.mxu0 0.0
          %1465 = vmatpush.msra.mxu0 0.0
          %1466 = vmatpush.msra.mxu0 0.0
          %1467 = vmatpush.msra.mxu0 0.0
          %1468 = vmatpush.msra.mxu0 0.0
          %1469 = vmatpush.msra.mxu0 0.0
          %1470 = vmatpush.msra.mxu0 0.0
          %1471 = vmatpush.msra.mxu0 0.0
          %1472 = vmatpush.msra.mxu0 0.0
          %1473 = vmatpush.msra.mxu0 %v1250
          %1474 = vmatmul.f32.gmra.mxu0 %v338
          %v1475 = vpop.f32.mrf.mxu0
          %v1476 = vadd.f32 0.0, %v1475
          %1477 = vdwg.mxu0
          %1478 = vmatpush.msra.mxu0 0.0
          %1479 = vmatpush.msra.mxu0 0.0
          %1480 = vmatpush.msra.mxu0 0.0
          %1481 = vmatpush.msra.mxu0 0.0
          %1482 = vmatpush.msra.mxu0 0.0
          %1483 = vmatpush.msra.mxu0 0.0
          %1484 = vmatpush.msra.mxu0 0.0
          %1485 = vmatpush.msra.mxu0 0.0
          %1486 = vmatpush.msra.mxu0 0.0
          %1487 = vmatpush.msra.mxu0 0.0
          %1488 = vmatpush.msra.mxu0 0.0
          %1489 = vmatpush.msra.mxu0 0.0
          %1490 = vmatpush.msra.mxu0 0.0
          %1491 = vmatpush.msra.mxu0 0.0
          %1492 = vmatpush.msra.mxu0 0.0
          %1493 = vmatpush.msra.mxu0 %v1252
          %1494 = vmatmul.f32.gmra.mxu0 %v338
          %v1495 = vpop.f32.mrf.mxu0
          %v1496 = vadd.f32 0.0, %v1495
          %1497 = vdwg.mxu0
          %1498 = vmatpush.msra.mxu0 0.0
          %1499 = vmatpush.msra.mxu0 0.0
          %1500 = vmatpush.msra.mxu0 0.0
          %1501 = vmatpush.msra.mxu0 0.0
          %1502 = vmatpush.msra.mxu0 0.0
          %1503 = vmatpush.msra.mxu0 0.0
          %1504 = vmatpush.msra.mxu0 0.0
          %1505 = vmatpush.msra.mxu0 0.0
          %1506 = vmatpush.msra.mxu0 0.0
          %1507 = vmatpush.msra.mxu0 0.0
          %1508 = vmatpush.msra.mxu0 0.0
          %1509 = vmatpush.msra.mxu0 0.0
          %1510 = vmatpush.msra.mxu0 0.0
          %1511 = vmatpush.msra.mxu0 0.0
          %1512 = vmatpush.msra.mxu0 0.0
          %1513 = vmatpush.msra.mxu0 %v1254
          %1514 = vmatmul.f32.gmra.mxu0 %v338
          %v1515 = vpop.f32.mrf.mxu0
          %v1516 = vadd.f32 0.0, %v1515
          %1517 = vdwg.mxu0
          %1518 = vmatpush.msra.mxu0 0.0
          %1519 = vmatpush.msra.mxu0 0.0
          %1520 = vmatpush.msra.mxu0 0.0
          %1521 = vmatpush.msra.mxu0 0.0
          %1522 = vmatpush.msra.mxu0 0.0
          %1523 = vmatpush.msra.mxu0 0.0
          %1524 = vmatpush.msra.mxu0 0.0
          %1525 = vmatpush.msra.mxu0 0.0
          %1526 = vmatpush.msra.mxu0 0.0
          %1527 = vmatpush.msra.mxu0 0.0
          %1528 = vmatpush.msra.mxu0 0.0
          %1529 = vmatpush.msra.mxu0 0.0
          %1530 = vmatpush.msra.mxu0 0.0
          %1531 = vmatpush.msra.mxu0 0.0
          %1532 = vmatpush.msra.mxu0 0.0
          %1533 = vmatpush.msra.mxu0 %v1256
          %1534 = vmatmul.f32.gmra.mxu0 %v338
          %v1535 = vpop.f32.mrf.mxu0
          %v1536 = vadd.f32 0.0, %v1535
          %1537 = vdwg.mxu0
          %1538 = vmatpush.msra.mxu0 0.0
          %1539 = vmatpush.msra.mxu0 0.0
          %1540 = vmatpush.msra.mxu0 0.0
          %1541 = vmatpush.msra.mxu0 0.0
          %1542 = vmatpush.msra.mxu0 0.0
          %1543 = vmatpush.msra.mxu0 0.0
          %1544 = vmatpush.msra.mxu0 0.0
          %1545 = vmatpush.msra.mxu0 0.0
          %1546 = vmatpush.msra.mxu0 0.0
          %1547 = vmatpush.msra.mxu0 0.0
          %1548 = vmatpush.msra.mxu0 0.0
          %1549 = vmatpush.msra.mxu0 0.0
          %1550 = vmatpush.msra.mxu0 0.0
          %1551 = vmatpush.msra.mxu0 0.0
          %1552 = vmatpush.msra.mxu0 0.0
          %1553 = vmatpush.msra.mxu0 %v1258
          %1554 = vmatmul.f32.gmra.mxu0 %v338
          %v1555 = vpop.f32.mrf.mxu0
          %v1556 = vadd.f32 0.0, %v1555
          %1557 = vdwg.mxu0
          %1558 = vmatpush.msra.mxu0 0.0
          %1559 = vmatpush.msra.mxu0 0.0
          %1560 = vmatpush.msra.mxu0 0.0
          %1561 = vmatpush.msra.mxu0 0.0
          %1562 = vmatpush.msra.mxu0 0.0
          %1563 = vmatpush.msra.mxu0 0.0
          %1564 = vmatpush.msra.mxu0 0.0
          %1565 = vmatpush.msra.mxu0 0.0
          %1566 = vmatpush.msra.mxu0 0.0
          %1567 = vmatpush.msra.mxu0 0.0
          %1568 = vmatpush.msra.mxu0 0.0
          %1569 = vmatpush.msra.mxu0 0.0
          %1570 = vmatpush.msra.mxu0 0.0
          %1571 = vmatpush.msra.mxu0 0.0
          %1572 = vmatpush.msra.mxu0 0.0
          %1573 = vmatpush.msra.mxu0 %v1260
          %1574 = vmatmul.f32.gmra.mxu0 %v338
          %v1575 = vpop.f32.mrf.mxu0
          %v1576 = vadd.f32 0.0, %v1575
          %1577 = vdwg.mxu0
          %1578 = vmatpush.msra.mxu0 0.0
          %1579 = vmatpush.msra.mxu0 0.0
          %1580 = vmatpush.msra.mxu0 0.0
          %1581 = vmatpush.msra.mxu0 0.0
          %1582 = vmatpush.msra.mxu0 0.0
          %1583 = vmatpush.msra.mxu0 0.0
          %1584 = vmatpush.msra.mxu0 0.0
          %1585 = vmatpush.msra.mxu0 0.0
          %1586 = vmatpush.msra.mxu0 0.0
          %1587 = vmatpush.msra.mxu0 0.0
          %1588 = vmatpush.msra.mxu0 0.0
          %1589 = vmatpush.msra.mxu0 0.0
          %1590 = vmatpush.msra.mxu0 0.0
          %1591 = vmatpush.msra.mxu0 0.0
          %1592 = vmatpush.msra.mxu0 0.0
          %1593 = vmatpush.msra.mxu0 %v1262
          %1594 = vmatmul.f32.gmra.mxu0 %v338
          %v1595 = vpop.f32.mrf.mxu0
          %v1596 = vadd.f32 0.0, %v1595
          %1597 = vdwg.mxu0
          %1598 = vmatpush.msra.mxu0 0.0
          %1599 = vmatpush.msra.mxu0 0.0
          %1600 = vmatpush.msra.mxu0 0.0
          %1601 = vmatpush.msra.mxu0 0.0
          %1602 = vmatpush.msra.mxu0 0.0
          %1603 = vmatpush.msra.mxu0 0.0
          %1604 = vmatpush.msra.mxu0 0.0
          %1605 = vmatpush.msra.mxu0 0.0
          %1606 = vmatpush.msra.mxu0 0.0
          %1607 = vmatpush.msra.mxu0 0.0
          %1608 = vmatpush.msra.mxu0 0.0
          %1609 = vmatpush.msra.mxu0 0.0
          %1610 = vmatpush.msra.mxu0 0.0
          %1611 = vmatpush.msra.mxu0 0.0
          %1612 = vmatpush.msra.mxu0 0.0
          %1613 = vmatpush.msra.mxu0 %v1264
          %1614 = vmatmul.f32.gmra.mxu0 %v338
          %v1615 = vpop.f32.mrf.mxu0
          %v1616 = vadd.f32 0.0, %v1615
          %1617 = vdwg.mxu0
          %1618 = vmatpush.msra.mxu0 0.0
          %1619 = vmatpush.msra.mxu0 0.0
          %1620 = vmatpush.msra.mxu0 0.0
          %1621 = vmatpush.msra.mxu0 0.0
          %1622 = vmatpush.msra.mxu0 0.0
          %1623 = vmatpush.msra.mxu0 0.0
          %1624 = vmatpush.msra.mxu0 0.0
          %1625 = vmatpush.msra.mxu0 0.0
          %1626 = vmatpush.msra.mxu0 0.0
          %1627 = vmatpush.msra.mxu0 0.0
          %1628 = vmatpush.msra.mxu0 0.0
          %1629 = vmatpush.msra.mxu0 0.0
          %1630 = vmatpush.msra.mxu0 0.0
          %1631 = vmatpush.msra.mxu0 0.0
          %1632 = vmatpush.msra.mxu0 0.0
          %1633 = vmatpush.msra.mxu0 %v1266
          %1634 = vmatmul.f32.gmra.mxu0 %v338
          %v1635 = vpop.f32.mrf.mxu0
          %v1636 = vadd.f32 0.0, %v1635
          %1637 = vdwg.mxu0
          %1638 = vmatpush.msra.mxu0 0.0
          %1639 = vmatpush.msra.mxu0 0.0
          %1640 = vmatpush.msra.mxu0 0.0
          %1641 = vmatpush.msra.mxu0 0.0
          %1642 = vmatpush.msra.mxu0 0.0
          %1643 = vmatpush.msra.mxu0 0.0
          %1644 = vmatpush.msra.mxu0 0.0
          %1645 = vmatpush.msra.mxu0 0.0
          %1646 = vmatpush.msra.mxu0 0.0
          %1647 = vmatpush.msra.mxu0 0.0
          %1648 = vmatpush.msra.mxu0 0.0
          %1649 = vmatpush.msra.mxu0 0.0
          %1650 = vmatpush.msra.mxu0 0.0
          %1651 = vmatpush.msra.mxu0 0.0
          %1652 = vmatpush.msra.mxu0 0.0
          %1653 = vmatpush.msra.mxu0 %v1268
          %1654 = vmatmul.f32.gmra.mxu0 %v338
          %v1655 = vpop.f32.mrf.mxu0
          %v1656 = vadd.f32 0.0, %v1655
          %1657 = vdwg.mxu0
          %1658 = vmatpush.msra.mxu0 0.0
          %1659 = vmatpush.msra.mxu0 0.0
          %1660 = vmatpush.msra.mxu0 0.0
          %1661 = vmatpush.msra.mxu0 0.0
          %1662 = vmatpush.msra.mxu0 0.0
          %1663 = vmatpush.msra.mxu0 0.0
          %1664 = vmatpush.msra.mxu0 0.0
          %1665 = vmatpush.msra.mxu0 0.0
          %1666 = vmatpush.msra.mxu0 0.0
          %1667 = vmatpush.msra.mxu0 0.0
          %1668 = vmatpush.msra.mxu0 0.0
          %1669 = vmatpush.msra.mxu0 0.0
          %1670 = vmatpush.msra.mxu0 0.0
          %1671 = vmatpush.msra.mxu0 0.0
          %1672 = vmatpush.msra.mxu0 0.0
          %1673 = vmatpush.msra.mxu0 %v1270
          %1674 = vmatmul.f32.gmra.mxu0 %v338
          %v1675 = vpop.f32.mrf.mxu0
          %v1676 = vadd.f32 0.0, %v1675
          %1677 = vdwg.mxu0
          %1678 = vmatpush.msra.mxu0 0.0
          %1679 = vmatpush.msra.mxu0 0.0
          %1680 = vmatpush.msra.mxu0 0.0
          %1681 = vmatpush.msra.mxu0 0.0
          %1682 = vmatpush.msra.mxu0 0.0
          %1683 = vmatpush.msra.mxu0 0.0
          %1684 = vmatpush.msra.mxu0 0.0
          %1685 = vmatpush.msra.mxu0 0.0
          %1686 = vmatpush.msra.mxu0 0.0
          %1687 = vmatpush.msra.mxu0 0.0
          %1688 = vmatpush.msra.mxu0 0.0
          %1689 = vmatpush.msra.mxu0 0.0
          %1690 = vmatpush.msra.mxu0 0.0
          %1691 = vmatpush.msra.mxu0 0.0
          %1692 = vmatpush.msra.mxu0 0.0
          %1693 = vmatpush.msra.mxu0 %v1272
          %1694 = vmatmul.f32.gmra.mxu0 %v338
          %v1695 = vpop.f32.mrf.mxu0
          %v1696 = vadd.f32 0.0, %v1695
          %1697 = vdwg.mxu0
          %1698 = vmatpush.msra.mxu0 0.0
          %1699 = vmatpush.msra.mxu0 0.0
          %1700 = vmatpush.msra.mxu0 0.0
          %1701 = vmatpush.msra.mxu0 0.0
          %1702 = vmatpush.msra.mxu0 0.0
          %1703 = vmatpush.msra.mxu0 0.0
          %1704 = vmatpush.msra.mxu0 0.0
          %1705 = vmatpush.msra.mxu0 0.0
          %1706 = vmatpush.msra.mxu0 0.0
          %1707 = vmatpush.msra.mxu0 0.0
          %1708 = vmatpush.msra.mxu0 0.0
          %1709 = vmatpush.msra.mxu0 0.0
          %1710 = vmatpush.msra.mxu0 0.0
          %1711 = vmatpush.msra.mxu0 0.0
          %1712 = vmatpush.msra.mxu0 0.0
          %1713 = vmatpush.msra.mxu0 %v1274
          %1714 = vmatmul.f32.gmra.mxu0 %v338
          %v1715 = vpop.f32.mrf.mxu0
          %v1716 = vadd.f32 0.0, %v1715
          %1717 = vdwg.mxu0
          %1718 = vmatpush.msra.mxu0 0.0
          %1719 = vmatpush.msra.mxu0 0.0
          %1720 = vmatpush.msra.mxu0 0.0
          %1721 = vmatpush.msra.mxu0 0.0
          %1722 = vmatpush.msra.mxu0 0.0
          %1723 = vmatpush.msra.mxu0 0.0
          %1724 = vmatpush.msra.mxu0 0.0
          %1725 = vmatpush.msra.mxu0 0.0
          %1726 = vmatpush.msra.mxu0 0.0
          %1727 = vmatpush.msra.mxu0 0.0
          %1728 = vmatpush.msra.mxu0 0.0
          %1729 = vmatpush.msra.mxu0 0.0
          %1730 = vmatpush.msra.mxu0 0.0
          %1731 = vmatpush.msra.mxu0 0.0
          %1732 = vmatpush.msra.mxu0 0.0
          %1733 = vmatpush.msra.mxu0 %v1276
          %1734 = vmatmul.f32.gmra.mxu0 %v338
          %v1735 = vpop.f32.mrf.mxu0
          %v1736 = vadd.f32 0.0, %v1735
          %1737 = vdwg.mxu0
          %1738 = vmatpush.msra.mxu0 0.0
          %1739 = vmatpush.msra.mxu0 0.0
          %1740 = vmatpush.msra.mxu0 0.0
          %1741 = vmatpush.msra.mxu0 0.0
          %1742 = vmatpush.msra.mxu0 0.0
          %1743 = vmatpush.msra.mxu0 0.0
          %1744 = vmatpush.msra.mxu0 0.0
          %1745 = vmatpush.msra.mxu0 0.0
          %1746 = vmatpush.msra.mxu0 0.0
          %1747 = vmatpush.msra.mxu0 0.0
          %1748 = vmatpush.msra.mxu0 0.0
          %1749 = vmatpush.msra.mxu0 0.0
          %1750 = vmatpush.msra.mxu0 0.0
          %1751 = vmatpush.msra.mxu0 0.0
          %1752 = vmatpush.msra.mxu0 0.0
          %1753 = vmatpush.msra.mxu0 %v1278
          %1754 = vmatmul.f32.gmra.mxu0 %v338
          %v1755 = vpop.f32.mrf.mxu0
          %v1756 = vadd.f32 0.0, %v1755
          %1757 = vdwg.mxu0
          %1758 = vmatpush.msra.mxu0 0.0
          %1759 = vmatpush.msra.mxu0 0.0
          %1760 = vmatpush.msra.mxu0 0.0
          %1761 = vmatpush.msra.mxu0 0.0
          %1762 = vmatpush.msra.mxu0 0.0
          %1763 = vmatpush.msra.mxu0 0.0
          %1764 = vmatpush.msra.mxu0 0.0
          %1765 = vmatpush.msra.mxu0 0.0
          %1766 = vmatpush.msra.mxu0 0.0
          %1767 = vmatpush.msra.mxu0 0.0
          %1768 = vmatpush.msra.mxu0 0.0
          %1769 = vmatpush.msra.mxu0 0.0
          %1770 = vmatpush.msra.mxu0 0.0
          %1771 = vmatpush.msra.mxu0 0.0
          %1772 = vmatpush.msra.mxu0 0.0
          %1773 = vmatpush.msra.mxu0 %v1280
          %1774 = vmatmul.f32.gmra.mxu0 %v338
          %v1775 = vpop.f32.mrf.mxu0
          %v1776 = vadd.f32 0.0, %v1775
          %1777 = vdwg.mxu0
          %1778 = vmatpush.msra.mxu0 0.0
          %1779 = vmatpush.msra.mxu0 0.0
          %1780 = vmatpush.msra.mxu0 0.0
          %1781 = vmatpush.msra.mxu0 0.0
          %1782 = vmatpush.msra.mxu0 0.0
          %1783 = vmatpush.msra.mxu0 0.0
          %1784 = vmatpush.msra.mxu0 0.0
          %1785 = vmatpush.msra.mxu0 0.0
          %1786 = vmatpush.msra.mxu0 0.0
          %1787 = vmatpush.msra.mxu0 0.0
          %1788 = vmatpush.msra.mxu0 0.0
          %1789 = vmatpush.msra.mxu0 0.0
          %1790 = vmatpush.msra.mxu0 0.0
          %1791 = vmatpush.msra.mxu0 0.0
          %1792 = vmatpush.msra.mxu0 0.0
          %1793 = vmatpush.msra.mxu0 %v1282
          %1794 = vmatmul.f32.gmra.mxu0 %v338
          %v1795 = vpop.f32.mrf.mxu0
          %v1796 = vadd.f32 0.0, %v1795
          %1797 = vdwg.mxu0
          %1798 = vmatpush.msra.mxu0 0.0
          %1799 = vmatpush.msra.mxu0 0.0
          %1800 = vmatpush.msra.mxu0 0.0
          %1801 = vmatpush.msra.mxu0 0.0
          %1802 = vmatpush.msra.mxu0 0.0
          %1803 = vmatpush.msra.mxu0 0.0
          %1804 = vmatpush.msra.mxu0 0.0
          %1805 = vmatpush.msra.mxu0 0.0
          %1806 = vmatpush.msra.mxu0 0.0
          %1807 = vmatpush.msra.mxu0 0.0
          %1808 = vmatpush.msra.mxu0 0.0
          %1809 = vmatpush.msra.mxu0 0.0
          %1810 = vmatpush.msra.mxu0 0.0
          %1811 = vmatpush.msra.mxu0 0.0
          %1812 = vmatpush.msra.mxu0 0.0
          %1813 = vmatpush.msra.mxu0 %v1284
          %1814 = vmatmul.f32.gmra.mxu0 %v338
          %v1815 = vpop.f32.mrf.mxu0
          %v1816 = vadd.f32 0.0, %v1815
          %1817 = vdwg.mxu0
          %1818 = vmatpush.msra.mxu0 0.0
          %1819 = vmatpush.msra.mxu0 0.0
          %1820 = vmatpush.msra.mxu0 0.0
          %1821 = vmatpush.msra.mxu0 0.0
          %1822 = vmatpush.msra.mxu0 0.0
          %1823 = vmatpush.msra.mxu0 0.0
          %1824 = vmatpush.msra.mxu0 0.0
          %1825 = vmatpush.msra.mxu0 0.0
          %1826 = vmatpush.msra.mxu0 0.0
          %1827 = vmatpush.msra.mxu0 0.0
          %1828 = vmatpush.msra.mxu0 0.0
          %1829 = vmatpush.msra.mxu0 0.0
          %1830 = vmatpush.msra.mxu0 0.0
          %1831 = vmatpush.msra.mxu0 0.0
          %1832 = vmatpush.msra.mxu0 0.0
          %1833 = vmatpush.msra.mxu0 %v1286
          %1834 = vmatmul.f32.gmra.mxu0 %v338
          %v1835 = vpop.f32.mrf.mxu0
          %v1836 = vadd.f32 0.0, %v1835
          %1837 = vdwg.mxu0
          %1838 = vmatpush.msra.mxu0 0.0
          %1839 = vmatpush.msra.mxu0 0.0
          %1840 = vmatpush.msra.mxu0 0.0
          %1841 = vmatpush.msra.mxu0 0.0
          %1842 = vmatpush.msra.mxu0 0.0
          %1843 = vmatpush.msra.mxu0 0.0
          %1844 = vmatpush.msra.mxu0 0.0
          %1845 = vmatpush.msra.mxu0 0.0
          %1846 = vmatpush.msra.mxu0 0.0
          %1847 = vmatpush.msra.mxu0 0.0
          %1848 = vmatpush.msra.mxu0 0.0
          %1849 = vmatpush.msra.mxu0 0.0
          %1850 = vmatpush.msra.mxu0 0.0
          %1851 = vmatpush.msra.mxu0 0.0
          %1852 = vmatpush.msra.mxu0 0.0
          %1853 = vmatpush.msra.mxu0 %v1288
          %1854 = vmatmul.f32.gmra.mxu0 %v338
          %v1855 = vpop.f32.mrf.mxu0
          %v1856 = vadd.f32 0.0, %v1855
          %1857 = vdwg.mxu0
          %1858 = vmatpush.msra.mxu0 0.0
          %1859 = vmatpush.msra.mxu0 0.0
          %1860 = vmatpush.msra.mxu0 0.0
          %1861 = vmatpush.msra.mxu0 0.0
          %1862 = vmatpush.msra.mxu0 0.0
          %1863 = vmatpush.msra.mxu0 0.0
          %1864 = vmatpush.msra.mxu0 0.0
          %1865 = vmatpush.msra.mxu0 0.0
          %1866 = vmatpush.msra.mxu0 0.0
          %1867 = vmatpush.msra.mxu0 0.0
          %1868 = vmatpush.msra.mxu0 0.0
          %1869 = vmatpush.msra.mxu0 0.0
          %1870 = vmatpush.msra.mxu0 0.0
          %1871 = vmatpush.msra.mxu0 0.0
          %1872 = vmatpush.msra.mxu0 0.0
          %1873 = vmatpush.msra.mxu0 %v1290
          %1874 = vmatmul.f32.gmra.mxu0 %v338
          %v1875 = vpop.f32.mrf.mxu0
          %v1876 = vadd.f32 0.0, %v1875
          %1877 = vdwg.mxu0
          %1878 = vmatpush.msra.mxu0 0.0
          %1879 = vmatpush.msra.mxu0 0.0
          %1880 = vmatpush.msra.mxu0 0.0
          %1881 = vmatpush.msra.mxu0 0.0
          %1882 = vmatpush.msra.mxu0 0.0
          %1883 = vmatpush.msra.mxu0 0.0
          %1884 = vmatpush.msra.mxu0 0.0
          %1885 = vmatpush.msra.mxu0 0.0
          %1886 = vmatpush.msra.mxu0 0.0
          %1887 = vmatpush.msra.mxu0 0.0
          %1888 = vmatpush.msra.mxu0 0.0
          %1889 = vmatpush.msra.mxu0 0.0
          %1890 = vmatpush.msra.mxu0 0.0
          %1891 = vmatpush.msra.mxu0 0.0
          %1892 = vmatpush.msra.mxu0 0.0
          %1893 = vmatpush.msra.mxu0 %v1292
          %1894 = vmatmul.f32.gmra.mxu0 %v338
          %v1895 = vpop.f32.mrf.mxu0
          %v1896 = vadd.f32 0.0, %v1895
          %1897 = vdwg.mxu0
          %1898 = vmatpush.msra.mxu0 0.0
          %1899 = vmatpush.msra.mxu0 0.0
          %1900 = vmatpush.msra.mxu0 0.0
          %1901 = vmatpush.msra.mxu0 0.0
          %1902 = vmatpush.msra.mxu0 0.0
          %1903 = vmatpush.msra.mxu0 0.0
          %1904 = vmatpush.msra.mxu0 0.0
          %1905 = vmatpush.msra.mxu0 0.0
          %1906 = vmatpush.msra.mxu0 0.0
          %1907 = vmatpush.msra.mxu0 0.0
          %1908 = vmatpush.msra.mxu0 0.0
          %1909 = vmatpush.msra.mxu0 0.0
          %1910 = vmatpush.msra.mxu0 0.0
          %1911 = vmatpush.msra.mxu0 0.0
          %1912 = vmatpush.msra.mxu0 0.0
          %1913 = vmatpush.msra.mxu0 %v1294
          %1914 = vmatmul.f32.gmra.mxu0 %v338
          %v1915 = vpop.f32.mrf.mxu0
          %v1916 = vadd.f32 0.0, %v1915
          %1917 = vdwg.mxu0
          %1918 = vmatpush.msra.mxu0 0.0
          %1919 = vmatpush.msra.mxu0 0.0
          %1920 = vmatpush.msra.mxu0 0.0
          %1921 = vmatpush.msra.mxu0 0.0
          %1922 = vmatpush.msra.mxu0 0.0
          %1923 = vmatpush.msra.mxu0 0.0
          %1924 = vmatpush.msra.mxu0 0.0
          %1925 = vmatpush.msra.mxu0 0.0
          %1926 = vmatpush.msra.mxu0 0.0
          %1927 = vmatpush.msra.mxu0 0.0
          %1928 = vmatpush.msra.mxu0 0.0
          %1929 = vmatpush.msra.mxu0 0.0
          %1930 = vmatpush.msra.mxu0 0.0
          %1931 = vmatpush.msra.mxu0 0.0
          %1932 = vmatpush.msra.mxu0 0.0
          %1933 = vmatpush.msra.mxu0 %v1296
          %1934 = vmatmul.f32.gmra.mxu0 %v338
          %v1935 = vpop.f32.mrf.mxu0
          %v1936 = vadd.f32 0.0, %v1935
          %1937 = vdwg.mxu0
          %v1938 = vld [vmem:[#allocation2] sm:$0xff]
          %v1939 = vadd.f32 %v1316, %v1336
          %v1940 = vadd.f32 %v1939, %v1356
          %v1941 = vadd.f32 %v1940, %v1376
          %v1942 = vadd.f32 %v1941, %v1396
          %v1943 = vadd.f32 %v1942, %v1416
          %v1944 = vadd.f32 %v1943, %v1436
          %v1945 = vadd.f32 %v1944, %v1456
          %v1946 = vadd.f32 %v1945, %v1476
          %v1947 = vadd.f32 %v1946, %v1496
          %v1948 = vadd.f32 %v1947, %v1516
          %v1949 = vadd.f32 %v1948, %v1536
          %v1950 = vadd.f32 %v1949, %v1556
          %v1951 = vadd.f32 %v1950, %v1576
          %v1952 = vadd.f32 %v1951, %v1596
          %v1953 = vadd.f32 %v1952, %v1616
          %v1954 = vadd.f32 %v1953, %v1636
          %v1955 = vadd.f32 %v1954, %v1656
          %v1956 = vadd.f32 %v1955, %v1676
          %v1957 = vadd.f32 %v1956, %v1696
          %v1958 = vadd.f32 %v1957, %v1716
          %v1959 = vadd.f32 %v1958, %v1736
          %v1960 = vadd.f32 %v1959, %v1756
          %v1961 = vadd.f32 %v1960, %v1776
          %v1962 = vadd.f32 %v1961, %v1796
          %v1963 = vadd.f32 %v1962, %v1816
          %v1964 = vadd.f32 %v1963, %v1836
          %v1965 = vadd.f32 %v1964, %v1856
          %v1966 = vadd.f32 %v1965, %v1876
          %v1967 = vadd.f32 %v1966, %v1896
          %v1968 = vadd.f32 %v1967, %v1916
          %v1969 = vadd.f32 %v1968, %v1936
          %1970 = vadd.xlane.f32.xlu0 %v1969
          %v1971 = vpop.xlane.xlu0 %1970
          %v1972 = vadd.f32 %v1938, %v1971
          %1973 = vst.msk [vmem:[#allocation2] sm:$0xff] %vm1080, %v1972
          %v1974 = vld [vmem:[#allocation3] sm:$0xff]
          %v1975 = vmul.f32 %v1316, %v1316
          %v1976 = vmul.f32 %v1336, %v1336
          %v1977 = vmul.f32 %v1356, %v1356
          %v1978 = vmul.f32 %v1376, %v1376
          %v1979 = vmul.f32 %v1396, %v1396
          %v1980 = vmul.f32 %v1416, %v1416
          %v1981 = vmul.f32 %v1436, %v1436
          %v1982 = vmul.f32 %v1456, %v1456
          %v1983 = vmul.f32 %v1476, %v1476
          %v1984 = vmul.f32 %v1496, %v1496
          %v1985 = vmul.f32 %v1516, %v1516
          %v1986 = vmul.f32 %v1536, %v1536
          %v1987 = vmul.f32 %v1556, %v1556
          %v1988 = vmul.f32 %v1576, %v1576
          %v1989 = vmul.f32 %v1596, %v1596
          %v1990 = vmul.f32 %v1616, %v1616
          %v1991 = vmul.f32 %v1636, %v1636
          %v1992 = vmul.f32 %v1656, %v1656
          %v1993 = vmul.f32 %v1676, %v1676
          %v1994 = vmul.f32 %v1696, %v1696
          %v1995 = vmul.f32 %v1716, %v1716
          %v1996 = vmul.f32 %v1736, %v1736
          %v1997 = vmul.f32 %v1756, %v1756
          %v1998 = vmul.f32 %v1776, %v1776
          %v1999 = vmul.f32 %v1796, %v1796
          %v2000 = vmul.f32 %v1816, %v1816
          %v2001 = vmul.f32 %v1836, %v1836
          %v2002 = vmul.f32 %v1856, %v1856
          %v2003 = vmul.f32 %v1876, %v1876
          %v2004 = vmul.f32 %v1896, %v1896
          %v2005 = vmul.f32 %v1916, %v1916
          %v2006 = vmul.f32 %v1936, %v1936
          %v2007 = vadd.f32 %v1975, %v1976
          %v2008 = vadd.f32 %v2007, %v1977
          %v2009 = vadd.f32 %v2008, %v1978
          %v2010 = vadd.f32 %v2009, %v1979
          %v2011 = vadd.f32 %v2010, %v1980
          %v2012 = vadd.f32 %v2011, %v1981
          %v2013 = vadd.f32 %v2012, %v1982
          %v2014 = vadd.f32 %v2013, %v1983
          %v2015 = vadd.f32 %v2014, %v1984
          %v2016 = vadd.f32 %v2015, %v1985
          %v2017 = vadd.f32 %v2016, %v1986
          %v2018 = vadd.f32 %v2017, %v1987
          %v2019 = vadd.f32 %v2018, %v1988
          %v2020 = vadd.f32 %v2019, %v1989
          %v2021 = vadd.f32 %v2020, %v1990
          %v2022 = vadd.f32 %v2021, %v1991
          %v2023 = vadd.f32 %v2022, %v1992
          %v2024 = vadd.f32 %v2023, %v1993
          %v2025 = vadd.f32 %v2024, %v1994
          %v2026 = vadd.f32 %v2025, %v1995
          %v2027 = vadd.f32 %v2026, %v1996
          %v2028 = vadd.f32 %v2027, %v1997
          %v2029 = vadd.f32 %v2028, %v1998
          %v2030 = vadd.f32 %v2029, %v1999
          %v2031 = vadd.f32 %v2030, %v2000
          %v2032 = vadd.f32 %v2031, %v2001
          %v2033 = vadd.f32 %v2032, %v2002
          %v2034 = vadd.f32 %v2033, %v2003
          %v2035 = vadd.f32 %v2034, %v2004
          %v2036 = vadd.f32 %v2035, %v2005
          %v2037 = vadd.f32 %v2036, %v2006
          %2038 = vadd.xlane.f32.xlu0 %v2037
          %v2039 = vpop.xlane.xlu0 %2038
          %v2040 = vadd.f32 %v1974, %v2039
          %2041 = vst.msk [vmem:[#allocation3] sm:$0xff] %vm1080, %v2040
        $region48: #{tpu_custom_call.1} parent=35 // pred_fallthru
          _
        // Predicated region
        $region49: #{tpu_custom_call.1} parent=35 // pred_check
          _
        $region50: #{tpu_custom_call.1} parent=35 // pred_check_branch
          %2043 = sbr.rel (%p242) target = $region52
        $region51: #{tpu_custom_call.1} parent=35 // pred_region
          %v2044 = vld [vmem:[%s1] sm:$0xff]
          %v2045 = vld [vmem:[#allocation2] sm:$0xff]
          %v2046 = vmul.f32 %v2045, 0.00012207031
          %v2047 = vld [vmem:[#allocation3] sm:$0xff]
          %v2048 = vmul.f32 %v2047, 0.00012207031
          %v2049 = vmul.f32 %v2046, %v2046
          %v2050 = vsub.f32 %v2048, %v2049
          %v2051 = vmax.f32 %v2050, 0.0
          %v2052 = vld [vmem:[%s2] sm:$0xff]
          %v2053 = vadd.f32 %v2051, 1e-05
          %v2054 = vrsqrt.pop %v2053
          %v2055 = vmul.f32 %v2054, %v2053
          %v2056 = vmul.f32 %v2055, %v2054
          %v2057 = vmul.f32 0.5, %v2056
          %v2058 = vsub.f32 1.5, %v2057
          %v2059 = vmul.f32 %v2054, %v2058
          %vm2060 = vweird.f32 %v2053
          %vm2061 = vweird.f32 %v2054
          %vm2062 = vmor %vm2060, %vm2061
          %v2063 = vsel %vm2062, %v2054, %v2059
          %v2064 = vmul.f32 %v2052, %v2063
          %v2065 = vld [vmem:[%s3] sm:$0xff]
          %v2066 = vmul.f32 %v2046, %v2064
          %v2067 = vsub.f32 %v2065, %v2066
          %vm2068 = vcmask 7168
          %2069 = vst.msk [vmem:[#allocation5] sm:$0xff] %vm2068, %v2067
          %2071 = vset.pattern.permute.xlu0 0
          %2072 = vperm.xlu0 %2071, %v2064
          %v2073 = vpop.permute.xlu0 %2072
          %v2075 = vmul.f32 %v2044, %v2073
          %vm2076 = vcmask 31744
          %2077 = vst.msk [vmem:[#allocation4] sm:$0xff] %vm2076, %v2075
        $region52: #{tpu_custom_call.1} parent=35 // pred_fallthru
          _
        %p2078 = scmp.eq.s32.totalorder %s24, 1
        // Predicated region
        $region53: #{tpu_custom_call.1} parent=35 // pred_check
          %p2079 = pneg %p2078
        $region54: #{tpu_custom_call.1} parent=35 // pred_check_branch
          %2081 = sbr.rel (%p2079) target = $region56
        $region55: #{tpu_custom_call.1} parent=35 // pred_region
          %v2082 = vld [vmem:[#allocation4] sm:$0xff]
          %v2083 = vld [vmem:[#allocation5] sm:$0xff]
          %v2084 = vld [vmem:[#allocation6] sm:$0xff]
          %v2085 = vld [vmem:[#allocation6 + $0x8] sm:$0xff]
          %v2086 = vld [vmem:[#allocation6 + $0x10] sm:$0xff]
          %v2087 = vld [vmem:[#allocation6 + $0x18] sm:$0xff]
          %v2088 = vld [vmem:[#allocation6 + $0x20] sm:$0xff]
          %v2089 = vld [vmem:[#allocation6 + $0x28] sm:$0xff]
          %v2090 = vld [vmem:[#allocation6 + $0x30] sm:$0xff]
          %v2091 = vld [vmem:[#allocation6 + $0x38] sm:$0xff]
          %v2092 = vld [vmem:[#allocation6 + $0x40] sm:$0xff]
          %v2093 = vld [vmem:[#allocation6 + $0x48] sm:$0xff]
          %v2094 = vld [vmem:[#allocation6 + $0x50] sm:$0xff]
          %v2095 = vld [vmem:[#allocation6 + $0x58] sm:$0xff]
          %v2096 = vld [vmem:[#allocation6 + $0x60] sm:$0xff]
          %v2097 = vld [vmem:[#allocation6 + $0x68] sm:$0xff]
          %v2098 = vld [vmem:[#allocation6 + $0x70] sm:$0xff]
          %v2099 = vld [vmem:[#allocation6 + $0x78] sm:$0xff]
          %2101 = vset.pattern.permute.xlu0 0
          %2102 = vperm.xlu0 %2101, %v2083
          %v2103 = vpop.permute.xlu0 %2102
          %2121 = vst [vmem:[#allocation1] ss:$2 sm:$0xff] %v2084
          %s2122 = scalar_lea.vmem [#allocation1], 16
          %2123 = vst [vmem:[%s2122] ss:$2 sm:$0xff] %v2085
          %s2124 = scalar_lea.vmem [#allocation1], 32
          %2125 = vst [vmem:[%s2124] ss:$2 sm:$0xff] %v2086
          %s2126 = scalar_lea.vmem [#allocation1], 48
          %2127 = vst [vmem:[%s2126] ss:$2 sm:$0xff] %v2087
          %v2128 = vld.sshfl [vmem:[#allocation1] sm:$0xff pattern:$0x75316420]
          %v2129 = vld.sshfl [vmem:[#allocation1 + $0x8] sm:$0xff pattern:$0x75316420]
          %v2130 = vld.sshfl [vmem:[#allocation1 + $0x10] sm:$0xff pattern:$0x75316420]
          %v2131 = vld.sshfl [vmem:[#allocation1 + $0x18] sm:$0xff pattern:$0x75316420]
          %v2132 = vld.sshfl [vmem:[#allocation1 + $0x20] sm:$0xff pattern:$0x75316420]
          %v2133 = vld.sshfl [vmem:[#allocation1 + $0x28] sm:$0xff pattern:$0x75316420]
          %v2134 = vld.sshfl [vmem:[#allocation1 + $0x30] sm:$0xff pattern:$0x75316420]
          %v2135 = vld.sshfl [vmem:[#allocation1 + $0x38] sm:$0xff pattern:$0x75316420]
          %2136 = vst [vmem:[#allocation1] ss:$2 sm:$0xff] %v2088
          %2137 = vst [vmem:[%s2122] ss:$2 sm:$0xff] %v2089
          %2138 = vst [vmem:[%s2124] ss:$2 sm:$0xff] %v2090
          %2139 = vst [vmem:[%s2126] ss:$2 sm:$0xff] %v2091
          %v2140 = vld.sshfl [vmem:[#allocation1] sm:$0xff pattern:$0x75316420]
          %v2141 = vld.sshfl [vmem:[#allocation1 + $0x8] sm:$0xff pattern:$0x75316420]
          %v2142 = vld.sshfl [vmem:[#allocation1 + $0x10] sm:$0xff pattern:$0x75316420]
          %v2143 = vld.sshfl [vmem:[#allocation1 + $0x18] sm:$0xff pattern:$0x75316420]
          %v2144 = vld.sshfl [vmem:[#allocation1 + $0x20] sm:$0xff pattern:$0x75316420]
          %v2145 = vld.sshfl [vmem:[#allocation1 + $0x28] sm:$0xff pattern:$0x75316420]
          %v2146 = vld.sshfl [vmem:[#allocation1 + $0x30] sm:$0xff pattern:$0x75316420]
          %v2147 = vld.sshfl [vmem:[#allocation1 + $0x38] sm:$0xff pattern:$0x75316420]
          %2148 = vst [vmem:[#allocation1] ss:$2 sm:$0xff] %v2092
          %2149 = vst [vmem:[%s2122] ss:$2 sm:$0xff] %v2093
          %2150 = vst [vmem:[%s2124] ss:$2 sm:$0xff] %v2094
          %2151 = vst [vmem:[%s2126] ss:$2 sm:$0xff] %v2095
          %v2152 = vld.sshfl [vmem:[#allocation1] sm:$0xff pattern:$0x75316420]
          %v2153 = vld.sshfl [vmem:[#allocation1 + $0x8] sm:$0xff pattern:$0x75316420]
          %v2154 = vld.sshfl [vmem:[#allocation1 + $0x10] sm:$0xff pattern:$0x75316420]
          %v2155 = vld.sshfl [vmem:[#allocation1 + $0x18] sm:$0xff pattern:$0x75316420]
          %v2156 = vld.sshfl [vmem:[#allocation1 + $0x20] sm:$0xff pattern:$0x75316420]
          %v2157 = vld.sshfl [vmem:[#allocation1 + $0x28] sm:$0xff pattern:$0x75316420]
          %v2158 = vld.sshfl [vmem:[#allocation1 + $0x30] sm:$0xff pattern:$0x75316420]
          %v2159 = vld.sshfl [vmem:[#allocation1 + $0x38] sm:$0xff pattern:$0x75316420]
          %2160 = vst [vmem:[#allocation1] ss:$2 sm:$0xff] %v2096
          %2161 = vst [vmem:[%s2122] ss:$2 sm:$0xff] %v2097
          %2162 = vst [vmem:[%s2124] ss:$2 sm:$0xff] %v2098
          %2163 = vst [vmem:[%s2126] ss:$2 sm:$0xff] %v2099
          %v2164 = vld.sshfl [vmem:[#allocation1] sm:$0xff pattern:$0x75316420]
          %v2165 = vld.sshfl [vmem:[#allocation1 + $0x8] sm:$0xff pattern:$0x75316420]
          %v2166 = vld.sshfl [vmem:[#allocation1 + $0x10] sm:$0xff pattern:$0x75316420]
          %v2167 = vld.sshfl [vmem:[#allocation1 + $0x18] sm:$0xff pattern:$0x75316420]
          %v2168 = vld.sshfl [vmem:[#allocation1 + $0x20] sm:$0xff pattern:$0x75316420]
          %v2169 = vld.sshfl [vmem:[#allocation1 + $0x28] sm:$0xff pattern:$0x75316420]
          %v2170 = vld.sshfl [vmem:[#allocation1 + $0x30] sm:$0xff pattern:$0x75316420]
          %v2171 = vld.sshfl [vmem:[#allocation1 + $0x38] sm:$0xff pattern:$0x75316420]
          %vm2172 = vcmask 31744
          %v2174 = vsel %vm2172, %v2082, 0
          %vm2176 = vcmask 1043456
          %v2177 = vsel %vm2176, %v2128, 0
          %v2179 = vsel %vm2176, %v2129, 0
          %v2181 = vsel %vm2176, %v2130, 0
          %v2183 = vsel %vm2176, %v2131, 0
          %v2185 = vsel %vm2176, %v2132, 0
          %v2187 = vsel %vm2176, %v2133, 0
          %v2189 = vsel %vm2176, %v2134, 0
          %v2191 = vsel %vm2176, %v2135, 0
          %v2193 = vsel %vm2176, %v2140, 0
          %v2195 = vsel %vm2176, %v2141, 0
          %v2197 = vsel %vm2176, %v2142, 0
          %v2199 = vsel %vm2176, %v2143, 0
          %v2201 = vsel %vm2176, %v2144, 0
          %v2203 = vsel %vm2176, %v2145, 0
          %v2205 = vsel %vm2176, %v2146, 0
          %v2207 = vsel %vm2176, %v2147, 0
          %v2209 = vsel %vm2176, %v2152, 0
          %v2211 = vsel %vm2176, %v2153, 0
          %v2213 = vsel %vm2176, %v2154, 0
          %v2215 = vsel %vm2176, %v2155, 0
          %v2217 = vsel %vm2176, %v2156, 0
          %v2219 = vsel %vm2176, %v2157, 0
          %v2221 = vsel %vm2176, %v2158, 0
          %v2223 = vsel %vm2176, %v2159, 0
          %v2225 = vsel %vm2176, %v2164, 0
          %v2227 = vsel %vm2176, %v2165, 0
          %v2229 = vsel %vm2176, %v2166, 0
          %v2231 = vsel %vm2176, %v2167, 0
          %v2233 = vsel %vm2176, %v2168, 0
          %v2235 = vsel %vm2176, %v2169, 0
          %v2237 = vsel %vm2176, %v2170, 0
          %v2239 = vsel %vm2176, %v2171, 0
          %2241 = vmatpush.msra.mxu0 0.0
          %2242 = vmatpush.msra.mxu0 0.0
          %2243 = vmatpush.msra.mxu0 0.0
          %2244 = vmatpush.msra.mxu0 0.0
          %2245 = vmatpush.msra.mxu0 0.0
          %2246 = vmatpush.msra.mxu0 0.0
          %2247 = vmatpush.msra.mxu0 0.0
          %2248 = vmatpush.msra.mxu0 0.0
          %2249 = vmatpush.msra.mxu0 0.0
          %2250 = vmatpush.msra.mxu0 0.0
          %2251 = vmatpush.msra.mxu0 0.0
          %2252 = vmatpush.msra.mxu0 0.0
          %2253 = vmatpush.msra.mxu0 0.0
          %2254 = vmatpush.msra.mxu0 0.0
          %2255 = vmatpush.msra.mxu0 0.0
          %2256 = vmatpush.msra.mxu0 %v2177
          %2257 = vmatmul.f32.gmra.mxu0 %v2174
          %v2258 = vpop.f32.mrf.mxu0
          %v2259 = vadd.f32 %v2103, %v2258
          %2260 = vdwg.mxu0
          %2261 = vmatpush.msra.mxu0 0.0
          %2262 = vmatpush.msra.mxu0 0.0
          %2263 = vmatpush.msra.mxu0 0.0
          %2264 = vmatpush.msra.mxu0 0.0
          %2265 = vmatpush.msra.mxu0 0.0
          %2266 = vmatpush.msra.mxu0 0.0
          %2267 = vmatpush.msra.mxu0 0.0
          %2268 = vmatpush.msra.mxu0 0.0
          %2269 = vmatpush.msra.mxu0 0.0
          %2270 = vmatpush.msra.mxu0 0.0
          %2271 = vmatpush.msra.mxu0 0.0
          %2272 = vmatpush.msra.mxu0 0.0
          %2273 = vmatpush.msra.mxu0 0.0
          %2274 = vmatpush.msra.mxu0 0.0
          %2275 = vmatpush.msra.mxu0 0.0
          %2276 = vmatpush.msra.mxu0 %v2179
          %2277 = vmatmul.f32.gmra.mxu0 %v2174
          %v2278 = vpop.f32.mrf.mxu0
          %v2279 = vadd.f32 %v2103, %v2278
          %2280 = vdwg.mxu0
          %2281 = vmatpush.msra.mxu0 0.0
          %2282 = vmatpush.msra.mxu0 0.0
          %2283 = vmatpush.msra.mxu0 0.0
          %2284 = vmatpush.msra.mxu0 0.0
          %2285 = vmatpush.msra.mxu0 0.0
          %2286 = vmatpush.msra.mxu0 0.0
          %2287 = vmatpush.msra.mxu0 0.0
          %2288 = vmatpush.msra.mxu0 0.0
          %2289 = vmatpush.msra.mxu0 0.0
          %2290 = vmatpush.msra.mxu0 0.0
          %2291 = vmatpush.msra.mxu0 0.0
          %2292 = vmatpush.msra.mxu0 0.0
          %2293 = vmatpush.msra.mxu0 0.0
          %2294 = vmatpush.msra.mxu0 0.0
          %2295 = vmatpush.msra.mxu0 0.0
          %2296 = vmatpush.msra.mxu0 %v2181
          %2297 = vmatmul.f32.gmra.mxu0 %v2174
          %v2298 = vpop.f32.mrf.mxu0
          %v2299 = vadd.f32 %v2103, %v2298
          %2300 = vdwg.mxu0
          %2301 = vmatpush.msra.mxu0 0.0
          %2302 = vmatpush.msra.mxu0 0.0
          %2303 = vmatpush.msra.mxu0 0.0
          %2304 = vmatpush.msra.mxu0 0.0
          %2305 = vmatpush.msra.mxu0 0.0
          %2306 = vmatpush.msra.mxu0 0.0
          %2307 = vmatpush.msra.mxu0 0.0
          %2308 = vmatpush.msra.mxu0 0.0
          %2309 = vmatpush.msra.mxu0 0.0
          %2310 = vmatpush.msra.mxu0 0.0
          %2311 = vmatpush.msra.mxu0 0.0
          %2312 = vmatpush.msra.mxu0 0.0
          %2313 = vmatpush.msra.mxu0 0.0
          %2314 = vmatpush.msra.mxu0 0.0
          %2315 = vmatpush.msra.mxu0 0.0
          %2316 = vmatpush.msra.mxu0 %v2183
          %2317 = vmatmul.f32.gmra.mxu0 %v2174
          %v2318 = vpop.f32.mrf.mxu0
          %v2319 = vadd.f32 %v2103, %v2318
          %2320 = vdwg.mxu0
          %2321 = vmatpush.msra.mxu0 0.0
          %2322 = vmatpush.msra.mxu0 0.0
          %2323 = vmatpush.msra.mxu0 0.0
          %2324 = vmatpush.msra.mxu0 0.0
          %2325 = vmatpush.msra.mxu0 0.0
          %2326 = vmatpush.msra.mxu0 0.0
          %2327 = vmatpush.msra.mxu0 0.0
          %2328 = vmatpush.msra.mxu0 0.0
          %2329 = vmatpush.msra.mxu0 0.0
          %2330 = vmatpush.msra.mxu0 0.0
          %2331 = vmatpush.msra.mxu0 0.0
          %2332 = vmatpush.msra.mxu0 0.0
          %2333 = vmatpush.msra.mxu0 0.0
          %2334 = vmatpush.msra.mxu0 0.0
          %2335 = vmatpush.msra.mxu0 0.0
          %2336 = vmatpush.msra.mxu0 %v2185
          %2337 = vmatmul.f32.gmra.mxu0 %v2174
          %v2338 = vpop.f32.mrf.mxu0
          %v2339 = vadd.f32 %v2103, %v2338
          %2340 = vdwg.mxu0
          %2341 = vmatpush.msra.mxu0 0.0
          %2342 = vmatpush.msra.mxu0 0.0
          %2343 = vmatpush.msra.mxu0 0.0
          %2344 = vmatpush.msra.mxu0 0.0
          %2345 = vmatpush.msra.mxu0 0.0
          %2346 = vmatpush.msra.mxu0 0.0
          %2347 = vmatpush.msra.mxu0 0.0
          %2348 = vmatpush.msra.mxu0 0.0
          %2349 = vmatpush.msra.mxu0 0.0
          %2350 = vmatpush.msra.mxu0 0.0
          %2351 = vmatpush.msra.mxu0 0.0
          %2352 = vmatpush.msra.mxu0 0.0
          %2353 = vmatpush.msra.mxu0 0.0
          %2354 = vmatpush.msra.mxu0 0.0
          %2355 = vmatpush.msra.mxu0 0.0
          %2356 = vmatpush.msra.mxu0 %v2187
          %2357 = vmatmul.f32.gmra.mxu0 %v2174
          %v2358 = vpop.f32.mrf.mxu0
          %v2359 = vadd.f32 %v2103, %v2358
          %2360 = vdwg.mxu0
          %2361 = vmatpush.msra.mxu0 0.0
          %2362 = vmatpush.msra.mxu0 0.0
          %2363 = vmatpush.msra.mxu0 0.0
          %2364 = vmatpush.msra.mxu0 0.0
          %2365 = vmatpush.msra.mxu0 0.0
          %2366 = vmatpush.msra.mxu0 0.0
          %2367 = vmatpush.msra.mxu0 0.0
          %2368 = vmatpush.msra.mxu0 0.0
          %2369 = vmatpush.msra.mxu0 0.0
          %2370 = vmatpush.msra.mxu0 0.0
          %2371 = vmatpush.msra.mxu0 0.0
          %2372 = vmatpush.msra.mxu0 0.0
          %2373 = vmatpush.msra.mxu0 0.0
          %2374 = vmatpush.msra.mxu0 0.0
          %2375 = vmatpush.msra.mxu0 0.0
          %2376 = vmatpush.msra.mxu0 %v2189
          %2377 = vmatmul.f32.gmra.mxu0 %v2174
          %v2378 = vpop.f32.mrf.mxu0
          %v2379 = vadd.f32 %v2103, %v2378
          %2380 = vdwg.mxu0
          %2381 = vmatpush.msra.mxu0 0.0
          %2382 = vmatpush.msra.mxu0 0.0
          %2383 = vmatpush.msra.mxu0 0.0
          %2384 = vmatpush.msra.mxu0 0.0
          %2385 = vmatpush.msra.mxu0 0.0
          %2386 = vmatpush.msra.mxu0 0.0
          %2387 = vmatpush.msra.mxu0 0.0
          %2388 = vmatpush.msra.mxu0 0.0
          %2389 = vmatpush.msra.mxu0 0.0
          %2390 = vmatpush.msra.mxu0 0.0
          %2391 = vmatpush.msra.mxu0 0.0
          %2392 = vmatpush.msra.mxu0 0.0
          %2393 = vmatpush.msra.mxu0 0.0
          %2394 = vmatpush.msra.mxu0 0.0
          %2395 = vmatpush.msra.mxu0 0.0
          %2396 = vmatpush.msra.mxu0 %v2191
          %2397 = vmatmul.f32.gmra.mxu0 %v2174
          %v2398 = vpop.f32.mrf.mxu0
          %v2399 = vadd.f32 %v2103, %v2398
          %2400 = vdwg.mxu0
          %2401 = vmatpush.msra.mxu0 0.0
          %2402 = vmatpush.msra.mxu0 0.0
          %2403 = vmatpush.msra.mxu0 0.0
          %2404 = vmatpush.msra.mxu0 0.0
          %2405 = vmatpush.msra.mxu0 0.0
          %2406 = vmatpush.msra.mxu0 0.0
          %2407 = vmatpush.msra.mxu0 0.0
          %2408 = vmatpush.msra.mxu0 0.0
          %2409 = vmatpush.msra.mxu0 0.0
          %2410 = vmatpush.msra.mxu0 0.0
          %2411 = vmatpush.msra.mxu0 0.0
          %2412 = vmatpush.msra.mxu0 0.0
          %2413 = vmatpush.msra.mxu0 0.0
          %2414 = vmatpush.msra.mxu0 0.0
          %2415 = vmatpush.msra.mxu0 0.0
          %2416 = vmatpush.msra.mxu0 %v2193
          %2417 = vmatmul.f32.gmra.mxu0 %v2174
          %v2418 = vpop.f32.mrf.mxu0
          %v2419 = vadd.f32 %v2103, %v2418
          %2420 = vdwg.mxu0
          %2421 = vmatpush.msra.mxu0 0.0
          %2422 = vmatpush.msra.mxu0 0.0
          %2423 = vmatpush.msra.mxu0 0.0
          %2424 = vmatpush.msra.mxu0 0.0
          %2425 = vmatpush.msra.mxu0 0.0
          %2426 = vmatpush.msra.mxu0 0.0
          %2427 = vmatpush.msra.mxu0 0.0
          %2428 = vmatpush.msra.mxu0 0.0
          %2429 = vmatpush.msra.mxu0 0.0
          %2430 = vmatpush.msra.mxu0 0.0
          %2431 = vmatpush.msra.mxu0 0.0
          %2432 = vmatpush.msra.mxu0 0.0
          %2433 = vmatpush.msra.mxu0 0.0
          %2434 = vmatpush.msra.mxu0 0.0
          %2435 = vmatpush.msra.mxu0 0.0
          %2436 = vmatpush.msra.mxu0 %v2195
          %2437 = vmatmul.f32.gmra.mxu0 %v2174
          %v2438 = vpop.f32.mrf.mxu0
          %v2439 = vadd.f32 %v2103, %v2438
          %2440 = vdwg.mxu0
          %2441 = vmatpush.msra.mxu0 0.0
          %2442 = vmatpush.msra.mxu0 0.0
          %2443 = vmatpush.msra.mxu0 0.0
          %2444 = vmatpush.msra.mxu0 0.0
          %2445 = vmatpush.msra.mxu0 0.0
          %2446 = vmatpush.msra.mxu0 0.0
          %2447 = vmatpush.msra.mxu0 0.0
          %2448 = vmatpush.msra.mxu0 0.0
          %2449 = vmatpush.msra.mxu0 0.0
          %2450 = vmatpush.msra.mxu0 0.0
          %2451 = vmatpush.msra.mxu0 0.0
          %2452 = vmatpush.msra.mxu0 0.0
          %2453 = vmatpush.msra.mxu0 0.0
          %2454 = vmatpush.msra.mxu0 0.0
          %2455 = vmatpush.msra.mxu0 0.0
          %2456 = vmatpush.msra.mxu0 %v2197
          %2457 = vmatmul.f32.gmra.mxu0 %v2174
          %v2458 = vpop.f32.mrf.mxu0
          %v2459 = vadd.f32 %v2103, %v2458
          %2460 = vdwg.mxu0
          %2461 = vmatpush.msra.mxu0 0.0
          %2462 = vmatpush.msra.mxu0 0.0
          %2463 = vmatpush.msra.mxu0 0.0
          %2464 = vmatpush.msra.mxu0 0.0
          %2465 = vmatpush.msra.mxu0 0.0
          %2466 = vmatpush.msra.mxu0 0.0
          %2467 = vmatpush.msra.mxu0 0.0
          %2468 = vmatpush.msra.mxu0 0.0
          %2469 = vmatpush.msra.mxu0 0.0
          %2470 = vmatpush.msra.mxu0 0.0
          %2471 = vmatpush.msra.mxu0 0.0
          %2472 = vmatpush.msra.mxu0 0.0
          %2473 = vmatpush.msra.mxu0 0.0
          %2474 = vmatpush.msra.mxu0 0.0
          %2475 = vmatpush.msra.mxu0 0.0
          %2476 = vmatpush.msra.mxu0 %v2199
          %2477 = vmatmul.f32.gmra.mxu0 %v2174
          %v2478 = vpop.f32.mrf.mxu0
          %v2479 = vadd.f32 %v2103, %v2478
          %2480 = vdwg.mxu0
          %2481 = vmatpush.msra.mxu0 0.0
          %2482 = vmatpush.msra.mxu0 0.0
          %2483 = vmatpush.msra.mxu0 0.0
          %2484 = vmatpush.msra.mxu0 0.0
          %2485 = vmatpush.msra.mxu0 0.0
          %2486 = vmatpush.msra.mxu0 0.0
          %2487 = vmatpush.msra.mxu0 0.0
          %2488 = vmatpush.msra.mxu0 0.0
          %2489 = vmatpush.msra.mxu0 0.0
          %2490 = vmatpush.msra.mxu0 0.0
          %2491 = vmatpush.msra.mxu0 0.0
          %2492 = vmatpush.msra.mxu0 0.0
          %2493 = vmatpush.msra.mxu0 0.0
          %2494 = vmatpush.msra.mxu0 0.0
          %2495 = vmatpush.msra.mxu0 0.0
          %2496 = vmatpush.msra.mxu0 %v2201
          %2497 = vmatmul.f32.gmra.mxu0 %v2174
          %v2498 = vpop.f32.mrf.mxu0
          %v2499 = vadd.f32 %v2103, %v2498
          %2500 = vdwg.mxu0
          %2501 = vmatpush.msra.mxu0 0.0
          %2502 = vmatpush.msra.mxu0 0.0
          %2503 = vmatpush.msra.mxu0 0.0
          %2504 = vmatpush.msra.mxu0 0.0
          %2505 = vmatpush.msra.mxu0 0.0
          %2506 = vmatpush.msra.mxu0 0.0
          %2507 = vmatpush.msra.mxu0 0.0
          %2508 = vmatpush.msra.mxu0 0.0
          %2509 = vmatpush.msra.mxu0 0.0
          %2510 = vmatpush.msra.mxu0 0.0
          %2511 = vmatpush.msra.mxu0 0.0
          %2512 = vmatpush.msra.mxu0 0.0
          %2513 = vmatpush.msra.mxu0 0.0
          %2514 = vmatpush.msra.mxu0 0.0
          %2515 = vmatpush.msra.mxu0 0.0
          %2516 = vmatpush.msra.mxu0 %v2203
          %2517 = vmatmul.f32.gmra.mxu0 %v2174
          %v2518 = vpop.f32.mrf.mxu0
          %v2519 = vadd.f32 %v2103, %v2518
          %2520 = vdwg.mxu0
          %2521 = vmatpush.msra.mxu0 0.0
          %2522 = vmatpush.msra.mxu0 0.0
          %2523 = vmatpush.msra.mxu0 0.0
          %2524 = vmatpush.msra.mxu0 0.0
          %2525 = vmatpush.msra.mxu0 0.0
          %2526 = vmatpush.msra.mxu0 0.0
          %2527 = vmatpush.msra.mxu0 0.0
          %2528 = vmatpush.msra.mxu0 0.0
          %2529 = vmatpush.msra.mxu0 0.0
          %2530 = vmatpush.msra.mxu0 0.0
          %2531 = vmatpush.msra.mxu0 0.0
          %2532 = vmatpush.msra.mxu0 0.0
          %2533 = vmatpush.msra.mxu0 0.0
          %2534 = vmatpush.msra.mxu0 0.0
          %2535 = vmatpush.msra.mxu0 0.0
          %2536 = vmatpush.msra.mxu0 %v2205
          %2537 = vmatmul.f32.gmra.mxu0 %v2174
          %v2538 = vpop.f32.mrf.mxu0
          %v2539 = vadd.f32 %v2103, %v2538
          %2540 = vdwg.mxu0
          %2541 = vmatpush.msra.mxu0 0.0
          %2542 = vmatpush.msra.mxu0 0.0
          %2543 = vmatpush.msra.mxu0 0.0
          %2544 = vmatpush.msra.mxu0 0.0
          %2545 = vmatpush.msra.mxu0 0.0
          %2546 = vmatpush.msra.mxu0 0.0
          %2547 = vmatpush.msra.mxu0 0.0
          %2548 = vmatpush.msra.mxu0 0.0
          %2549 = vmatpush.msra.mxu0 0.0
          %2550 = vmatpush.msra.mxu0 0.0
          %2551 = vmatpush.msra.mxu0 0.0
          %2552 = vmatpush.msra.mxu0 0.0
          %2553 = vmatpush.msra.mxu0 0.0
          %2554 = vmatpush.msra.mxu0 0.0
          %2555 = vmatpush.msra.mxu0 0.0
          %2556 = vmatpush.msra.mxu0 %v2207
          %2557 = vmatmul.f32.gmra.mxu0 %v2174
          %v2558 = vpop.f32.mrf.mxu0
          %v2559 = vadd.f32 %v2103, %v2558
          %2560 = vdwg.mxu0
          %2561 = vmatpush.msra.mxu0 0.0
          %2562 = vmatpush.msra.mxu0 0.0
          %2563 = vmatpush.msra.mxu0 0.0
          %2564 = vmatpush.msra.mxu0 0.0
          %2565 = vmatpush.msra.mxu0 0.0
          %2566 = vmatpush.msra.mxu0 0.0
          %2567 = vmatpush.msra.mxu0 0.0
          %2568 = vmatpush.msra.mxu0 0.0
          %2569 = vmatpush.msra.mxu0 0.0
          %2570 = vmatpush.msra.mxu0 0.0
          %2571 = vmatpush.msra.mxu0 0.0
          %2572 = vmatpush.msra.mxu0 0.0
          %2573 = vmatpush.msra.mxu0 0.0
          %2574 = vmatpush.msra.mxu0 0.0
          %2575 = vmatpush.msra.mxu0 0.0
          %2576 = vmatpush.msra.mxu0 %v2209
          %2577 = vmatmul.f32.gmra.mxu0 %v2174
          %v2578 = vpop.f32.mrf.mxu0
          %v2579 = vadd.f32 %v2103, %v2578
          %2580 = vdwg.mxu0
          %2581 = vmatpush.msra.mxu0 0.0
          %2582 = vmatpush.msra.mxu0 0.0
          %2583 = vmatpush.msra.mxu0 0.0
          %2584 = vmatpush.msra.mxu0 0.0
          %2585 = vmatpush.msra.mxu0 0.0
          %2586 = vmatpush.msra.mxu0 0.0
          %2587 = vmatpush.msra.mxu0 0.0
          %2588 = vmatpush.msra.mxu0 0.0
          %2589 = vmatpush.msra.mxu0 0.0
          %2590 = vmatpush.msra.mxu0 0.0
          %2591 = vmatpush.msra.mxu0 0.0
          %2592 = vmatpush.msra.mxu0 0.0
          %2593 = vmatpush.msra.mxu0 0.0
          %2594 = vmatpush.msra.mxu0 0.0
          %2595 = vmatpush.msra.mxu0 0.0
          %2596 = vmatpush.msra.mxu0 %v2211
          %2597 = vmatmul.f32.gmra.mxu0 %v2174
          %v2598 = vpop.f32.mrf.mxu0
          %v2599 = vadd.f32 %v2103, %v2598
          %2600 = vdwg.mxu0
          %2601 = vmatpush.msra.mxu0 0.0
          %2602 = vmatpush.msra.mxu0 0.0
          %2603 = vmatpush.msra.mxu0 0.0
          %2604 = vmatpush.msra.mxu0 0.0
          %2605 = vmatpush.msra.mxu0 0.0
          %2606 = vmatpush.msra.mxu0 0.0
          %2607 = vmatpush.msra.mxu0 0.0
          %2608 = vmatpush.msra.mxu0 0.0
          %2609 = vmatpush.msra.mxu0 0.0
          %2610 = vmatpush.msra.mxu0 0.0
          %2611 = vmatpush.msra.mxu0 0.0
          %2612 = vmatpush.msra.mxu0 0.0
          %2613 = vmatpush.msra.mxu0 0.0
          %2614 = vmatpush.msra.mxu0 0.0
          %2615 = vmatpush.msra.mxu0 0.0
          %2616 = vmatpush.msra.mxu0 %v2213
          %2617 = vmatmul.f32.gmra.mxu0 %v2174
          %v2618 = vpop.f32.mrf.mxu0
          %v2619 = vadd.f32 %v2103, %v2618
          %2620 = vdwg.mxu0
          %2621 = vmatpush.msra.mxu0 0.0
          %2622 = vmatpush.msra.mxu0 0.0
          %2623 = vmatpush.msra.mxu0 0.0
          %2624 = vmatpush.msra.mxu0 0.0
          %2625 = vmatpush.msra.mxu0 0.0
          %2626 = vmatpush.msra.mxu0 0.0
          %2627 = vmatpush.msra.mxu0 0.0
          %2628 = vmatpush.msra.mxu0 0.0
          %2629 = vmatpush.msra.mxu0 0.0
          %2630 = vmatpush.msra.mxu0 0.0
          %2631 = vmatpush.msra.mxu0 0.0
          %2632 = vmatpush.msra.mxu0 0.0
          %2633 = vmatpush.msra.mxu0 0.0
          %2634 = vmatpush.msra.mxu0 0.0
          %2635 = vmatpush.msra.mxu0 0.0
          %2636 = vmatpush.msra.mxu0 %v2215
          %2637 = vmatmul.f32.gmra.mxu0 %v2174
          %v2638 = vpop.f32.mrf.mxu0
          %v2639 = vadd.f32 %v2103, %v2638
          %2640 = vdwg.mxu0
          %2641 = vmatpush.msra.mxu0 0.0
          %2642 = vmatpush.msra.mxu0 0.0
          %2643 = vmatpush.msra.mxu0 0.0
          %2644 = vmatpush.msra.mxu0 0.0
          %2645 = vmatpush.msra.mxu0 0.0
          %2646 = vmatpush.msra.mxu0 0.0
          %2647 = vmatpush.msra.mxu0 0.0
          %2648 = vmatpush.msra.mxu0 0.0
          %2649 = vmatpush.msra.mxu0 0.0
          %2650 = vmatpush.msra.mxu0 0.0
          %2651 = vmatpush.msra.mxu0 0.0
          %2652 = vmatpush.msra.mxu0 0.0
          %2653 = vmatpush.msra.mxu0 0.0
          %2654 = vmatpush.msra.mxu0 0.0
          %2655 = vmatpush.msra.mxu0 0.0
          %2656 = vmatpush.msra.mxu0 %v2217
          %2657 = vmatmul.f32.gmra.mxu0 %v2174
          %v2658 = vpop.f32.mrf.mxu0
          %v2659 = vadd.f32 %v2103, %v2658
          %2660 = vdwg.mxu0
          %2661 = vmatpush.msra.mxu0 0.0
          %2662 = vmatpush.msra.mxu0 0.0
          %2663 = vmatpush.msra.mxu0 0.0
          %2664 = vmatpush.msra.mxu0 0.0
          %2665 = vmatpush.msra.mxu0 0.0
          %2666 = vmatpush.msra.mxu0 0.0
          %2667 = vmatpush.msra.mxu0 0.0
          %2668 = vmatpush.msra.mxu0 0.0
          %2669 = vmatpush.msra.mxu0 0.0
          %2670 = vmatpush.msra.mxu0 0.0
          %2671 = vmatpush.msra.mxu0 0.0
          %2672 = vmatpush.msra.mxu0 0.0
          %2673 = vmatpush.msra.mxu0 0.0
          %2674 = vmatpush.msra.mxu0 0.0
          %2675 = vmatpush.msra.mxu0 0.0
          %2676 = vmatpush.msra.mxu0 %v2219
          %2677 = vmatmul.f32.gmra.mxu0 %v2174
          %v2678 = vpop.f32.mrf.mxu0
          %v2679 = vadd.f32 %v2103, %v2678
          %2680 = vdwg.mxu0
          %2681 = vmatpush.msra.mxu0 0.0
          %2682 = vmatpush.msra.mxu0 0.0
          %2683 = vmatpush.msra.mxu0 0.0
          %2684 = vmatpush.msra.mxu0 0.0
          %2685 = vmatpush.msra.mxu0 0.0
          %2686 = vmatpush.msra.mxu0 0.0
          %2687 = vmatpush.msra.mxu0 0.0
          %2688 = vmatpush.msra.mxu0 0.0
          %2689 = vmatpush.msra.mxu0 0.0
          %2690 = vmatpush.msra.mxu0 0.0
          %2691 = vmatpush.msra.mxu0 0.0
          %2692 = vmatpush.msra.mxu0 0.0
          %2693 = vmatpush.msra.mxu0 0.0
          %2694 = vmatpush.msra.mxu0 0.0
          %2695 = vmatpush.msra.mxu0 0.0
          %2696 = vmatpush.msra.mxu0 %v2221
          %2697 = vmatmul.f32.gmra.mxu0 %v2174
          %v2698 = vpop.f32.mrf.mxu0
          %v2699 = vadd.f32 %v2103, %v2698
          %2700 = vdwg.mxu0
          %2701 = vmatpush.msra.mxu0 0.0
          %2702 = vmatpush.msra.mxu0 0.0
          %2703 = vmatpush.msra.mxu0 0.0
          %2704 = vmatpush.msra.mxu0 0.0
          %2705 = vmatpush.msra.mxu0 0.0
          %2706 = vmatpush.msra.mxu0 0.0
          %2707 = vmatpush.msra.mxu0 0.0
          %2708 = vmatpush.msra.mxu0 0.0
          %2709 = vmatpush.msra.mxu0 0.0
          %2710 = vmatpush.msra.mxu0 0.0
          %2711 = vmatpush.msra.mxu0 0.0
          %2712 = vmatpush.msra.mxu0 0.0
          %2713 = vmatpush.msra.mxu0 0.0
          %2714 = vmatpush.msra.mxu0 0.0
          %2715 = vmatpush.msra.mxu0 0.0
          %2716 = vmatpush.msra.mxu0 %v2223
          %2717 = vmatmul.f32.gmra.mxu0 %v2174
          %v2718 = vpop.f32.mrf.mxu0
          %v2719 = vadd.f32 %v2103, %v2718
          %2720 = vdwg.mxu0
          %2721 = vmatpush.msra.mxu0 0.0
          %2722 = vmatpush.msra.mxu0 0.0
          %2723 = vmatpush.msra.mxu0 0.0
          %2724 = vmatpush.msra.mxu0 0.0
          %2725 = vmatpush.msra.mxu0 0.0
          %2726 = vmatpush.msra.mxu0 0.0
          %2727 = vmatpush.msra.mxu0 0.0
          %2728 = vmatpush.msra.mxu0 0.0
          %2729 = vmatpush.msra.mxu0 0.0
          %2730 = vmatpush.msra.mxu0 0.0
          %2731 = vmatpush.msra.mxu0 0.0
          %2732 = vmatpush.msra.mxu0 0.0
          %2733 = vmatpush.msra.mxu0 0.0
          %2734 = vmatpush.msra.mxu0 0.0
          %2735 = vmatpush.msra.mxu0 0.0
          %2736 = vmatpush.msra.mxu0 %v2225
          %2737 = vmatmul.f32.gmra.mxu0 %v2174
          %v2738 = vpop.f32.mrf.mxu0
          %v2739 = vadd.f32 %v2103, %v2738
          %2740 = vdwg.mxu0
          %2741 = vmatpush.msra.mxu0 0.0
          %2742 = vmatpush.msra.mxu0 0.0
          %2743 = vmatpush.msra.mxu0 0.0
          %2744 = vmatpush.msra.mxu0 0.0
          %2745 = vmatpush.msra.mxu0 0.0
          %2746 = vmatpush.msra.mxu0 0.0
          %2747 = vmatpush.msra.mxu0 0.0
          %2748 = vmatpush.msra.mxu0 0.0
          %2749 = vmatpush.msra.mxu0 0.0
          %2750 = vmatpush.msra.mxu0 0.0
          %2751 = vmatpush.msra.mxu0 0.0
          %2752 = vmatpush.msra.mxu0 0.0
          %2753 = vmatpush.msra.mxu0 0.0
          %2754 = vmatpush.msra.mxu0 0.0
          %2755 = vmatpush.msra.mxu0 0.0
          %2756 = vmatpush.msra.mxu0 %v2227
          %2757 = vmatmul.f32.gmra.mxu0 %v2174
          %v2758 = vpop.f32.mrf.mxu0
          %v2759 = vadd.f32 %v2103, %v2758
          %2760 = vdwg.mxu0
          %2761 = vmatpush.msra.mxu0 0.0
          %2762 = vmatpush.msra.mxu0 0.0
          %2763 = vmatpush.msra.mxu0 0.0
          %2764 = vmatpush.msra.mxu0 0.0
          %2765 = vmatpush.msra.mxu0 0.0
          %2766 = vmatpush.msra.mxu0 0.0
          %2767 = vmatpush.msra.mxu0 0.0
          %2768 = vmatpush.msra.mxu0 0.0
          %2769 = vmatpush.msra.mxu0 0.0
          %2770 = vmatpush.msra.mxu0 0.0
          %2771 = vmatpush.msra.mxu0 0.0
          %2772 = vmatpush.msra.mxu0 0.0
          %2773 = vmatpush.msra.mxu0 0.0
          %2774 = vmatpush.msra.mxu0 0.0
          %2775 = vmatpush.msra.mxu0 0.0
          %2776 = vmatpush.msra.mxu0 %v2229
          %2777 = vmatmul.f32.gmra.mxu0 %v2174
          %v2778 = vpop.f32.mrf.mxu0
          %v2779 = vadd.f32 %v2103, %v2778
          %2780 = vdwg.mxu0
          %2781 = vmatpush.msra.mxu0 0.0
          %2782 = vmatpush.msra.mxu0 0.0
          %2783 = vmatpush.msra.mxu0 0.0
          %2784 = vmatpush.msra.mxu0 0.0
          %2785 = vmatpush.msra.mxu0 0.0
          %2786 = vmatpush.msra.mxu0 0.0
          %2787 = vmatpush.msra.mxu0 0.0
          %2788 = vmatpush.msra.mxu0 0.0
          %2789 = vmatpush.msra.mxu0 0.0
          %2790 = vmatpush.msra.mxu0 0.0
          %2791 = vmatpush.msra.mxu0 0.0
          %2792 = vmatpush.msra.mxu0 0.0
          %2793 = vmatpush.msra.mxu0 0.0
          %2794 = vmatpush.msra.mxu0 0.0
          %2795 = vmatpush.msra.mxu0 0.0
          %2796 = vmatpush.msra.mxu0 %v2231
          %2797 = vmatmul.f32.gmra.mxu0 %v2174
          %v2798 = vpop.f32.mrf.mxu0
          %v2799 = vadd.f32 %v2103, %v2798
          %2800 = vdwg.mxu0
          %2801 = vmatpush.msra.mxu0 0.0
          %2802 = vmatpush.msra.mxu0 0.0
          %2803 = vmatpush.msra.mxu0 0.0
          %2804 = vmatpush.msra.mxu0 0.0
          %2805 = vmatpush.msra.mxu0 0.0
          %2806 = vmatpush.msra.mxu0 0.0
          %2807 = vmatpush.msra.mxu0 0.0
          %2808 = vmatpush.msra.mxu0 0.0
          %2809 = vmatpush.msra.mxu0 0.0
          %2810 = vmatpush.msra.mxu0 0.0
          %2811 = vmatpush.msra.mxu0 0.0
          %2812 = vmatpush.msra.mxu0 0.0
          %2813 = vmatpush.msra.mxu0 0.0
          %2814 = vmatpush.msra.mxu0 0.0
          %2815 = vmatpush.msra.mxu0 0.0
          %2816 = vmatpush.msra.mxu0 %v2233
          %2817 = vmatmul.f32.gmra.mxu0 %v2174
          %v2818 = vpop.f32.mrf.mxu0
          %v2819 = vadd.f32 %v2103, %v2818
          %2820 = vdwg.mxu0
          %2821 = vmatpush.msra.mxu0 0.0
          %2822 = vmatpush.msra.mxu0 0.0
          %2823 = vmatpush.msra.mxu0 0.0
          %2824 = vmatpush.msra.mxu0 0.0
          %2825 = vmatpush.msra.mxu0 0.0
          %2826 = vmatpush.msra.mxu0 0.0
          %2827 = vmatpush.msra.mxu0 0.0
          %2828 = vmatpush.msra.mxu0 0.0
          %2829 = vmatpush.msra.mxu0 0.0
          %2830 = vmatpush.msra.mxu0 0.0
          %2831 = vmatpush.msra.mxu0 0.0
          %2832 = vmatpush.msra.mxu0 0.0
          %2833 = vmatpush.msra.mxu0 0.0
          %2834 = vmatpush.msra.mxu0 0.0
          %2835 = vmatpush.msra.mxu0 0.0
          %2836 = vmatpush.msra.mxu0 %v2235
          %2837 = vmatmul.f32.gmra.mxu0 %v2174
          %v2838 = vpop.f32.mrf.mxu0
          %v2839 = vadd.f32 %v2103, %v2838
          %2840 = vdwg.mxu0
          %2841 = vmatpush.msra.mxu0 0.0
          %2842 = vmatpush.msra.mxu0 0.0
          %2843 = vmatpush.msra.mxu0 0.0
          %2844 = vmatpush.msra.mxu0 0.0
          %2845 = vmatpush.msra.mxu0 0.0
          %2846 = vmatpush.msra.mxu0 0.0
          %2847 = vmatpush.msra.mxu0 0.0
          %2848 = vmatpush.msra.mxu0 0.0
          %2849 = vmatpush.msra.mxu0 0.0
          %2850 = vmatpush.msra.mxu0 0.0
          %2851 = vmatpush.msra.mxu0 0.0
          %2852 = vmatpush.msra.mxu0 0.0
          %2853 = vmatpush.msra.mxu0 0.0
          %2854 = vmatpush.msra.mxu0 0.0
          %2855 = vmatpush.msra.mxu0 0.0
          %2856 = vmatpush.msra.mxu0 %v2237
          %2857 = vmatmul.f32.gmra.mxu0 %v2174
          %v2858 = vpop.f32.mrf.mxu0
          %v2859 = vadd.f32 %v2103, %v2858
          %2860 = vdwg.mxu0
          %2861 = vmatpush.msra.mxu0 0.0
          %2862 = vmatpush.msra.mxu0 0.0
          %2863 = vmatpush.msra.mxu0 0.0
          %2864 = vmatpush.msra.mxu0 0.0
          %2865 = vmatpush.msra.mxu0 0.0
          %2866 = vmatpush.msra.mxu0 0.0
          %2867 = vmatpush.msra.mxu0 0.0
          %2868 = vmatpush.msra.mxu0 0.0
          %2869 = vmatpush.msra.mxu0 0.0
          %2870 = vmatpush.msra.mxu0 0.0
          %2871 = vmatpush.msra.mxu0 0.0
          %2872 = vmatpush.msra.mxu0 0.0
          %2873 = vmatpush.msra.mxu0 0.0
          %2874 = vmatpush.msra.mxu0 0.0
          %2875 = vmatpush.msra.mxu0 0.0
          %2876 = vmatpush.msra.mxu0 %v2239
          %2877 = vmatmul.f32.gmra.mxu0 %v2174
          %v2878 = vpop.f32.mrf.mxu0
          %v2879 = vadd.f32 %v2103, %v2878
          %2880 = vdwg.mxu0
          %v2881 = vmax.f32 %v2259, 0.0
          %v2882 = vmax.f32 %v2279, 0.0
          %v2883 = vmax.f32 %v2299, 0.0
          %v2884 = vmax.f32 %v2319, 0.0
          %v2885 = vmax.f32 %v2339, 0.0
          %v2886 = vmax.f32 %v2359, 0.0
          %v2887 = vmax.f32 %v2379, 0.0
          %v2888 = vmax.f32 %v2399, 0.0
          %v2889 = vmax.f32 %v2419, 0.0
          %v2890 = vmax.f32 %v2439, 0.0
          %v2891 = vmax.f32 %v2459, 0.0
          %v2892 = vmax.f32 %v2479, 0.0
          %v2893 = vmax.f32 %v2499, 0.0
          %v2894 = vmax.f32 %v2519, 0.0
          %v2895 = vmax.f32 %v2539, 0.0
          %v2896 = vmax.f32 %v2559, 0.0
          %v2897 = vmax.f32 %v2579, 0.0
          %v2898 = vmax.f32 %v2599, 0.0
          %v2899 = vmax.f32 %v2619, 0.0
          %v2900 = vmax.f32 %v2639, 0.0
          %v2901 = vmax.f32 %v2659, 0.0
          %v2902 = vmax.f32 %v2679, 0.0
          %v2903 = vmax.f32 %v2699, 0.0
          %v2904 = vmax.f32 %v2719, 0.0
          %v2905 = vmax.f32 %v2739, 0.0
          %v2906 = vmax.f32 %v2759, 0.0
          %v2907 = vmax.f32 %v2779, 0.0
          %v2908 = vmax.f32 %v2799, 0.0
          %v2909 = vmax.f32 %v2819, 0.0
          %v2910 = vmax.f32 %v2839, 0.0
          %v2911 = vmax.f32 %v2859, 0.0
          %v2912 = vmax.f32 %v2879, 0.0
          %2913 = vst [vmem:[%s230] sm:$0xff] %v2881
          %2914 = vst [vmem:[%s230 + $0x8] sm:$0xff] %v2882
          %2915 = vst [vmem:[%s230 + $0x10] sm:$0xff] %v2883
          %2916 = vst [vmem:[%s230 + $0x18] sm:$0xff] %v2884
          %2917 = vst [vmem:[%s230 + $0x20] sm:$0xff] %v2885
          %2918 = vst [vmem:[%s230 + $0x28] sm:$0xff] %v2886
          %2919 = vst [vmem:[%s230 + $0x30] sm:$0xff] %v2887
          %2920 = vst [vmem:[%s230 + $0x38] sm:$0xff] %v2888
          %2921 = vst [vmem:[%s230 + $0x40] sm:$0xff] %v2889
          %2922 = vst [vmem:[%s230 + $0x48] sm:$0xff] %v2890
          %2923 = vst [vmem:[%s230 + $0x50] sm:$0xff] %v2891
          %2924 = vst [vmem:[%s230 + $0x58] sm:$0xff] %v2892
          %2925 = vst [vmem:[%s230 + $0x60] sm:$0xff] %v2893
          %2926 = vst [vmem:[%s230 + $0x68] sm:$0xff] %v2894
          %2927 = vst [vmem:[%s230 + $0x70] sm:$0xff] %v2895
          %2928 = vst [vmem:[%s230 + $0x78] sm:$0xff] %v2896
          %2929 = vst [vmem:[%s230 + $0x80] sm:$0xff] %v2897
          %2930 = vst [vmem:[%s230 + $0x88] sm:$0xff] %v2898
          %2931 = vst [vmem:[%s230 + $0x90] sm:$0xff] %v2899
          %2932 = vst [vmem:[%s230 + $0x98] sm:$0xff] %v2900
          %2933 = vst [vmem:[%s230 + $0xa0] sm:$0xff] %v2901
          %2934 = vst [vmem:[%s230 + $0xa8] sm:$0xff] %v2902
          %2935 = vst [vmem:[%s230 + $0xb0] sm:$0xff] %v2903
          %2936 = vst [vmem:[%s230 + $0xb8] sm:$0xff] %v2904
          %2937 = vst [vmem:[%s230 + $0xc0] sm:$0xff] %v2905
          %2938 = vst [vmem:[%s230 + $0xc8] sm:$0xff] %v2906
          %2939 = vst [vmem:[%s230 + $0xd0] sm:$0xff] %v2907
          %2940 = vst [vmem:[%s230 + $0xd8] sm:$0xff] %v2908
          %2941 = vst [vmem:[%s230 + $0xe0] sm:$0xff] %v2909
          %2942 = vst [vmem:[%s230 + $0xe8] sm:$0xff] %v2910
          %2943 = vst [vmem:[%s230 + $0xf0] sm:$0xff] %v2911
          %2944 = vst [vmem:[%s230 + $0xf8] sm:$0xff] %v2912
          %s2945 = scalar_lea.vmem [#allocation6], 128
          %v2946 = vld [vmem:[%s2945] sm:$0xff]
          %v2947 = vld [vmem:[%s2945 + $0x8] sm:$0xff]
          %v2948 = vld [vmem:[%s2945 + $0x10] sm:$0xff]
          %v2949 = vld [vmem:[%s2945 + $0x18] sm:$0xff]
          %v2950 = vld [vmem:[%s2945 + $0x20] sm:$0xff]
          %v2951 = vld [vmem:[%s2945 + $0x28] sm:$0xff]
          %v2952 = vld [vmem:[%s2945 + $0x30] sm:$0xff]
          %v2953 = vld [vmem:[%s2945 + $0x38] sm:$0xff]
          %v2954 = vld [vmem:[%s2945 + $0x40] sm:$0xff]
          %v2955 = vld [vmem:[%s2945 + $0x48] sm:$0xff]
          %v2956 = vld [vmem:[%s2945 + $0x50] sm:$0xff]
          %v2957 = vld [vmem:[%s2945 + $0x58] sm:$0xff]
          %v2958 = vld [vmem:[%s2945 + $0x60] sm:$0xff]
          %v2959 = vld [vmem:[%s2945 + $0x68] sm:$0xff]
          %v2960 = vld [vmem:[%s2945 + $0x70] sm:$0xff]
          %v2961 = vld [vmem:[%s2945 + $0x78] sm:$0xff]
          %2978 = vst [vmem:[#allocation1] ss:$2 sm:$0xff] %v2946
          %s2979 = scalar_lea.vmem [#allocation1], 16
          %2980 = vst [vmem:[%s2979] ss:$2 sm:$0xff] %v2947
          %s2981 = scalar_lea.vmem [#allocation1], 32
          %2982 = vst [vmem:[%s2981] ss:$2 sm:$0xff] %v2948
          %s2983 = scalar_lea.vmem [#allocation1], 48
          %2984 = vst [vmem:[%s2983] ss:$2 sm:$0xff] %v2949
          %v2985 = vld.sshfl [vmem:[#allocation1] sm:$0xff pattern:$0x75316420]
          %v2986 = vld.sshfl [vmem:[#allocation1 + $0x8] sm:$0xff pattern:$0x75316420]
          %v2987 = vld.sshfl [vmem:[#allocation1 + $0x10] sm:$0xff pattern:$0x75316420]
          %v2988 = vld.sshfl [vmem:[#allocation1 + $0x18] sm:$0xff pattern:$0x75316420]
          %v2989 = vld.sshfl [vmem:[#allocation1 + $0x20] sm:$0xff pattern:$0x75316420]
          %v2990 = vld.sshfl [vmem:[#allocation1 + $0x28] sm:$0xff pattern:$0x75316420]
          %v2991 = vld.sshfl [vmem:[#allocation1 + $0x30] sm:$0xff pattern:$0x75316420]
          %v2992 = vld.sshfl [vmem:[#allocation1 + $0x38] sm:$0xff pattern:$0x75316420]
          %2993 = vst [vmem:[#allocation1] ss:$2 sm:$0xff] %v2950
          %2994 = vst [vmem:[%s2979] ss:$2 sm:$0xff] %v2951
          %2995 = vst [vmem:[%s2981] ss:$2 sm:$0xff] %v2952
          %2996 = vst [vmem:[%s2983] ss:$2 sm:$0xff] %v2953
          %v2997 = vld.sshfl [vmem:[#allocation1] sm:$0xff pattern:$0x75316420]
          %v2998 = vld.sshfl [vmem:[#allocation1 + $0x8] sm:$0xff pattern:$0x75316420]
          %v2999 = vld.sshfl [vmem:[#allocation1 + $0x10] sm:$0xff pattern:$0x75316420]
          %v3000 = vld.sshfl [vmem:[#allocation1 + $0x18] sm:$0xff pattern:$0x75316420]
          %v3001 = vld.sshfl [vmem:[#allocation1 + $0x20] sm:$0xff pattern:$0x75316420]
          %v3002 = vld.sshfl [vmem:[#allocation1 + $0x28] sm:$0xff pattern:$0x75316420]
          %v3003 = vld.sshfl [vmem:[#allocation1 + $0x30] sm:$0xff pattern:$0x75316420]
          %v3004 = vld.sshfl [vmem:[#allocation1 + $0x38] sm:$0xff pattern:$0x75316420]
          %3005 = vst [vmem:[#allocation1] ss:$2 sm:$0xff] %v2954
          %3006 = vst [vmem:[%s2979] ss:$2 sm:$0xff] %v2955
          %3007 = vst [vmem:[%s2981] ss:$2 sm:$0xff] %v2956
          %3008 = vst [vmem:[%s2983] ss:$2 sm:$0xff] %v2957
          %v3009 = vld.sshfl [vmem:[#allocation1] sm:$0xff pattern:$0x75316420]
          %v3010 = vld.sshfl [vmem:[#allocation1 + $0x8] sm:$0xff pattern:$0x75316420]
          %v3011 = vld.sshfl [vmem:[#allocation1 + $0x10] sm:$0xff pattern:$0x75316420]
          %v3012 = vld.sshfl [vmem:[#allocation1 + $0x18] sm:$0xff pattern:$0x75316420]
          %v3013 = vld.sshfl [vmem:[#allocation1 + $0x20] sm:$0xff pattern:$0x75316420]
          %v3014 = vld.sshfl [vmem:[#allocation1 + $0x28] sm:$0xff pattern:$0x75316420]
          %v3015 = vld.sshfl [vmem:[#allocation1 + $0x30] sm:$0xff pattern:$0x75316420]
          %v3016 = vld.sshfl [vmem:[#allocation1 + $0x38] sm:$0xff pattern:$0x75316420]
          %3017 = vst [vmem:[#allocation1] ss:$2 sm:$0xff] %v2958
          %3018 = vst [vmem:[%s2979] ss:$2 sm:$0xff] %v2959
          %3019 = vst [vmem:[%s2981] ss:$2 sm:$0xff] %v2960
          %3020 = vst [vmem:[%s2983] ss:$2 sm:$0xff] %v2961
          %v3021 = vld.sshfl [vmem:[#allocation1] sm:$0xff pattern:$0x75316420]
          %v3022 = vld.sshfl [vmem:[#allocation1 + $0x8] sm:$0xff pattern:$0x75316420]
          %v3023 = vld.sshfl [vmem:[#allocation1 + $0x10] sm:$0xff pattern:$0x75316420]
          %v3024 = vld.sshfl [vmem:[#allocation1 + $0x18] sm:$0xff pattern:$0x75316420]
          %v3025 = vld.sshfl [vmem:[#allocation1 + $0x20] sm:$0xff pattern:$0x75316420]
          %v3026 = vld.sshfl [vmem:[#allocation1 + $0x28] sm:$0xff pattern:$0x75316420]
          %v3027 = vld.sshfl [vmem:[#allocation1 + $0x30] sm:$0xff pattern:$0x75316420]
          %v3028 = vld.sshfl [vmem:[#allocation1 + $0x38] sm:$0xff pattern:$0x75316420]
          %v3029 = vsel %vm2176, %v2985, 0
          %v3031 = vsel %vm2176, %v2986, 0
          %v3033 = vsel %vm2176, %v2987, 0
          %v3035 = vsel %vm2176, %v2988, 0
          %v3037 = vsel %vm2176, %v2989, 0
          %v3039 = vsel %vm2176, %v2990, 0
          %v3041 = vsel %vm2176, %v2991, 0
          %v3043 = vsel %vm2176, %v2992, 0
          %v3045 = vsel %vm2176, %v2997, 0
          %v3047 = vsel %vm2176, %v2998, 0
          %v3049 = vsel %vm2176, %v2999, 0
          %v3051 = vsel %vm2176, %v3000, 0
          %v3053 = vsel %vm2176, %v3001, 0
          %v3055 = vsel %vm2176, %v3002, 0
          %v3057 = vsel %vm2176, %v3003, 0
          %v3059 = vsel %vm2176, %v3004, 0
          %v3061 = vsel %vm2176, %v3009, 0
          %v3063 = vsel %vm2176, %v3010, 0
          %v3065 = vsel %vm2176, %v3011, 0
          %v3067 = vsel %vm2176, %v3012, 0
          %v3069 = vsel %vm2176, %v3013, 0
          %v3071 = vsel %vm2176, %v3014, 0
          %v3073 = vsel %vm2176, %v3015, 0
          %v3075 = vsel %vm2176, %v3016, 0
          %v3077 = vsel %vm2176, %v3021, 0
          %v3079 = vsel %vm2176, %v3022, 0
          %v3081 = vsel %vm2176, %v3023, 0
          %v3083 = vsel %vm2176, %v3024, 0
          %v3085 = vsel %vm2176, %v3025, 0
          %v3087 = vsel %vm2176, %v3026, 0
          %v3089 = vsel %vm2176, %v3027, 0
          %v3091 = vsel %vm2176, %v3028, 0
          %3093 = vmatpush.msra.mxu0 0.0
          %3094 = vmatpush.msra.mxu0 0.0
          %3095 = vmatpush.msra.mxu0 0.0
          %3096 = vmatpush.msra.mxu0 0.0
          %3097 = vmatpush.msra.mxu0 0.0
          %3098 = vmatpush.msra.mxu0 0.0
          %3099 = vmatpush.msra.mxu0 0.0
          %3100 = vmatpush.msra.mxu0 0.0
          %3101 = vmatpush.msra.mxu0 0.0
          %3102 = vmatpush.msra.mxu0 0.0
          %3103 = vmatpush.msra.mxu0 0.0
          %3104 = vmatpush.msra.mxu0 0.0
          %3105 = vmatpush.msra.mxu0 0.0
          %3106 = vmatpush.msra.mxu0 0.0
          %3107 = vmatpush.msra.mxu0 0.0
          %3108 = vmatpush.msra.mxu0 %v3029
          %3109 = vmatmul.f32.gmra.mxu0 %v2174
          %v3110 = vpop.f32.mrf.mxu0
          %v3111 = vadd.f32 %v2103, %v3110
          %3112 = vdwg.mxu0
          %3113 = vmatpush.msra.mxu0 0.0
          %3114 = vmatpush.msra.mxu0 0.0
          %3115 = vmatpush.msra.mxu0 0.0
          %3116 = vmatpush.msra.mxu0 0.0
          %3117 = vmatpush.msra.mxu0 0.0
          %3118 = vmatpush.msra.mxu0 0.0
          %3119 = vmatpush.msra.mxu0 0.0
          %3120 = vmatpush.msra.mxu0 0.0
          %3121 = vmatpush.msra.mxu0 0.0
          %3122 = vmatpush.msra.mxu0 0.0
          %3123 = vmatpush.msra.mxu0 0.0
          %3124 = vmatpush.msra.mxu0 0.0
          %3125 = vmatpush.msra.mxu0 0.0
          %3126 = vmatpush.msra.mxu0 0.0
          %3127 = vmatpush.msra.mxu0 0.0
          %3128 = vmatpush.msra.mxu0 %v3031
          %3129 = vmatmul.f32.gmra.mxu0 %v2174
          %v3130 = vpop.f32.mrf.mxu0
          %v3131 = vadd.f32 %v2103, %v3130
          %3132 = vdwg.mxu0
          %3133 = vmatpush.msra.mxu0 0.0
          %3134 = vmatpush.msra.mxu0 0.0
          %3135 = vmatpush.msra.mxu0 0.0
          %3136 = vmatpush.msra.mxu0 0.0
          %3137 = vmatpush.msra.mxu0 0.0
          %3138 = vmatpush.msra.mxu0 0.0
          %3139 = vmatpush.msra.mxu0 0.0
          %3140 = vmatpush.msra.mxu0 0.0
          %3141 = vmatpush.msra.mxu0 0.0
          %3142 = vmatpush.msra.mxu0 0.0
          %3143 = vmatpush.msra.mxu0 0.0
          %3144 = vmatpush.msra.mxu0 0.0
          %3145 = vmatpush.msra.mxu0 0.0
          %3146 = vmatpush.msra.mxu0 0.0
          %3147 = vmatpush.msra.mxu0 0.0
          %3148 = vmatpush.msra.mxu0 %v3033
          %3149 = vmatmul.f32.gmra.mxu0 %v2174
          %v3150 = vpop.f32.mrf.mxu0
          %v3151 = vadd.f32 %v2103, %v3150
          %3152 = vdwg.mxu0
          %3153 = vmatpush.msra.mxu0 0.0
          %3154 = vmatpush.msra.mxu0 0.0
          %3155 = vmatpush.msra.mxu0 0.0
          %3156 = vmatpush.msra.mxu0 0.0
          %3157 = vmatpush.msra.mxu0 0.0
          %3158 = vmatpush.msra.mxu0 0.0
          %3159 = vmatpush.msra.mxu0 0.0
          %3160 = vmatpush.msra.mxu0 0.0
          %3161 = vmatpush.msra.mxu0 0.0
          %3162 = vmatpush.msra.mxu0 0.0
          %3163 = vmatpush.msra.mxu0 0.0
          %3164 = vmatpush.msra.mxu0 0.0
          %3165 = vmatpush.msra.mxu0 0.0
          %3166 = vmatpush.msra.mxu0 0.0
          %3167 = vmatpush.msra.mxu0 0.0
          %3168 = vmatpush.msra.mxu0 %v3035
          %3169 = vmatmul.f32.gmra.mxu0 %v2174
          %v3170 = vpop.f32.mrf.mxu0
          %v3171 = vadd.f32 %v2103, %v3170
          %3172 = vdwg.mxu0
          %3173 = vmatpush.msra.mxu0 0.0
          %3174 = vmatpush.msra.mxu0 0.0
          %3175 = vmatpush.msra.mxu0 0.0
          %3176 = vmatpush.msra.mxu0 0.0
          %3177 = vmatpush.msra.mxu0 0.0
          %3178 = vmatpush.msra.mxu0 0.0
          %3179 = vmatpush.msra.mxu0 0.0
          %3180 = vmatpush.msra.mxu0 0.0
          %3181 = vmatpush.msra.mxu0 0.0
          %3182 = vmatpush.msra.mxu0 0.0
          %3183 = vmatpush.msra.mxu0 0.0
          %3184 = vmatpush.msra.mxu0 0.0
          %3185 = vmatpush.msra.mxu0 0.0
          %3186 = vmatpush.msra.mxu0 0.0
          %3187 = vmatpush.msra.mxu0 0.0
          %3188 = vmatpush.msra.mxu0 %v3037
          %3189 = vmatmul.f32.gmra.mxu0 %v2174
          %v3190 = vpop.f32.mrf.mxu0
          %v3191 = vadd.f32 %v2103, %v3190
          %3192 = vdwg.mxu0
          %3193 = vmatpush.msra.mxu0 0.0
          %3194 = vmatpush.msra.mxu0 0.0
          %3195 = vmatpush.msra.mxu0 0.0
          %3196 = vmatpush.msra.mxu0 0.0
          %3197 = vmatpush.msra.mxu0 0.0
          %3198 = vmatpush.msra.mxu0 0.0
          %3199 = vmatpush.msra.mxu0 0.0
          %3200 = vmatpush.msra.mxu0 0.0
          %3201 = vmatpush.msra.mxu0 0.0
          %3202 = vmatpush.msra.mxu0 0.0
          %3203 = vmatpush.msra.mxu0 0.0
          %3204 = vmatpush.msra.mxu0 0.0
          %3205 = vmatpush.msra.mxu0 0.0
          %3206 = vmatpush.msra.mxu0 0.0
          %3207 = vmatpush.msra.mxu0 0.0
          %3208 = vmatpush.msra.mxu0 %v3039
          %3209 = vmatmul.f32.gmra.mxu0 %v2174
          %v3210 = vpop.f32.mrf.mxu0
          %v3211 = vadd.f32 %v2103, %v3210
          %3212 = vdwg.mxu0
          %3213 = vmatpush.msra.mxu0 0.0
          %3214 = vmatpush.msra.mxu0 0.0
          %3215 = vmatpush.msra.mxu0 0.0
          %3216 = vmatpush.msra.mxu0 0.0
          %3217 = vmatpush.msra.mxu0 0.0
          %3218 = vmatpush.msra.mxu0 0.0
          %3219 = vmatpush.msra.mxu0 0.0
          %3220 = vmatpush.msra.mxu0 0.0
          %3221 = vmatpush.msra.mxu0 0.0
          %3222 = vmatpush.msra.mxu0 0.0
          %3223 = vmatpush.msra.mxu0 0.0
          %3224 = vmatpush.msra.mxu0 0.0
          %3225 = vmatpush.msra.mxu0 0.0
          %3226 = vmatpush.msra.mxu0 0.0
          %3227 = vmatpush.msra.mxu0 0.0
          %3228 = vmatpush.msra.mxu0 %v3041
          %3229 = vmatmul.f32.gmra.mxu0 %v2174
          %v3230 = vpop.f32.mrf.mxu0
          %v3231 = vadd.f32 %v2103, %v3230
          %3232 = vdwg.mxu0
          %3233 = vmatpush.msra.mxu0 0.0
          %3234 = vmatpush.msra.mxu0 0.0
          %3235 = vmatpush.msra.mxu0 0.0
          %3236 = vmatpush.msra.mxu0 0.0
          %3237 = vmatpush.msra.mxu0 0.0
          %3238 = vmatpush.msra.mxu0 0.0
          %3239 = vmatpush.msra.mxu0 0.0
          %3240 = vmatpush.msra.mxu0 0.0
          %3241 = vmatpush.msra.mxu0 0.0
          %3242 = vmatpush.msra.mxu0 0.0
          %3243 = vmatpush.msra.mxu0 0.0
          %3244 = vmatpush.msra.mxu0 0.0
          %3245 = vmatpush.msra.mxu0 0.0
          %3246 = vmatpush.msra.mxu0 0.0
          %3247 = vmatpush.msra.mxu0 0.0
          %3248 = vmatpush.msra.mxu0 %v3043
          %3249 = vmatmul.f32.gmra.mxu0 %v2174
          %v3250 = vpop.f32.mrf.mxu0
          %v3251 = vadd.f32 %v2103, %v3250
          %3252 = vdwg.mxu0
          %3253 = vmatpush.msra.mxu0 0.0
          %3254 = vmatpush.msra.mxu0 0.0
          %3255 = vmatpush.msra.mxu0 0.0
          %3256 = vmatpush.msra.mxu0 0.0
          %3257 = vmatpush.msra.mxu0 0.0
          %3258 = vmatpush.msra.mxu0 0.0
          %3259 = vmatpush.msra.mxu0 0.0
          %3260 = vmatpush.msra.mxu0 0.0
          %3261 = vmatpush.msra.mxu0 0.0
          %3262 = vmatpush.msra.mxu0 0.0
          %3263 = vmatpush.msra.mxu0 0.0
          %3264 = vmatpush.msra.mxu0 0.0
          %3265 = vmatpush.msra.mxu0 0.0
          %3266 = vmatpush.msra.mxu0 0.0
          %3267 = vmatpush.msra.mxu0 0.0
          %3268 = vmatpush.msra.mxu0 %v3045
          %3269 = vmatmul.f32.gmra.mxu0 %v2174
          %v3270 = vpop.f32.mrf.mxu0
          %v3271 = vadd.f32 %v2103, %v3270
          %3272 = vdwg.mxu0
          %3273 = vmatpush.msra.mxu0 0.0
          %3274 = vmatpush.msra.mxu0 0.0
          %3275 = vmatpush.msra.mxu0 0.0
          %3276 = vmatpush.msra.mxu0 0.0
          %3277 = vmatpush.msra.mxu0 0.0
          %3278 = vmatpush.msra.mxu0 0.0
          %3279 = vmatpush.msra.mxu0 0.0
          %3280 = vmatpush.msra.mxu0 0.0
          %3281 = vmatpush.msra.mxu0 0.0
          %3282 = vmatpush.msra.mxu0 0.0
          %3283 = vmatpush.msra.mxu0 0.0
          %3284 = vmatpush.msra.mxu0 0.0
          %3285 = vmatpush.msra.mxu0 0.0
          %3286 = vmatpush.msra.mxu0 0.0
          %3287 = vmatpush.msra.mxu0 0.0
          %3288 = vmatpush.msra.mxu0 %v3047
          %3289 = vmatmul.f32.gmra.mxu0 %v2174
          %v3290 = vpop.f32.mrf.mxu0
          %v3291 = vadd.f32 %v2103, %v3290
          %3292 = vdwg.mxu0
          %3293 = vmatpush.msra.mxu0 0.0
          %3294 = vmatpush.msra.mxu0 0.0
          %3295 = vmatpush.msra.mxu0 0.0
          %3296 = vmatpush.msra.mxu0 0.0
          %3297 = vmatpush.msra.mxu0 0.0
          %3298 = vmatpush.msra.mxu0 0.0
          %3299 = vmatpush.msra.mxu0 0.0
          %3300 = vmatpush.msra.mxu0 0.0
          %3301 = vmatpush.msra.mxu0 0.0
          %3302 = vmatpush.msra.mxu0 0.0
          %3303 = vmatpush.msra.mxu0 0.0
          %3304 = vmatpush.msra.mxu0 0.0
          %3305 = vmatpush.msra.mxu0 0.0
          %3306 = vmatpush.msra.mxu0 0.0
          %3307 = vmatpush.msra.mxu0 0.0
          %3308 = vmatpush.msra.mxu0 %v3049
          %3309 = vmatmul.f32.gmra.mxu0 %v2174
          %v3310 = vpop.f32.mrf.mxu0
          %v3311 = vadd.f32 %v2103, %v3310
          %3312 = vdwg.mxu0
          %3313 = vmatpush.msra.mxu0 0.0
          %3314 = vmatpush.msra.mxu0 0.0
          %3315 = vmatpush.msra.mxu0 0.0
          %3316 = vmatpush.msra.mxu0 0.0
          %3317 = vmatpush.msra.mxu0 0.0
          %3318 = vmatpush.msra.mxu0 0.0
          %3319 = vmatpush.msra.mxu0 0.0
          %3320 = vmatpush.msra.mxu0 0.0
          %3321 = vmatpush.msra.mxu0 0.0
          %3322 = vmatpush.msra.mxu0 0.0
          %3323 = vmatpush.msra.mxu0 0.0
          %3324 = vmatpush.msra.mxu0 0.0
          %3325 = vmatpush.msra.mxu0 0.0
          %3326 = vmatpush.msra.mxu0 0.0
          %3327 = vmatpush.msra.mxu0 0.0
          %3328 = vmatpush.msra.mxu0 %v3051
          %3329 = vmatmul.f32.gmra.mxu0 %v2174
          %v3330 = vpop.f32.mrf.mxu0
          %v3331 = vadd.f32 %v2103, %v3330
          %3332 = vdwg.mxu0
          %3333 = vmatpush.msra.mxu0 0.0
          %3334 = vmatpush.msra.mxu0 0.0
          %3335 = vmatpush.msra.mxu0 0.0
          %3336 = vmatpush.msra.mxu0 0.0
          %3337 = vmatpush.msra.mxu0 0.0
          %3338 = vmatpush.msra.mxu0 0.0
          %3339 = vmatpush.msra.mxu0 0.0
          %3340 = vmatpush.msra.mxu0 0.0
          %3341 = vmatpush.msra.mxu0 0.0
          %3342 = vmatpush.msra.mxu0 0.0
          %3343 = vmatpush.msra.mxu0 0.0
          %3344 = vmatpush.msra.mxu0 0.0
          %3345 = vmatpush.msra.mxu0 0.0
          %3346 = vmatpush.msra.mxu0 0.0
          %3347 = vmatpush.msra.mxu0 0.0
          %3348 = vmatpush.msra.mxu0 %v3053
          %3349 = vmatmul.f32.gmra.mxu0 %v2174
          %v3350 = vpop.f32.mrf.mxu0
          %v3351 = vadd.f32 %v2103, %v3350
          %3352 = vdwg.mxu0
          %3353 = vmatpush.msra.mxu0 0.0
          %3354 = vmatpush.msra.mxu0 0.0
          %3355 = vmatpush.msra.mxu0 0.0
          %3356 = vmatpush.msra.mxu0 0.0
          %3357 = vmatpush.msra.mxu0 0.0
          %3358 = vmatpush.msra.mxu0 0.0
          %3359 = vmatpush.msra.mxu0 0.0
          %3360 = vmatpush.msra.mxu0 0.0
          %3361 = vmatpush.msra.mxu0 0.0
          %3362 = vmatpush.msra.mxu0 0.0
          %3363 = vmatpush.msra.mxu0 0.0
          %3364 = vmatpush.msra.mxu0 0.0
          %3365 = vmatpush.msra.mxu0 0.0
          %3366 = vmatpush.msra.mxu0 0.0
          %3367 = vmatpush.msra.mxu0 0.0
          %3368 = vmatpush.msra.mxu0 %v3055
          %3369 = vmatmul.f32.gmra.mxu0 %v2174
          %v3370 = vpop.f32.mrf.mxu0
          %v3371 = vadd.f32 %v2103, %v3370
          %3372 = vdwg.mxu0
          %3373 = vmatpush.msra.mxu0 0.0
          %3374 = vmatpush.msra.mxu0 0.0
          %3375 = vmatpush.msra.mxu0 0.0
          %3376 = vmatpush.msra.mxu0 0.0
          %3377 = vmatpush.msra.mxu0 0.0
          %3378 = vmatpush.msra.mxu0 0.0
          %3379 = vmatpush.msra.mxu0 0.0
          %3380 = vmatpush.msra.mxu0 0.0
          %3381 = vmatpush.msra.mxu0 0.0
          %3382 = vmatpush.msra.mxu0 0.0
          %3383 = vmatpush.msra.mxu0 0.0
          %3384 = vmatpush.msra.mxu0 0.0
          %3385 = vmatpush.msra.mxu0 0.0
          %3386 = vmatpush.msra.mxu0 0.0
          %3387 = vmatpush.msra.mxu0 0.0
          %3388 = vmatpush.msra.mxu0 %v3057
          %3389 = vmatmul.f32.gmra.mxu0 %v2174
          %v3390 = vpop.f32.mrf.mxu0
          %v3391 = vadd.f32 %v2103, %v3390
          %3392 = vdwg.mxu0
          %3393 = vmatpush.msra.mxu0 0.0
          %3394 = vmatpush.msra.mxu0 0.0
          %3395 = vmatpush.msra.mxu0 0.0
          %3396 = vmatpush.msra.mxu0 0.0
          %3397 = vmatpush.msra.mxu0 0.0
          %3398 = vmatpush.msra.mxu0 0.0
          %3399 = vmatpush.msra.mxu0 0.0
          %3400 = vmatpush.msra.mxu0 0.0
          %3401 = vmatpush.msra.mxu0 0.0
          %3402 = vmatpush.msra.mxu0 0.0
          %3403 = vmatpush.msra.mxu0 0.0
          %3404 = vmatpush.msra.mxu0 0.0
          %3405 = vmatpush.msra.mxu0 0.0
          %3406 = vmatpush.msra.mxu0 0.0
          %3407 = vmatpush.msra.mxu0 0.0
          %3408 = vmatpush.msra.mxu0 %v3059
          %3409 = vmatmul.f32.gmra.mxu0 %v2174
          %v3410 = vpop.f32.mrf.mxu0
          %v3411 = vadd.f32 %v2103, %v3410
          %3412 = vdwg.mxu0
          %3413 = vmatpush.msra.mxu0 0.0
          %3414 = vmatpush.msra.mxu0 0.0
          %3415 = vmatpush.msra.mxu0 0.0
          %3416 = vmatpush.msra.mxu0 0.0
          %3417 = vmatpush.msra.mxu0 0.0
          %3418 = vmatpush.msra.mxu0 0.0
          %3419 = vmatpush.msra.mxu0 0.0
          %3420 = vmatpush.msra.mxu0 0.0
          %3421 = vmatpush.msra.mxu0 0.0
          %3422 = vmatpush.msra.mxu0 0.0
          %3423 = vmatpush.msra.mxu0 0.0
          %3424 = vmatpush.msra.mxu0 0.0
          %3425 = vmatpush.msra.mxu0 0.0
          %3426 = vmatpush.msra.mxu0 0.0
          %3427 = vmatpush.msra.mxu0 0.0
          %3428 = vmatpush.msra.mxu0 %v3061
          %3429 = vmatmul.f32.gmra.mxu0 %v2174
          %v3430 = vpop.f32.mrf.mxu0
          %v3431 = vadd.f32 %v2103, %v3430
          %3432 = vdwg.mxu0
          %3433 = vmatpush.msra.mxu0 0.0
          %3434 = vmatpush.msra.mxu0 0.0
          %3435 = vmatpush.msra.mxu0 0.0
          %3436 = vmatpush.msra.mxu0 0.0
          %3437 = vmatpush.msra.mxu0 0.0
          %3438 = vmatpush.msra.mxu0 0.0
          %3439 = vmatpush.msra.mxu0 0.0
          %3440 = vmatpush.msra.mxu0 0.0
          %3441 = vmatpush.msra.mxu0 0.0
          %3442 = vmatpush.msra.mxu0 0.0
          %3443 = vmatpush.msra.mxu0 0.0
          %3444 = vmatpush.msra.mxu0 0.0
          %3445 = vmatpush.msra.mxu0 0.0
          %3446 = vmatpush.msra.mxu0 0.0
          %3447 = vmatpush.msra.mxu0 0.0
          %3448 = vmatpush.msra.mxu0 %v3063
          %3449 = vmatmul.f32.gmra.mxu0 %v2174
          %v3450 = vpop.f32.mrf.mxu0
          %v3451 = vadd.f32 %v2103, %v3450
          %3452 = vdwg.mxu0
          %3453 = vmatpush.msra.mxu0 0.0
          %3454 = vmatpush.msra.mxu0 0.0
          %3455 = vmatpush.msra.mxu0 0.0
          %3456 = vmatpush.msra.mxu0 0.0
          %3457 = vmatpush.msra.mxu0 0.0
          %3458 = vmatpush.msra.mxu0 0.0
          %3459 = vmatpush.msra.mxu0 0.0
          %3460 = vmatpush.msra.mxu0 0.0
          %3461 = vmatpush.msra.mxu0 0.0
          %3462 = vmatpush.msra.mxu0 0.0
          %3463 = vmatpush.msra.mxu0 0.0
          %3464 = vmatpush.msra.mxu0 0.0
          %3465 = vmatpush.msra.mxu0 0.0
          %3466 = vmatpush.msra.mxu0 0.0
          %3467 = vmatpush.msra.mxu0 0.0
          %3468 = vmatpush.msra.mxu0 %v3065
          %3469 = vmatmul.f32.gmra.mxu0 %v2174
          %v3470 = vpop.f32.mrf.mxu0
          %v3471 = vadd.f32 %v2103, %v3470
          %3472 = vdwg.mxu0
          %3473 = vmatpush.msra.mxu0 0.0
          %3474 = vmatpush.msra.mxu0 0.0
          %3475 = vmatpush.msra.mxu0 0.0
          %3476 = vmatpush.msra.mxu0 0.0
          %3477 = vmatpush.msra.mxu0 0.0
          %3478 = vmatpush.msra.mxu0 0.0
          %3479 = vmatpush.msra.mxu0 0.0
          %3480 = vmatpush.msra.mxu0 0.0
          %3481 = vmatpush.msra.mxu0 0.0
          %3482 = vmatpush.msra.mxu0 0.0
          %3483 = vmatpush.msra.mxu0 0.0
          %3484 = vmatpush.msra.mxu0 0.0
          %3485 = vmatpush.msra.mxu0 0.0
          %3486 = vmatpush.msra.mxu0 0.0
          %3487 = vmatpush.msra.mxu0 0.0
          %3488 = vmatpush.msra.mxu0 %v3067
          %3489 = vmatmul.f32.gmra.mxu0 %v2174
          %v3490 = vpop.f32.mrf.mxu0
          %v3491 = vadd.f32 %v2103, %v3490
          %3492 = vdwg.mxu0
          %3493 = vmatpush.msra.mxu0 0.0
          %3494 = vmatpush.msra.mxu0 0.0
          %3495 = vmatpush.msra.mxu0 0.0
          %3496 = vmatpush.msra.mxu0 0.0
          %3497 = vmatpush.msra.mxu0 0.0
          %3498 = vmatpush.msra.mxu0 0.0
          %3499 = vmatpush.msra.mxu0 0.0
          %3500 = vmatpush.msra.mxu0 0.0
          %3501 = vmatpush.msra.mxu0 0.0
          %3502 = vmatpush.msra.mxu0 0.0
          %3503 = vmatpush.msra.mxu0 0.0
          %3504 = vmatpush.msra.mxu0 0.0
          %3505 = vmatpush.msra.mxu0 0.0
          %3506 = vmatpush.msra.mxu0 0.0
          %3507 = vmatpush.msra.mxu0 0.0
          %3508 = vmatpush.msra.mxu0 %v3069
          %3509 = vmatmul.f32.gmra.mxu0 %v2174
          %v3510 = vpop.f32.mrf.mxu0
          %v3511 = vadd.f32 %v2103, %v3510
          %3512 = vdwg.mxu0
          %3513 = vmatpush.msra.mxu0 0.0
          %3514 = vmatpush.msra.mxu0 0.0
          %3515 = vmatpush.msra.mxu0 0.0
          %3516 = vmatpush.msra.mxu0 0.0
          %3517 = vmatpush.msra.mxu0 0.0
          %3518 = vmatpush.msra.mxu0 0.0
          %3519 = vmatpush.msra.mxu0 0.0
          %3520 = vmatpush.msra.mxu0 0.0
          %3521 = vmatpush.msra.mxu0 0.0
          %3522 = vmatpush.msra.mxu0 0.0
          %3523 = vmatpush.msra.mxu0 0.0
          %3524 = vmatpush.msra.mxu0 0.0
          %3525 = vmatpush.msra.mxu0 0.0
          %3526 = vmatpush.msra.mxu0 0.0
          %3527 = vmatpush.msra.mxu0 0.0
          %3528 = vmatpush.msra.mxu0 %v3071
          %3529 = vmatmul.f32.gmra.mxu0 %v2174
          %v3530 = vpop.f32.mrf.mxu0
          %v3531 = vadd.f32 %v2103, %v3530
          %3532 = vdwg.mxu0
          %3533 = vmatpush.msra.mxu0 0.0
          %3534 = vmatpush.msra.mxu0 0.0
          %3535 = vmatpush.msra.mxu0 0.0
          %3536 = vmatpush.msra.mxu0 0.0
          %3537 = vmatpush.msra.mxu0 0.0
          %3538 = vmatpush.msra.mxu0 0.0
          %3539 = vmatpush.msra.mxu0 0.0
          %3540 = vmatpush.msra.mxu0 0.0
          %3541 = vmatpush.msra.mxu0 0.0
          %3542 = vmatpush.msra.mxu0 0.0
          %3543 = vmatpush.msra.mxu0 0.0
          %3544 = vmatpush.msra.mxu0 0.0
          %3545 = vmatpush.msra.mxu0 0.0
          %3546 = vmatpush.msra.mxu0 0.0
          %3547 = vmatpush.msra.mxu0 0.0
          %3548 = vmatpush.msra.mxu0 %v3073
          %3549 = vmatmul.f32.gmra.mxu0 %v2174
          %v3550 = vpop.f32.mrf.mxu0
          %v3551 = vadd.f32 %v2103, %v3550
          %3552 = vdwg.mxu0
          %3553 = vmatpush.msra.mxu0 0.0
          %3554 = vmatpush.msra.mxu0 0.0
          %3555 = vmatpush.msra.mxu0 0.0
          %3556 = vmatpush.msra.mxu0 0.0
          %3557 = vmatpush.msra.mxu0 0.0
          %3558 = vmatpush.msra.mxu0 0.0
          %3559 = vmatpush.msra.mxu0 0.0
          %3560 = vmatpush.msra.mxu0 0.0
          %3561 = vmatpush.msra.mxu0 0.0
          %3562 = vmatpush.msra.mxu0 0.0
          %3563 = vmatpush.msra.mxu0 0.0
          %3564 = vmatpush.msra.mxu0 0.0
          %3565 = vmatpush.msra.mxu0 0.0
          %3566 = vmatpush.msra.mxu0 0.0
          %3567 = vmatpush.msra.mxu0 0.0
          %3568 = vmatpush.msra.mxu0 %v3075
          %3569 = vmatmul.f32.gmra.mxu0 %v2174
          %v3570 = vpop.f32.mrf.mxu0
          %v3571 = vadd.f32 %v2103, %v3570
          %3572 = vdwg.mxu0
          %3573 = vmatpush.msra.mxu0 0.0
          %3574 = vmatpush.msra.mxu0 0.0
          %3575 = vmatpush.msra.mxu0 0.0
          %3576 = vmatpush.msra.mxu0 0.0
          %3577 = vmatpush.msra.mxu0 0.0
          %3578 = vmatpush.msra.mxu0 0.0
          %3579 = vmatpush.msra.mxu0 0.0
          %3580 = vmatpush.msra.mxu0 0.0
          %3581 = vmatpush.msra.mxu0 0.0
          %3582 = vmatpush.msra.mxu0 0.0
          %3583 = vmatpush.msra.mxu0 0.0
          %3584 = vmatpush.msra.mxu0 0.0
          %3585 = vmatpush.msra.mxu0 0.0
          %3586 = vmatpush.msra.mxu0 0.0
          %3587 = vmatpush.msra.mxu0 0.0
          %3588 = vmatpush.msra.mxu0 %v3077
          %3589 = vmatmul.f32.gmra.mxu0 %v2174
          %v3590 = vpop.f32.mrf.mxu0
          %v3591 = vadd.f32 %v2103, %v3590
          %3592 = vdwg.mxu0
          %3593 = vmatpush.msra.mxu0 0.0
          %3594 = vmatpush.msra.mxu0 0.0
          %3595 = vmatpush.msra.mxu0 0.0
          %3596 = vmatpush.msra.mxu0 0.0
          %3597 = vmatpush.msra.mxu0 0.0
          %3598 = vmatpush.msra.mxu0 0.0
          %3599 = vmatpush.msra.mxu0 0.0
          %3600 = vmatpush.msra.mxu0 0.0
          %3601 = vmatpush.msra.mxu0 0.0
          %3602 = vmatpush.msra.mxu0 0.0
          %3603 = vmatpush.msra.mxu0 0.0
          %3604 = vmatpush.msra.mxu0 0.0
          %3605 = vmatpush.msra.mxu0 0.0
          %3606 = vmatpush.msra.mxu0 0.0
          %3607 = vmatpush.msra.mxu0 0.0
          %3608 = vmatpush.msra.mxu0 %v3079
          %3609 = vmatmul.f32.gmra.mxu0 %v2174
          %v3610 = vpop.f32.mrf.mxu0
          %v3611 = vadd.f32 %v2103, %v3610
          %3612 = vdwg.mxu0
          %3613 = vmatpush.msra.mxu0 0.0
          %3614 = vmatpush.msra.mxu0 0.0
          %3615 = vmatpush.msra.mxu0 0.0
          %3616 = vmatpush.msra.mxu0 0.0
          %3617 = vmatpush.msra.mxu0 0.0
          %3618 = vmatpush.msra.mxu0 0.0
          %3619 = vmatpush.msra.mxu0 0.0
          %3620 = vmatpush.msra.mxu0 0.0
          %3621 = vmatpush.msra.mxu0 0.0
          %3622 = vmatpush.msra.mxu0 0.0
          %3623 = vmatpush.msra.mxu0 0.0
          %3624 = vmatpush.msra.mxu0 0.0
          %3625 = vmatpush.msra.mxu0 0.0
          %3626 = vmatpush.msra.mxu0 0.0
          %3627 = vmatpush.msra.mxu0 0.0
          %3628 = vmatpush.msra.mxu0 %v3081
          %3629 = vmatmul.f32.gmra.mxu0 %v2174
          %v3630 = vpop.f32.mrf.mxu0
          %v3631 = vadd.f32 %v2103, %v3630
          %3632 = vdwg.mxu0
          %3633 = vmatpush.msra.mxu0 0.0
          %3634 = vmatpush.msra.mxu0 0.0
          %3635 = vmatpush.msra.mxu0 0.0
          %3636 = vmatpush.msra.mxu0 0.0
          %3637 = vmatpush.msra.mxu0 0.0
          %3638 = vmatpush.msra.mxu0 0.0
          %3639 = vmatpush.msra.mxu0 0.0
          %3640 = vmatpush.msra.mxu0 0.0
          %3641 = vmatpush.msra.mxu0 0.0
          %3642 = vmatpush.msra.mxu0 0.0
          %3643 = vmatpush.msra.mxu0 0.0
          %3644 = vmatpush.msra.mxu0 0.0
          %3645 = vmatpush.msra.mxu0 0.0
          %3646 = vmatpush.msra.mxu0 0.0
          %3647 = vmatpush.msra.mxu0 0.0
          %3648 = vmatpush.msra.mxu0 %v3083
          %3649 = vmatmul.f32.gmra.mxu0 %v2174
          %v3650 = vpop.f32.mrf.mxu0
          %v3651 = vadd.f32 %v2103, %v3650
          %3652 = vdwg.mxu0
          %3653 = vmatpush.msra.mxu0 0.0
          %3654 = vmatpush.msra.mxu0 0.0
          %3655 = vmatpush.msra.mxu0 0.0
          %3656 = vmatpush.msra.mxu0 0.0
          %3657 = vmatpush.msra.mxu0 0.0
          %3658 = vmatpush.msra.mxu0 0.0
          %3659 = vmatpush.msra.mxu0 0.0
          %3660 = vmatpush.msra.mxu0 0.0
          %3661 = vmatpush.msra.mxu0 0.0
          %3662 = vmatpush.msra.mxu0 0.0
          %3663 = vmatpush.msra.mxu0 0.0
          %3664 = vmatpush.msra.mxu0 0.0
          %3665 = vmatpush.msra.mxu0 0.0
          %3666 = vmatpush.msra.mxu0 0.0
          %3667 = vmatpush.msra.mxu0 0.0
          %3668 = vmatpush.msra.mxu0 %v3085
          %3669 = vmatmul.f32.gmra.mxu0 %v2174
          %v3670 = vpop.f32.mrf.mxu0
          %v3671 = vadd.f32 %v2103, %v3670
          %3672 = vdwg.mxu0
          %3673 = vmatpush.msra.mxu0 0.0
          %3674 = vmatpush.msra.mxu0 0.0
          %3675 = vmatpush.msra.mxu0 0.0
          %3676 = vmatpush.msra.mxu0 0.0
          %3677 = vmatpush.msra.mxu0 0.0
          %3678 = vmatpush.msra.mxu0 0.0
          %3679 = vmatpush.msra.mxu0 0.0
          %3680 = vmatpush.msra.mxu0 0.0
          %3681 = vmatpush.msra.mxu0 0.0
          %3682 = vmatpush.msra.mxu0 0.0
          %3683 = vmatpush.msra.mxu0 0.0
          %3684 = vmatpush.msra.mxu0 0.0
          %3685 = vmatpush.msra.mxu0 0.0
          %3686 = vmatpush.msra.mxu0 0.0
          %3687 = vmatpush.msra.mxu0 0.0
          %3688 = vmatpush.msra.mxu0 %v3087
          %3689 = vmatmul.f32.gmra.mxu0 %v2174
          %v3690 = vpop.f32.mrf.mxu0
          %v3691 = vadd.f32 %v2103, %v3690
          %3692 = vdwg.mxu0
          %3693 = vmatpush.msra.mxu0 0.0
          %3694 = vmatpush.msra.mxu0 0.0
          %3695 = vmatpush.msra.mxu0 0.0
          %3696 = vmatpush.msra.mxu0 0.0
          %3697 = vmatpush.msra.mxu0 0.0
          %3698 = vmatpush.msra.mxu0 0.0
          %3699 = vmatpush.msra.mxu0 0.0
          %3700 = vmatpush.msra.mxu0 0.0
          %3701 = vmatpush.msra.mxu0 0.0
          %3702 = vmatpush.msra.mxu0 0.0
          %3703 = vmatpush.msra.mxu0 0.0
          %3704 = vmatpush.msra.mxu0 0.0
          %3705 = vmatpush.msra.mxu0 0.0
          %3706 = vmatpush.msra.mxu0 0.0
          %3707 = vmatpush.msra.mxu0 0.0
          %3708 = vmatpush.msra.mxu0 %v3089
          %3709 = vmatmul.f32.gmra.mxu0 %v2174
          %v3710 = vpop.f32.mrf.mxu0
          %v3711 = vadd.f32 %v2103, %v3710
          %3712 = vdwg.mxu0
          %3713 = vmatpush.msra.mxu0 0.0
          %3714 = vmatpush.msra.mxu0 0.0
          %3715 = vmatpush.msra.mxu0 0.0
          %3716 = vmatpush.msra.mxu0 0.0
          %3717 = vmatpush.msra.mxu0 0.0
          %3718 = vmatpush.msra.mxu0 0.0
          %3719 = vmatpush.msra.mxu0 0.0
          %3720 = vmatpush.msra.mxu0 0.0
          %3721 = vmatpush.msra.mxu0 0.0
          %3722 = vmatpush.msra.mxu0 0.0
          %3723 = vmatpush.msra.mxu0 0.0
          %3724 = vmatpush.msra.mxu0 0.0
          %3725 = vmatpush.msra.mxu0 0.0
          %3726 = vmatpush.msra.mxu0 0.0
          %3727 = vmatpush.msra.mxu0 0.0
          %3728 = vmatpush.msra.mxu0 %v3091
          %3729 = vmatmul.f32.gmra.mxu0 %v2174
          %v3730 = vpop.f32.mrf.mxu0
          %v3731 = vadd.f32 %v2103, %v3730
          %3732 = vdwg.mxu0
          %v3733 = vmax.f32 %v3111, 0.0
          %v3734 = vmax.f32 %v3131, 0.0
          %v3735 = vmax.f32 %v3151, 0.0
          %v3736 = vmax.f32 %v3171, 0.0
          %v3737 = vmax.f32 %v3191, 0.0
          %v3738 = vmax.f32 %v3211, 0.0
          %v3739 = vmax.f32 %v3231, 0.0
          %v3740 = vmax.f32 %v3251, 0.0
          %v3741 = vmax.f32 %v3271, 0.0
          %v3742 = vmax.f32 %v3291, 0.0
          %v3743 = vmax.f32 %v3311, 0.0
          %v3744 = vmax.f32 %v3331, 0.0
          %v3745 = vmax.f32 %v3351, 0.0
          %v3746 = vmax.f32 %v3371, 0.0
          %v3747 = vmax.f32 %v3391, 0.0
          %v3748 = vmax.f32 %v3411, 0.0
          %v3749 = vmax.f32 %v3431, 0.0
          %v3750 = vmax.f32 %v3451, 0.0
          %v3751 = vmax.f32 %v3471, 0.0
          %v3752 = vmax.f32 %v3491, 0.0
          %v3753 = vmax.f32 %v3511, 0.0
          %v3754 = vmax.f32 %v3531, 0.0
          %v3755 = vmax.f32 %v3551, 0.0
          %v3756 = vmax.f32 %v3571, 0.0
          %v3757 = vmax.f32 %v3591, 0.0
          %v3758 = vmax.f32 %v3611, 0.0
          %v3759 = vmax.f32 %v3631, 0.0
          %v3760 = vmax.f32 %v3651, 0.0
          %v3761 = vmax.f32 %v3671, 0.0
          %v3762 = vmax.f32 %v3691, 0.0
          %v3763 = vmax.f32 %v3711, 0.0
          %v3764 = vmax.f32 %v3731, 0.0
          %s3765 = scalar_lea.vmem %s230, 256 [#allocation9]
          %3766 = vst [vmem:[%s3765] sm:$0xff] %v3733
          %3767 = vst [vmem:[%s3765 + $0x8] sm:$0xff] %v3734
          %3768 = vst [vmem:[%s3765 + $0x10] sm:$0xff] %v3735
          %3769 = vst [vmem:[%s3765 + $0x18] sm:$0xff] %v3736
          %3770 = vst [vmem:[%s3765 + $0x20] sm:$0xff] %v3737
          %3771 = vst [vmem:[%s3765 + $0x28] sm:$0xff] %v3738
          %3772 = vst [vmem:[%s3765 + $0x30] sm:$0xff] %v3739
          %3773 = vst [vmem:[%s3765 + $0x38] sm:$0xff] %v3740
          %3774 = vst [vmem:[%s3765 + $0x40] sm:$0xff] %v3741
          %3775 = vst [vmem:[%s3765 + $0x48] sm:$0xff] %v3742
          %3776 = vst [vmem:[%s3765 + $0x50] sm:$0xff] %v3743
          %3777 = vst [vmem:[%s3765 + $0x58] sm:$0xff] %v3744
          %3778 = vst [vmem:[%s3765 + $0x60] sm:$0xff] %v3745
          %3779 = vst [vmem:[%s3765 + $0x68] sm:$0xff] %v3746
          %3780 = vst [vmem:[%s3765 + $0x70] sm:$0xff] %v3747
          %3781 = vst [vmem:[%s3765 + $0x78] sm:$0xff] %v3748
          %3782 = vst [vmem:[%s3765 + $0x80] sm:$0xff] %v3749
          %3783 = vst [vmem:[%s3765 + $0x88] sm:$0xff] %v3750
          %3784 = vst [vmem:[%s3765 + $0x90] sm:$0xff] %v3751
          %3785 = vst [vmem:[%s3765 + $0x98] sm:$0xff] %v3752
          %3786 = vst [vmem:[%s3765 + $0xa0] sm:$0xff] %v3753
          %3787 = vst [vmem:[%s3765 + $0xa8] sm:$0xff] %v3754
          %3788 = vst [vmem:[%s3765 + $0xb0] sm:$0xff] %v3755
          %3789 = vst [vmem:[%s3765 + $0xb8] sm:$0xff] %v3756
          %3790 = vst [vmem:[%s3765 + $0xc0] sm:$0xff] %v3757
          %3791 = vst [vmem:[%s3765 + $0xc8] sm:$0xff] %v3758
          %3792 = vst [vmem:[%s3765 + $0xd0] sm:$0xff] %v3759
          %3793 = vst [vmem:[%s3765 + $0xd8] sm:$0xff] %v3760
          %3794 = vst [vmem:[%s3765 + $0xe0] sm:$0xff] %v3761
          %3795 = vst [vmem:[%s3765 + $0xe8] sm:$0xff] %v3762
          %3796 = vst [vmem:[%s3765 + $0xf0] sm:$0xff] %v3763
          %3797 = vst [vmem:[%s3765 + $0xf8] sm:$0xff] %v3764
        $region56: #{tpu_custom_call.1} parent=35 // pred_fallthru
          _
        %s3798 = sand.u32 %s143, 1
        %s3799 = scalar_lea.sflag [#allocation8], %s3798
        %s3800 = sand.u32 %s143, 1
        %s3801 = smul.addr %s3800, 512
        %s3802 = scalar_lea.vmem [#allocation9], %s3801
        // Predicated region
        $region57: #{tpu_custom_call.1} parent=35 // pred_check
          %p3803 = pneg %p153
        $region58: #{tpu_custom_call.1} parent=35 // pred_check_branch
          %3805 = sbr.rel (%p3803) target = $region60
        $region59: #{tpu_custom_call.1} parent=35 // pred_region
          %s3806 = smul.u32 %s25, %s24
          %s3807 = smul.u32 %s26, %s24
          %s3808 = smul.u32 2, %s3806
          %s3809 = smul.u32 32, %s3807
          %3811 = vsyncadd %s3799, 0
          %s3812 = smul.addr %s3808, 32
          %s3813 = sadd.s32 %s3809, %s3812
          %s3814 = smul.addr %s3813, 8
          %s3815 = scalar_lea.hbm %s4, %s3814
          %s3816 = sshll.u32 %s3802, 4
          %s3817 = int_to_ptr.vmem [resolvable:$true] %s3816
          %s3818 = sshll.u32 %s3815, 4
          %s3819 = int_to_ptr.hbm [resolvable:$true] %s3818
          %3824 = dma.vmem_to_hbm [thread:$0]  %s3817, 8192, %s3819, %s3799, 4096, 4096, 256
        $region60: #{tpu_custom_call.1} parent=35 // pred_fallthru
          _
      $region36: #{tpu_custom_call.1} parent=5 // pred_fallthru
        _
      %p3825 = scmp.le.s32.totalorder 2, %s14
      // Predicated region
      $region61: #{tpu_custom_call.1} parent=5 // pred_check
        %p3826 = pneg %p3825
      $region62: #{tpu_custom_call.1} parent=5 // pred_check_branch
        %3828 = sbr.rel (%p3826) target = $region64
      $region63: #{tpu_custom_call.1} parent=5 // pred_region
        %s3829 = ssub.s32 %s14, 2
        // Predicated region
        $region65: #{tpu_custom_call.1} parent=63 // pred_check
          %p3830 = pneg %p159
        $region66: #{tpu_custom_call.1} parent=63 // pred_check_branch
          %3832 = sbr.rel (%p3830) target = $region68
        $region67: #{tpu_custom_call.1} parent=63 // pred_region
          %s3833 = sand.u32 %s144, 1
          %s3834 = scalar_lea.sflag [#allocation8], %s3833
          %s3835 = sand.u32 %s144, 1
          %s3836 = smul.addr %s3835, 512
          %s3837 = scalar_lea.vmem [#allocation9], %s3836
          %3839 = dma.done %s3834, 8192
        $region68: #{tpu_custom_call.1} parent=63 // pred_fallthru
          _
      $region64: #{tpu_custom_call.1} parent=5 // pred_fallthru
        _
    $region6: #{tpu_custom_call.1} parent=1 // loop_footer
      %s18 = sadd.s32 1, %s14
    $region7: #{tpu_custom_call.1} parent=1 // loop_footer_branch
      %13 = sbr.rel target = $region3
    $region8: #{tpu_custom_call.1} parent=1 // loop_exit
      _
    %3840 = vsyncpa [#allocation7], 1
    %s3841 = scalar_lea.sflag [#allocation7], 1
    %3842 = vsyncpa %s3841, 1
    %3843 = vsyncpa [#allocation8], 1
    %s3844 = scalar_lea.sflag [#allocation8], 1
    %3845 = vsyncpa %s3844, 1

</llo_original>
